<compile_context>
chip_gen: v7x
topology: tpu7x:2x2x1
jax: 0.10.0
libtpu: 0.0.40
codegen_flags: <defaults>
</compile_context>

<pallas_src>
import functools
import math

import jax
import jax.numpy as jnp
from jax.experimental import pallas as pl
from jax.experimental.pallas import tpu as pltpu


# ----------------------------- fused kernel --------------------------------

def _layernorm(x, g, b, eps):
    mean = jnp.mean(x, axis=-1, keepdims=True)
    var = jnp.mean(jnp.square(x - mean), axis=-1, keepdims=True)
    return (x - mean) * jax.lax.rsqrt(var + eps) * g + b


def _gelu(y):
    # TODO(synk): HF BERT uses exact erf-GELU; tanh approximation used here to
    # stay on ops with guaranteed Mosaic lowerings (tanh/exp).
    c = math.sqrt(2.0 / math.pi)
    return 0.5 * y * (1.0 + jnp.tanh(c * (y + 0.044715 * y * y * y)))


def _bert_kernel(x_ref, mask_ref, embg_ref, embb_ref,
                 wqkv_ref, bqkv_ref, wo_ref, bo_ref, ln1g_ref, ln1b_ref,
                 wi_ref, bi_ref, wo2_ref, bo2_ref, ln2g_ref, ln2b_ref,
                 pw_ref, pb_ref, cw_ref, cb_ref,
                 o_ref, *, B, S, nh, dh, H, L, eps):
    f32 = jnp.float32

    # Embedding LayerNorm.
    x = _layernorm(x_ref[...].astype(f32), embg_ref[...], embb_ref[...], eps)
    mask = mask_ref[...].astype(f32)                       # (B, S) additive

    # Encoder layers (statically unrolled; L=2).  All math stays in f32
    # (v5e VPU/EUP have no bf16 path for LN/softmax).
    for l in range(L):
        # Fused Q/K/V projection: one (B*S, H) x (H, 3H) MXU matmul.
        qkv = jnp.dot(x, wqkv_ref[l], preferred_element_type=f32) + bqkv_ref[l]
        q = qkv[:, 0:H]          # 1/sqrt(dh) already folded into wq/bq
        k = qkv[:, H:2 * H]
        v = qkv[:, 2 * H:3 * H]

        # Per-(batch, head) attention, unrolled (B*nh = 4 tiny matmuls).
        # Context is written back in (B*S, nh*dh) = (B*S, H) layout so the
        # output projection needs no transpose.
        ctx_rows = []
        for b in range(B):
            m_b = mask[b:b + 1, :]                         # (1, S)
            head_ctx = []
            for h in range(nh):
                qs = q[b * S:(b + 1) * S, h * dh:(h + 1) * dh]   # (S, dh)
                ks = k[b * S:(b + 1) * S, h * dh:(h + 1) * dh]
                vs = v[b * S:(b + 1) * S, h * dh:(h + 1) * dh]
                s = jax.lax.dot_general(
                    qs, ks, (((1,), (1,)), ((), ())),
                    preferred_element_type=f32)                  # (S, S)
                s = s + m_b
                s = s - jnp.max(s, axis=-1, keepdims=True)
                p = jnp.exp(s)
                p = p * pl.reciprocal(jnp.sum(p, axis=-1, keepdims=True),
                                      approx=True)
                head_ctx.append(jnp.dot(p, vs, preferred_element_type=f32))
            ctx_rows.append(jnp.concatenate(head_ctx, axis=-1))  # (S, H)
        ctx = jnp.concatenate(ctx_rows, axis=0)                  # (B*S, H)

        # Attention output projection + residual + LayerNorm.
        attn = jnp.dot(ctx, wo_ref[l], preferred_element_type=f32) + bo_ref[l]
        x = _layernorm(attn + x, ln1g_ref[l], ln1b_ref[l], eps)

        # FFN: dense+GELU, dense, residual + LayerNorm.
        inter = _gelu(jnp.dot(x, wi_ref[l], preferred_element_type=f32)
                      + bi_ref[l])
        ffn = jnp.dot(inter, wo2_ref[l], preferred_element_type=f32) + bo2_ref[l]
        x = _layernorm(ffn + x, ln2g_ref[l], ln2b_ref[l], eps)

    # Pooler (dense + tanh on [CLS] rows) fused with the 2-way classifier.
    cls = jnp.concatenate([x[b * S:b * S + 1, :] for b in range(B)], axis=0)
    pooled = jnp.tanh(jnp.dot(cls, pw_ref[...], preferred_element_type=f32)
                      + pb_ref[...])
    logits = jnp.dot(pooled, cw_ref[...], preferred_element_type=f32) + cb_ref[...]
    o_ref[...] = logits.astype(o_ref.dtype)                  # (B, 2) store


def _full_block(arr):
    ndim = arr.ndim
    return pl.BlockSpec(arr.shape, lambda i, _n=ndim: (0,) * _n)


# ----------------------------- model definition -----------------------------

class Config:
    vocab_size = 100
    max_position = 16
    type_vocab = 2
    hidden = 32
    heads = 2
    head_dim = 16
    intermediate = 64
    layers = 2


def init_params(key, cfg):
    def nrm(key, shape, scale=0.02):
        return scale * jax.random.normal(key, shape, jnp.float32)

    keys = iter(jax.random.split(key, 200))
    p = {
        "word_emb": nrm(next(keys), (cfg.vocab_size, cfg.hidden)),
        "pos_emb": nrm(next(keys), (cfg.max_position, cfg.hidden)),
        "type_emb": nrm(next(keys), (cfg.type_vocab, cfg.hidden)),
        "emb_ln_g": jnp.ones((cfg.hidden,), jnp.float32),
        "emb_ln_b": jnp.zeros((cfg.hidden,), jnp.float32),
        "layers": [],
        "pooler_w": nrm(next(keys), (cfg.hidden, cfg.hidden)),
        "pooler_b": jnp.zeros((cfg.hidden,), jnp.float32),
        "cls_w": nrm(next(keys), (cfg.hidden, 2)),
        "cls_b": jnp.zeros((2,), jnp.float32),
    }
    for _ in range(cfg.layers):
        lyr = {
            "wq": nrm(next(keys), (cfg.hidden, cfg.hidden)),
            "bq": jnp.zeros((cfg.hidden,), jnp.float32),
            "wk": nrm(next(keys), (cfg.hidden, cfg.hidden)),
            "bk": jnp.zeros((cfg.hidden,), jnp.float32),
            "wv": nrm(next(keys), (cfg.hidden, cfg.hidden)),
            "bv": jnp.zeros((cfg.hidden,), jnp.float32),
            "wo": nrm(next(keys), (cfg.hidden, cfg.hidden)),
            "bo": jnp.zeros((cfg.hidden,), jnp.float32),
            "ln1_g": jnp.ones((cfg.hidden,), jnp.float32),
            "ln1_b": jnp.zeros((cfg.hidden,), jnp.float32),
            "wi": nrm(next(keys), (cfg.hidden, cfg.intermediate)),
            "bi": jnp.zeros((cfg.intermediate,), jnp.float32),
            "wo2": nrm(next(keys), (cfg.intermediate, cfg.hidden)),
            "bo2": jnp.zeros((cfg.hidden,), jnp.float32),
            "ln2_g": jnp.ones((cfg.hidden,), jnp.float32),
            "ln2_b": jnp.zeros((cfg.hidden,), jnp.float32),
        }
        p["layers"].append(lyr)
    return p


def prepare_fused_params(p, cfg):
    """One-time transform: fuse Q/K/V weights, fold 1/sqrt(dh) into wq/bq,
    stack per-layer weights along a leading layer axis, make biases 2-D."""
    scale = 1.0 / math.sqrt(cfg.head_dim)
    layers = p["layers"]

    def stack(fn):
        return jnp.stack([fn(l) for l in layers], axis=0)

    return {
        "word_emb": p["word_emb"],
        "pos_emb": p["pos_emb"],
        "type_emb": p["type_emb"],
        "emb_ln_g": p["emb_ln_g"].reshape(1, -1),
        "emb_ln_b": p["emb_ln_b"].reshape(1, -1),
        "wqkv": stack(lambda l: jnp.concatenate(
            [l["wq"] * scale, l["wk"], l["wv"]], axis=1)),          # (L, H, 3H)
        "bqkv": stack(lambda l: jnp.concatenate(
            [l["bq"] * scale, l["bk"], l["bv"]]).reshape(1, -1)),   # (L, 1, 3H)
        "wo": stack(lambda l: l["wo"]),
        "bo": stack(lambda l: l["bo"].reshape(1, -1)),
        "ln1_g": stack(lambda l: l["ln1_g"].reshape(1, -1)),
        "ln1_b": stack(lambda l: l["ln1_b"].reshape(1, -1)),
        "wi": stack(lambda l: l["wi"]),
        "bi": stack(lambda l: l["bi"].reshape(1, -1)),
        "wo2": stack(lambda l: l["wo2"]),
        "bo2": stack(lambda l: l["bo2"].reshape(1, -1)),
        "ln2_g": stack(lambda l: l["ln2_g"].reshape(1, -1)),
        "ln2_b": stack(lambda l: l["ln2_b"].reshape(1, -1)),
        "pooler_w": p["pooler_w"],
        "pooler_b": p["pooler_b"].reshape(1, -1),
        "cls_w": p["cls_w"],
        "cls_b": p["cls_b"].reshape(1, -1),
    }


def joint_bert_forward(fp, input_ids, attention_mask, cfg):
    B, S = input_ids.shape
    H = cfg.hidden

    # Embeddings (gather = plain-JAX glue); token_type_ids assumed all zero
    # (PyTorch default).
    we = fp["word_emb"][input_ids]                        # (B, S, H)
    pe = fp["pos_emb"][:S][None, :, :]                    # (1, S, H)
    te = fp["type_emb"][0][None, None, :]                 # (1, 1, H)
    x = (we + pe + te).reshape(B * S, H)

    # Additive attention mask, HF BERT convention: (1 - m) * -1e9.
    add_mask = (1.0 - attention_mask.astype(jnp.float32)) * -1e9   # (B, S)

    kernel = functools.partial(
        _bert_kernel, B=B, S=S, nh=cfg.heads, dh=cfg.head_dim, H=H,
        L=cfg.layers, eps=1e-12)

    inputs = [
        x, add_mask, fp["emb_ln_g"], fp["emb_ln_b"],
        fp["wqkv"], fp["bqkv"], fp["wo"], fp["bo"], fp["ln1_g"], fp["ln1_b"],
        fp["wi"], fp["bi"], fp["wo2"], fp["bo2"], fp["ln2_g"], fp["ln2_b"],
        fp["pooler_w"], fp["pooler_b"], fp["cls_w"], fp["cls_b"],
    ]

    return pl.pallas_call(
        kernel,
        out_shape=jax.ShapeDtypeStruct((B, 2), jnp.float32),
        grid=(1,),
        in_specs=[_full_block(a) for a in inputs],
        out_specs=pl.BlockSpec((B, 2), lambda i: (0, 0)),
        compiler_params=pltpu.CompilerParams(
            dimension_semantics=("arbitrary",)),
    )(*inputs)


# --------------------------------- driver -----------------------------------

if __name__ == "__main__":
    cfg = Config()
    B, S = 2, 8

    key = jax.random.PRNGKey(0)
    k_param, k_ids = jax.random.split(key)

    params = init_params(k_param, cfg)
    fused = prepare_fused_params(params, cfg)

    input_ids = jax.random.randint(k_ids, (B, S), 0, cfg.vocab_size,
                                   dtype=jnp.int32)
    attention_mask = jnp.ones((B, S), jnp.int32)
    attention_mask = attention_mask.at[1, 6:].set(0)      # pad tail of 2nd seq

    fwd = jax.jit(functools.partial(joint_bert_forward, cfg=cfg))
    logits = fwd(fused, input_ids, attention_mask)
    jax.block_until_ready(logits)

    assert logits.shape == (B, 2) and logits.dtype == jnp.float32
    assert bool(jnp.all(jnp.isfinite(logits)))
    print("KERNEL_OK")
</pallas_src>

<mosaic_0001>
module attributes {stable_mosaic.version = 11 : i64} {
  func.func @_bert_kernel(%arg0: i32, %arg1: memref<16x32xf32, #tpu.memory_space<vmem>>, %arg2: memref<2x8xf32, #tpu.memory_space<vmem>>, %arg3: memref<1x32xf32, #tpu.memory_space<vmem>>, %arg4: memref<1x32xf32, #tpu.memory_space<vmem>>, %arg5: memref<2x32x96xf32, #tpu.memory_space<vmem>>, %arg6: memref<2x1x96xf32, #tpu.memory_space<vmem>>, %arg7: memref<2x32x32xf32, #tpu.memory_space<vmem>>, %arg8: memref<2x1x32xf32, #tpu.memory_space<vmem>>, %arg9: memref<2x1x32xf32, #tpu.memory_space<vmem>>, %arg10: memref<2x1x32xf32, #tpu.memory_space<vmem>>, %arg11: memref<2x32x64xf32, #tpu.memory_space<vmem>>, %arg12: memref<2x1x64xf32, #tpu.memory_space<vmem>>, %arg13: memref<2x64x32xf32, #tpu.memory_space<vmem>>, %arg14: memref<2x1x32xf32, #tpu.memory_space<vmem>>, %arg15: memref<2x1x32xf32, #tpu.memory_space<vmem>>, %arg16: memref<2x1x32xf32, #tpu.memory_space<vmem>>, %arg17: memref<32x32xf32, #tpu.memory_space<vmem>>, %arg18: memref<1x32xf32, #tpu.memory_space<vmem>>, %arg19: memref<32x2xf32, #tpu.memory_space<vmem>>, %arg20: memref<1x2xf32, #tpu.memory_space<vmem>>, %arg21: memref<2x2xf32, #tpu.memory_space<vmem>>) attributes {dimension_semantics = [#tpu.dimension_semantics<arbitrary>], iteration_bounds = array<i64: 1>, scalar_prefetch = 0 : i64, scratch_operands = 0 : i64, tpu.core_type = #tpu.core_type<tc>, window_params = [{pipeline_mode = #tpu.pipeline_mode<synchronous>, transform_indices = @transform_0, window_bounds = array<i64: 16, 32>}, {pipeline_mode = #tpu.pipeline_mode<synchronous>, transform_indices = @transform_1, window_bounds = array<i64: 2, 8>}, {pipeline_mode = #tpu.pipeline_mode<synchronous>, transform_indices = @transform_2, window_bounds = array<i64: 1, 32>}, {pipeline_mode = #tpu.pipeline_mode<synchronous>, transform_indices = @transform_3, window_bounds = array<i64: 1, 32>}, {pipeline_mode = #tpu.pipeline_mode<synchronous>, transform_indices = @transform_4, window_bounds = array<i64: 2, 32, 96>}, {pipeline_mode = #tpu.pipeline_mode<synchronous>, transform_indices = @transform_5, window_bounds = array<i64: 2, 1, 96>}, {pipeline_mode = #tpu.pipeline_mode<synchronous>, transform_indices = @transform_6, window_bounds = array<i64: 2, 32, 32>}, {pipeline_mode = #tpu.pipeline_mode<synchronous>, transform_indices = @transform_7, window_bounds = array<i64: 2, 1, 32>}, {pipeline_mode = #tpu.pipeline_mode<synchronous>, transform_indices = @transform_8, window_bounds = array<i64: 2, 1, 32>}, {pipeline_mode = #tpu.pipeline_mode<synchronous>, transform_indices = @transform_9, window_bounds = array<i64: 2, 1, 32>}, {pipeline_mode = #tpu.pipeline_mode<synchronous>, transform_indices = @transform_10, window_bounds = array<i64: 2, 32, 64>}, {pipeline_mode = #tpu.pipeline_mode<synchronous>, transform_indices = @transform_11, window_bounds = array<i64: 2, 1, 64>}, {pipeline_mode = #tpu.pipeline_mode<synchronous>, transform_indices = @transform_12, window_bounds = array<i64: 2, 64, 32>}, {pipeline_mode = #tpu.pipeline_mode<synchronous>, transform_indices = @transform_13, window_bounds = array<i64: 2, 1, 32>}, {pipeline_mode = #tpu.pipeline_mode<synchronous>, transform_indices = @transform_14, window_bounds = array<i64: 2, 1, 32>}, {pipeline_mode = #tpu.pipeline_mode<synchronous>, transform_indices = @transform_15, window_bounds = array<i64: 2, 1, 32>}, {pipeline_mode = #tpu.pipeline_mode<synchronous>, transform_indices = @transform_16, window_bounds = array<i64: 32, 32>}, {pipeline_mode = #tpu.pipeline_mode<synchronous>, transform_indices = @transform_17, window_bounds = array<i64: 1, 32>}, {pipeline_mode = #tpu.pipeline_mode<synchronous>, transform_indices = @transform_18, window_bounds = array<i64: 32, 2>}, {pipeline_mode = #tpu.pipeline_mode<synchronous>, transform_indices = @transform_19, window_bounds = array<i64: 1, 2>}, {pipeline_mode = #tpu.pipeline_mode<synchronous>, transform_indices = @transform_20, window_bounds = array<i64: 2, 2>}]} {
    %c0 = arith.constant 0 : index
    %c0_0 = arith.constant 0 : index
    %0 = vector.load %arg1[%c0, %c0_0] : memref<16x32xf32, #tpu.memory_space<vmem>>, vector<16x32xf32>
    %c0_1 = arith.constant 0 : index
    %c0_2 = arith.constant 0 : index
    %1 = vector.load %arg3[%c0_1, %c0_2] : memref<1x32xf32, #tpu.memory_space<vmem>>, vector<1x32xf32>
    %c0_3 = arith.constant 0 : index
    %c0_4 = arith.constant 0 : index
    %2 = vector.load %arg4[%c0_3, %c0_4] : memref<1x32xf32, #tpu.memory_space<vmem>>, vector<1x32xf32>
    %cst = arith.constant dense<0.000000e+00> : vector<16xf32>
    %3 = vector.multi_reduction <add>, %0, %cst [1] : vector<16x32xf32> to vector<16xf32>
    %4 = vector.shape_cast %3 : vector<16xf32> to vector<16x1xf32>
    %cst_5 = arith.constant 3.200000e+01 : f32
    %5 = vector.broadcast %cst_5 : f32 to vector<16x1xf32>
    %6 = arith.divf %4, %5 : vector<16x1xf32>
    %7 = vector.broadcast %6 : vector<16x1xf32> to vector<16x32xf32>
    %8 = arith.subf %0, %7 : vector<16x32xf32>
    %9 = arith.mulf %8, %8 : vector<16x32xf32>
    %cst_6 = arith.constant dense<0.000000e+00> : vector<16xf32>
    %10 = vector.multi_reduction <add>, %9, %cst_6 [1] : vector<16x32xf32> to vector<16xf32>
    %11 = vector.shape_cast %10 : vector<16xf32> to vector<16x1xf32>
    %cst_7 = arith.constant 3.200000e+01 : f32
    %12 = vector.broadcast %cst_7 : f32 to vector<16x1xf32>
    %13 = arith.divf %11, %12 : vector<16x1xf32>
    %14 = vector.broadcast %6 : vector<16x1xf32> to vector<16x32xf32>
    %15 = arith.subf %0, %14 : vector<16x32xf32>
    %cst_8 = arith.constant 9.99999996E-13 : f32
    %16 = vector.broadcast %cst_8 : f32 to vector<16x1xf32>
    %17 = arith.addf %13, %16 : vector<16x1xf32>
    %18 = math.rsqrt %17 : vector<16x1xf32>
    %19 = vector.broadcast %18 : vector<16x1xf32> to vector<16x32xf32>
    %20 = arith.mulf %15, %19 : vector<16x32xf32>
    %21 = vector.broadcast %1 : vector<1x32xf32> to vector<16x32xf32>
    %22 = arith.mulf %20, %21 : vector<16x32xf32>
    %23 = vector.broadcast %2 : vector<1x32xf32> to vector<16x32xf32>
    %24 = arith.addf %22, %23 : vector<16x32xf32>
    %c0_9 = arith.constant 0 : index
    %c0_10 = arith.constant 0 : index
    %25 = vector.load %arg2[%c0_9, %c0_10] : memref<2x8xf32, #tpu.memory_space<vmem>>, vector<2x8xf32>
    %c0_11 = arith.constant 0 : index
    %c0_12 = arith.constant 0 : index
    %c0_13 = arith.constant 0 : index
    %26 = vector.load %arg5[%c0_11, %c0_12, %c0_13] : memref<2x32x96xf32, #tpu.memory_space<vmem>>, vector<1x32x96xf32>
    %27 = vector.shape_cast %26 : vector<1x32x96xf32> to vector<32x96xf32>
    %cst_14 = arith.constant dense<0.000000e+00> : vector<16x96xf32>
    %28 = tpu.matmul %24, %27, %cst_14 {dimension_numbers = #tpu.dot_dimension_numbers<[1], [0], [0], [1], [0, 0, 1, 1], [], []>} : vector<16x32xf32>, vector<32x96xf32>, vector<16x96xf32> -> vector<16x96xf32>
    %c0_15 = arith.constant 0 : index
    %c0_16 = arith.constant 0 : index
    %c0_17 = arith.constant 0 : index
    %29 = vector.load %arg6[%c0_15, %c0_16, %c0_17] : memref<2x1x96xf32, #tpu.memory_space<vmem>>, vector<1x1x96xf32>
    %30 = vector.shape_cast %29 : vector<1x1x96xf32> to vector<1x96xf32>
    %31 = vector.broadcast %30 : vector<1x96xf32> to vector<16x96xf32>
    %32 = arith.addf %28, %31 : vector<16x96xf32>
    %33 = vector.extract_strided_slice %32 {offsets = [0, 0], sizes = [16, 32], strides = [1, 1]} : vector<16x96xf32> to vector<16x32xf32>
    %34 = vector.extract_strided_slice %32 {offsets = [0, 32], sizes = [16, 32], strides = [1, 1]} : vector<16x96xf32> to vector<16x32xf32>
    %35 = vector.extract_strided_slice %32 {offsets = [0, 64], sizes = [16, 32], strides = [1, 1]} : vector<16x96xf32> to vector<16x32xf32>
    %36 = vector.extract_strided_slice %25 {offsets = [0, 0], sizes = [1, 8], strides = [1, 1]} : vector<2x8xf32> to vector<1x8xf32>
    %37 = vector.extract_strided_slice %33 {offsets = [0, 0], sizes = [8, 16], strides = [1, 1]} : vector<16x32xf32> to vector<8x16xf32>
    %38 = vector.extract_strided_slice %34 {offsets = [0, 0], sizes = [8, 16], strides = [1, 1]} : vector<16x32xf32> to vector<8x16xf32>
    %39 = vector.extract_strided_slice %35 {offsets = [0, 0], sizes = [8, 16], strides = [1, 1]} : vector<16x32xf32> to vector<8x16xf32>
    %cst_18 = arith.constant dense<0.000000e+00> : vector<8x8xf32>
    %40 = tpu.matmul %37, %38, %cst_18 {dimension_numbers = #tpu.dot_dimension_numbers<[1], [1], [0], [0], [0, 0, 1, 0], [], []>} : vector<8x16xf32>, vector<8x16xf32>, vector<8x8xf32> -> vector<8x8xf32>
    %41 = vector.broadcast %36 : vector<1x8xf32> to vector<8x8xf32>
    %42 = arith.addf %40, %41 : vector<8x8xf32>
    %cst_19 = arith.constant dense<0xFF800000> : vector<8xf32>
    %43 = vector.multi_reduction <maximumf>, %42, %cst_19 [1] : vector<8x8xf32> to vector<8xf32>
    %44 = vector.shape_cast %43 : vector<8xf32> to vector<8x1xf32>
    %45 = vector.broadcast %44 : vector<8x1xf32> to vector<8x8xf32>
    %46 = arith.subf %42, %45 : vector<8x8xf32>
    %47 = math.exp %46 : vector<8x8xf32>
    %cst_20 = arith.constant dense<0.000000e+00> : vector<8xf32>
    %48 = vector.multi_reduction <add>, %47, %cst_20 [1] : vector<8x8xf32> to vector<8xf32>
    %49 = vector.shape_cast %48 : vector<8xf32> to vector<8x1xf32>
    %50 = tpu.reciprocal %49 {approx = true} : vector<8x1xf32> -> vector<8x1xf32>
    %51 = vector.broadcast %50 : vector<8x1xf32> to vector<8x8xf32>
    %52 = arith.mulf %47, %51 : vector<8x8xf32>
    %cst_21 = arith.constant dense<0.000000e+00> : vector<8x16xf32>
    %53 = tpu.matmul %52, %39, %cst_21 {dimension_numbers = #tpu.dot_dimension_numbers<[1], [0], [0], [1], [0, 0, 1, 1], [], []>} : vector<8x8xf32>, vector<8x16xf32>, vector<8x16xf32> -> vector<8x16xf32>
    %54 = vector.extract_strided_slice %33 {offsets = [0, 16], sizes = [8, 16], strides = [1, 1]} : vector<16x32xf32> to vector<8x16xf32>
    %55 = vector.extract_strided_slice %34 {offsets = [0, 16], sizes = [8, 16], strides = [1, 1]} : vector<16x32xf32> to vector<8x16xf32>
    %56 = vector.extract_strided_slice %35 {offsets = [0, 16], sizes = [8, 16], strides = [1, 1]} : vector<16x32xf32> to vector<8x16xf32>
    %cst_22 = arith.constant dense<0.000000e+00> : vector<8x8xf32>
    %57 = tpu.matmul %54, %55, %cst_22 {dimension_numbers = #tpu.dot_dimension_numbers<[1], [1], [0], [0], [0, 0, 1, 0], [], []>} : vector<8x16xf32>, vector<8x16xf32>, vector<8x8xf32> -> vector<8x8xf32>
    %58 = vector.broadcast %36 : vector<1x8xf32> to vector<8x8xf32>
    %59 = arith.addf %57, %58 : vector<8x8xf32>
    %cst_23 = arith.constant dense<0xFF800000> : vector<8xf32>
    %60 = vector.multi_reduction <maximumf>, %59, %cst_23 [1] : vector<8x8xf32> to vector<8xf32>
    %61 = vector.shape_cast %60 : vector<8xf32> to vector<8x1xf32>
    %62 = vector.broadcast %61 : vector<8x1xf32> to vector<8x8xf32>
    %63 = arith.subf %59, %62 : vector<8x8xf32>
    %64 = math.exp %63 : vector<8x8xf32>
    %cst_24 = arith.constant dense<0.000000e+00> : vector<8xf32>
    %65 = vector.multi_reduction <add>, %64, %cst_24 [1] : vector<8x8xf32> to vector<8xf32>
    %66 = vector.shape_cast %65 : vector<8xf32> to vector<8x1xf32>
    %67 = tpu.reciprocal %66 {approx = true} : vector<8x1xf32> -> vector<8x1xf32>
    %68 = vector.broadcast %67 : vector<8x1xf32> to vector<8x8xf32>
    %69 = arith.mulf %64, %68 : vector<8x8xf32>
    %cst_25 = arith.constant dense<0.000000e+00> : vector<8x16xf32>
    %70 = tpu.matmul %69, %56, %cst_25 {dimension_numbers = #tpu.dot_dimension_numbers<[1], [0], [0], [1], [0, 0, 1, 1], [], []>} : vector<8x8xf32>, vector<8x16xf32>, vector<8x16xf32> -> vector<8x16xf32>
    %71 = tpu.concatenate %53, %70 in 1 : vector<8x16xf32>, vector<8x16xf32> -> vector<8x32xf32>
    %72 = vector.extract_strided_slice %25 {offsets = [1, 0], sizes = [1, 8], strides = [1, 1]} : vector<2x8xf32> to vector<1x8xf32>
    %73 = vector.extract_strided_slice %33 {offsets = [8, 0], sizes = [8, 16], strides = [1, 1]} : vector<16x32xf32> to vector<8x16xf32>
    %74 = vector.extract_strided_slice %34 {offsets = [8, 0], sizes = [8, 16], strides = [1, 1]} : vector<16x32xf32> to vector<8x16xf32>
    %75 = vector.extract_strided_slice %35 {offsets = [8, 0], sizes = [8, 16], strides = [1, 1]} : vector<16x32xf32> to vector<8x16xf32>
    %cst_26 = arith.constant dense<0.000000e+00> : vector<8x8xf32>
    %76 = tpu.matmul %73, %74, %cst_26 {dimension_numbers = #tpu.dot_dimension_numbers<[1], [1], [0], [0], [0, 0, 1, 0], [], []>} : vector<8x16xf32>, vector<8x16xf32>, vector<8x8xf32> -> vector<8x8xf32>
    %77 = vector.broadcast %72 : vector<1x8xf32> to vector<8x8xf32>
    %78 = arith.addf %76, %77 : vector<8x8xf32>
    %cst_27 = arith.constant dense<0xFF800000> : vector<8xf32>
    %79 = vector.multi_reduction <maximumf>, %78, %cst_27 [1] : vector<8x8xf32> to vector<8xf32>
    %80 = vector.shape_cast %79 : vector<8xf32> to vector<8x1xf32>
    %81 = vector.broadcast %80 : vector<8x1xf32> to vector<8x8xf32>
    %82 = arith.subf %78, %81 : vector<8x8xf32>
    %83 = math.exp %82 : vector<8x8xf32>
    %cst_28 = arith.constant dense<0.000000e+00> : vector<8xf32>
    %84 = vector.multi_reduction <add>, %83, %cst_28 [1] : vector<8x8xf32> to vector<8xf32>
    %85 = vector.shape_cast %84 : vector<8xf32> to vector<8x1xf32>
    %86 = tpu.reciprocal %85 {approx = true} : vector<8x1xf32> -> vector<8x1xf32>
    %87 = vector.broadcast %86 : vector<8x1xf32> to vector<8x8xf32>
    %88 = arith.mulf %83, %87 : vector<8x8xf32>
    %cst_29 = arith.constant dense<0.000000e+00> : vector<8x16xf32>
    %89 = tpu.matmul %88, %75, %cst_29 {dimension_numbers = #tpu.dot_dimension_numbers<[1], [0], [0], [1], [0, 0, 1, 1], [], []>} : vector<8x8xf32>, vector<8x16xf32>, vector<8x16xf32> -> vector<8x16xf32>
    %90 = vector.extract_strided_slice %33 {offsets = [8, 16], sizes = [8, 16], strides = [1, 1]} : vector<16x32xf32> to vector<8x16xf32>
    %91 = vector.extract_strided_slice %34 {offsets = [8, 16], sizes = [8, 16], strides = [1, 1]} : vector<16x32xf32> to vector<8x16xf32>
    %92 = vector.extract_strided_slice %35 {offsets = [8, 16], sizes = [8, 16], strides = [1, 1]} : vector<16x32xf32> to vector<8x16xf32>
    %cst_30 = arith.constant dense<0.000000e+00> : vector<8x8xf32>
    %93 = tpu.matmul %90, %91, %cst_30 {dimension_numbers = #tpu.dot_dimension_numbers<[1], [1], [0], [0], [0, 0, 1, 0], [], []>} : vector<8x16xf32>, vector<8x16xf32>, vector<8x8xf32> -> vector<8x8xf32>
    %94 = vector.broadcast %72 : vector<1x8xf32> to vector<8x8xf32>
    %95 = arith.addf %93, %94 : vector<8x8xf32>
    %cst_31 = arith.constant dense<0xFF800000> : vector<8xf32>
    %96 = vector.multi_reduction <maximumf>, %95, %cst_31 [1] : vector<8x8xf32> to vector<8xf32>
    %97 = vector.shape_cast %96 : vector<8xf32> to vector<8x1xf32>
    %98 = vector.broadcast %97 : vector<8x1xf32> to vector<8x8xf32>
    %99 = arith.subf %95, %98 : vector<8x8xf32>
    %100 = math.exp %99 : vector<8x8xf32>
    %cst_32 = arith.constant dense<0.000000e+00> : vector<8xf32>
    %101 = vector.multi_reduction <add>, %100, %cst_32 [1] : vector<8x8xf32> to vector<8xf32>
    %102 = vector.shape_cast %101 : vector<8xf32> to vector<8x1xf32>
    %103 = tpu.reciprocal %102 {approx = true} : vector<8x1xf32> -> vector<8x1xf32>
    %104 = vector.broadcast %103 : vector<8x1xf32> to vector<8x8xf32>
    %105 = arith.mulf %100, %104 : vector<8x8xf32>
    %cst_33 = arith.constant dense<0.000000e+00> : vector<8x16xf32>
    %106 = tpu.matmul %105, %92, %cst_33 {dimension_numbers = #tpu.dot_dimension_numbers<[1], [0], [0], [1], [0, 0, 1, 1], [], []>} : vector<8x8xf32>, vector<8x16xf32>, vector<8x16xf32> -> vector<8x16xf32>
    %107 = tpu.concatenate %89, %106 in 1 : vector<8x16xf32>, vector<8x16xf32> -> vector<8x32xf32>
    %108 = tpu.concatenate %71, %107 in 0 : vector<8x32xf32>, vector<8x32xf32> -> vector<16x32xf32>
    %c0_34 = arith.constant 0 : index
    %c0_35 = arith.constant 0 : index
    %c0_36 = arith.constant 0 : index
    %109 = vector.load %arg7[%c0_34, %c0_35, %c0_36] : memref<2x32x32xf32, #tpu.memory_space<vmem>>, vector<1x32x32xf32>
    %110 = vector.shape_cast %109 : vector<1x32x32xf32> to vector<32x32xf32>
    %cst_37 = arith.constant dense<0.000000e+00> : vector<16x32xf32>
    %111 = tpu.matmul %108, %110, %cst_37 {dimension_numbers = #tpu.dot_dimension_numbers<[1], [0], [0], [1], [0, 0, 1, 1], [], []>} : vector<16x32xf32>, vector<32x32xf32>, vector<16x32xf32> -> vector<16x32xf32>
    %c0_38 = arith.constant 0 : index
    %c0_39 = arith.constant 0 : index
    %c0_40 = arith.constant 0 : index
    %112 = vector.load %arg8[%c0_38, %c0_39, %c0_40] : memref<2x1x32xf32, #tpu.memory_space<vmem>>, vector<1x1x32xf32>
    %113 = vector.shape_cast %112 : vector<1x1x32xf32> to vector<1x32xf32>
    %114 = vector.broadcast %113 : vector<1x32xf32> to vector<16x32xf32>
    %115 = arith.addf %111, %114 : vector<16x32xf32>
    %116 = arith.addf %115, %24 : vector<16x32xf32>
    %c0_41 = arith.constant 0 : index
    %c0_42 = arith.constant 0 : index
    %c0_43 = arith.constant 0 : index
    %117 = vector.load %arg9[%c0_41, %c0_42, %c0_43] : memref<2x1x32xf32, #tpu.memory_space<vmem>>, vector<1x1x32xf32>
    %118 = vector.shape_cast %117 : vector<1x1x32xf32> to vector<1x32xf32>
    %c0_44 = arith.constant 0 : index
    %c0_45 = arith.constant 0 : index
    %c0_46 = arith.constant 0 : index
    %119 = vector.load %arg10[%c0_44, %c0_45, %c0_46] : memref<2x1x32xf32, #tpu.memory_space<vmem>>, vector<1x1x32xf32>
    %120 = vector.shape_cast %119 : vector<1x1x32xf32> to vector<1x32xf32>
    %cst_47 = arith.constant dense<0.000000e+00> : vector<16xf32>
    %121 = vector.multi_reduction <add>, %116, %cst_47 [1] : vector<16x32xf32> to vector<16xf32>
    %122 = vector.shape_cast %121 : vector<16xf32> to vector<16x1xf32>
    %cst_48 = arith.constant 3.200000e+01 : f32
    %123 = vector.broadcast %cst_48 : f32 to vector<16x1xf32>
    %124 = arith.divf %122, %123 : vector<16x1xf32>
    %125 = vector.broadcast %124 : vector<16x1xf32> to vector<16x32xf32>
    %126 = arith.subf %116, %125 : vector<16x32xf32>
    %127 = arith.mulf %126, %126 : vector<16x32xf32>
    %cst_49 = arith.constant dense<0.000000e+00> : vector<16xf32>
    %128 = vector.multi_reduction <add>, %127, %cst_49 [1] : vector<16x32xf32> to vector<16xf32>
    %129 = vector.shape_cast %128 : vector<16xf32> to vector<16x1xf32>
    %cst_50 = arith.constant 3.200000e+01 : f32
    %130 = vector.broadcast %cst_50 : f32 to vector<16x1xf32>
    %131 = arith.divf %129, %130 : vector<16x1xf32>
    %132 = vector.broadcast %124 : vector<16x1xf32> to vector<16x32xf32>
    %133 = arith.subf %116, %132 : vector<16x32xf32>
    %cst_51 = arith.constant 9.99999996E-13 : f32
    %134 = vector.broadcast %cst_51 : f32 to vector<16x1xf32>
    %135 = arith.addf %131, %134 : vector<16x1xf32>
    %136 = math.rsqrt %135 : vector<16x1xf32>
    %137 = vector.broadcast %136 : vector<16x1xf32> to vector<16x32xf32>
    %138 = arith.mulf %133, %137 : vector<16x32xf32>
    %139 = vector.broadcast %118 : vector<1x32xf32> to vector<16x32xf32>
    %140 = arith.mulf %138, %139 : vector<16x32xf32>
    %141 = vector.broadcast %120 : vector<1x32xf32> to vector<16x32xf32>
    %142 = arith.addf %140, %141 : vector<16x32xf32>
    %c0_52 = arith.constant 0 : index
    %c0_53 = arith.constant 0 : index
    %c0_54 = arith.constant 0 : index
    %143 = vector.load %arg11[%c0_52, %c0_53, %c0_54] : memref<2x32x64xf32, #tpu.memory_space<vmem>>, vector<1x32x64xf32>
    %144 = vector.shape_cast %143 : vector<1x32x64xf32> to vector<32x64xf32>
    %cst_55 = arith.constant dense<0.000000e+00> : vector<16x64xf32>
    %145 = tpu.matmul %142, %144, %cst_55 {dimension_numbers = #tpu.dot_dimension_numbers<[1], [0], [0], [1], [0, 0, 1, 1], [], []>} : vector<16x32xf32>, vector<32x64xf32>, vector<16x64xf32> -> vector<16x64xf32>
    %c0_56 = arith.constant 0 : index
    %c0_57 = arith.constant 0 : index
    %c0_58 = arith.constant 0 : index
    %146 = vector.load %arg12[%c0_56, %c0_57, %c0_58] : memref<2x1x64xf32, #tpu.memory_space<vmem>>, vector<1x1x64xf32>
    %147 = vector.shape_cast %146 : vector<1x1x64xf32> to vector<1x64xf32>
    %148 = vector.broadcast %147 : vector<1x64xf32> to vector<16x64xf32>
    %149 = arith.addf %145, %148 : vector<16x64xf32>
    %cst_59 = arith.constant 5.000000e-01 : f32
    %150 = vector.broadcast %cst_59 : f32 to vector<16x64xf32>
    %151 = arith.mulf %150, %149 : vector<16x64xf32>
    %cst_60 = arith.constant 4.471500e-02 : f32
    %152 = vector.broadcast %cst_60 : f32 to vector<16x64xf32>
    %153 = arith.mulf %152, %149 : vector<16x64xf32>
    %154 = arith.mulf %153, %149 : vector<16x64xf32>
    %155 = arith.mulf %154, %149 : vector<16x64xf32>
    %156 = arith.addf %149, %155 : vector<16x64xf32>
    %cst_61 = arith.constant 0.797884583 : f32
    %157 = vector.broadcast %cst_61 : f32 to vector<16x64xf32>
    %158 = arith.mulf %157, %156 : vector<16x64xf32>
    %159 = math.tanh %158 : vector<16x64xf32>
    %cst_62 = arith.constant 1.000000e+00 : f32
    %160 = vector.broadcast %cst_62 : f32 to vector<16x64xf32>
    %161 = arith.addf %160, %159 : vector<16x64xf32>
    %162 = arith.mulf %151, %161 : vector<16x64xf32>
    %c0_63 = arith.constant 0 : index
    %c0_64 = arith.constant 0 : index
    %c0_65 = arith.constant 0 : index
    %163 = vector.load %arg13[%c0_63, %c0_64, %c0_65] : memref<2x64x32xf32, #tpu.memory_space<vmem>>, vector<1x64x32xf32>
    %164 = vector.shape_cast %163 : vector<1x64x32xf32> to vector<64x32xf32>
    %cst_66 = arith.constant dense<0.000000e+00> : vector<16x32xf32>
    %165 = tpu.matmul %162, %164, %cst_66 {dimension_numbers = #tpu.dot_dimension_numbers<[1], [0], [0], [1], [0, 0, 1, 1], [], []>} : vector<16x64xf32>, vector<64x32xf32>, vector<16x32xf32> -> vector<16x32xf32>
    %c0_67 = arith.constant 0 : index
    %c0_68 = arith.constant 0 : index
    %c0_69 = arith.constant 0 : index
    %166 = vector.load %arg14[%c0_67, %c0_68, %c0_69] : memref<2x1x32xf32, #tpu.memory_space<vmem>>, vector<1x1x32xf32>
    %167 = vector.shape_cast %166 : vector<1x1x32xf32> to vector<1x32xf32>
    %168 = vector.broadcast %167 : vector<1x32xf32> to vector<16x32xf32>
    %169 = arith.addf %165, %168 : vector<16x32xf32>
    %170 = arith.addf %169, %142 : vector<16x32xf32>
    %c0_70 = arith.constant 0 : index
    %c0_71 = arith.constant 0 : index
    %c0_72 = arith.constant 0 : index
    %171 = vector.load %arg15[%c0_70, %c0_71, %c0_72] : memref<2x1x32xf32, #tpu.memory_space<vmem>>, vector<1x1x32xf32>
    %172 = vector.shape_cast %171 : vector<1x1x32xf32> to vector<1x32xf32>
    %c0_73 = arith.constant 0 : index
    %c0_74 = arith.constant 0 : index
    %c0_75 = arith.constant 0 : index
    %173 = vector.load %arg16[%c0_73, %c0_74, %c0_75] : memref<2x1x32xf32, #tpu.memory_space<vmem>>, vector<1x1x32xf32>
    %174 = vector.shape_cast %173 : vector<1x1x32xf32> to vector<1x32xf32>
    %cst_76 = arith.constant dense<0.000000e+00> : vector<16xf32>
    %175 = vector.multi_reduction <add>, %170, %cst_76 [1] : vector<16x32xf32> to vector<16xf32>
    %176 = vector.shape_cast %175 : vector<16xf32> to vector<16x1xf32>
    %cst_77 = arith.constant 3.200000e+01 : f32
    %177 = vector.broadcast %cst_77 : f32 to vector<16x1xf32>
    %178 = arith.divf %176, %177 : vector<16x1xf32>
    %179 = vector.broadcast %178 : vector<16x1xf32> to vector<16x32xf32>
    %180 = arith.subf %170, %179 : vector<16x32xf32>
    %181 = arith.mulf %180, %180 : vector<16x32xf32>
    %cst_78 = arith.constant dense<0.000000e+00> : vector<16xf32>
    %182 = vector.multi_reduction <add>, %181, %cst_78 [1] : vector<16x32xf32> to vector<16xf32>
    %183 = vector.shape_cast %182 : vector<16xf32> to vector<16x1xf32>
    %cst_79 = arith.constant 3.200000e+01 : f32
    %184 = vector.broadcast %cst_79 : f32 to vector<16x1xf32>
    %185 = arith.divf %183, %184 : vector<16x1xf32>
    %186 = vector.broadcast %178 : vector<16x1xf32> to vector<16x32xf32>
    %187 = arith.subf %170, %186 : vector<16x32xf32>
    %cst_80 = arith.constant 9.99999996E-13 : f32
    %188 = vector.broadcast %cst_80 : f32 to vector<16x1xf32>
    %189 = arith.addf %185, %188 : vector<16x1xf32>
    %190 = math.rsqrt %189 : vector<16x1xf32>
    %191 = vector.broadcast %190 : vector<16x1xf32> to vector<16x32xf32>
    %192 = arith.mulf %187, %191 : vector<16x32xf32>
    %193 = vector.broadcast %172 : vector<1x32xf32> to vector<16x32xf32>
    %194 = arith.mulf %192, %193 : vector<16x32xf32>
    %195 = vector.broadcast %174 : vector<1x32xf32> to vector<16x32xf32>
    %196 = arith.addf %194, %195 : vector<16x32xf32>
    %c1 = arith.constant 1 : index
    %c0_81 = arith.constant 0 : index
    %c0_82 = arith.constant 0 : index
    %197 = vector.load %arg5[%c1, %c0_81, %c0_82] : memref<2x32x96xf32, #tpu.memory_space<vmem>>, vector<1x32x96xf32>
    %198 = vector.shape_cast %197 : vector<1x32x96xf32> to vector<32x96xf32>
    %cst_83 = arith.constant dense<0.000000e+00> : vector<16x96xf32>
    %199 = tpu.matmul %196, %198, %cst_83 {dimension_numbers = #tpu.dot_dimension_numbers<[1], [0], [0], [1], [0, 0, 1, 1], [], []>} : vector<16x32xf32>, vector<32x96xf32>, vector<16x96xf32> -> vector<16x96xf32>
    %c1_84 = arith.constant 1 : index
    %c0_85 = arith.constant 0 : index
    %c0_86 = arith.constant 0 : index
    %200 = vector.load %arg6[%c1_84, %c0_85, %c0_86] : memref<2x1x96xf32, #tpu.memory_space<vmem>>, vector<1x1x96xf32>
    %201 = vector.shape_cast %200 : vector<1x1x96xf32> to vector<1x96xf32>
    %202 = vector.broadcast %201 : vector<1x96xf32> to vector<16x96xf32>
    %203 = arith.addf %199, %202 : vector<16x96xf32>
    %204 = vector.extract_strided_slice %203 {offsets = [0, 0], sizes = [16, 32], strides = [1, 1]} : vector<16x96xf32> to vector<16x32xf32>
    %205 = vector.extract_strided_slice %203 {offsets = [0, 32], sizes = [16, 32], strides = [1, 1]} : vector<16x96xf32> to vector<16x32xf32>
    %206 = vector.extract_strided_slice %203 {offsets = [0, 64], sizes = [16, 32], strides = [1, 1]} : vector<16x96xf32> to vector<16x32xf32>
    %207 = vector.extract_strided_slice %25 {offsets = [0, 0], sizes = [1, 8], strides = [1, 1]} : vector<2x8xf32> to vector<1x8xf32>
    %208 = vector.extract_strided_slice %204 {offsets = [0, 0], sizes = [8, 16], strides = [1, 1]} : vector<16x32xf32> to vector<8x16xf32>
    %209 = vector.extract_strided_slice %205 {offsets = [0, 0], sizes = [8, 16], strides = [1, 1]} : vector<16x32xf32> to vector<8x16xf32>
    %210 = vector.extract_strided_slice %206 {offsets = [0, 0], sizes = [8, 16], strides = [1, 1]} : vector<16x32xf32> to vector<8x16xf32>
    %cst_87 = arith.constant dense<0.000000e+00> : vector<8x8xf32>
    %211 = tpu.matmul %208, %209, %cst_87 {dimension_numbers = #tpu.dot_dimension_numbers<[1], [1], [0], [0], [0, 0, 1, 0], [], []>} : vector<8x16xf32>, vector<8x16xf32>, vector<8x8xf32> -> vector<8x8xf32>
    %212 = vector.broadcast %207 : vector<1x8xf32> to vector<8x8xf32>
    %213 = arith.addf %211, %212 : vector<8x8xf32>
    %cst_88 = arith.constant dense<0xFF800000> : vector<8xf32>
    %214 = vector.multi_reduction <maximumf>, %213, %cst_88 [1] : vector<8x8xf32> to vector<8xf32>
    %215 = vector.shape_cast %214 : vector<8xf32> to vector<8x1xf32>
    %216 = vector.broadcast %215 : vector<8x1xf32> to vector<8x8xf32>
    %217 = arith.subf %213, %216 : vector<8x8xf32>
    %218 = math.exp %217 : vector<8x8xf32>
    %cst_89 = arith.constant dense<0.000000e+00> : vector<8xf32>
    %219 = vector.multi_reduction <add>, %218, %cst_89 [1] : vector<8x8xf32> to vector<8xf32>
    %220 = vector.shape_cast %219 : vector<8xf32> to vector<8x1xf32>
    %221 = tpu.reciprocal %220 {approx = true} : vector<8x1xf32> -> vector<8x1xf32>
    %222 = vector.broadcast %221 : vector<8x1xf32> to vector<8x8xf32>
    %223 = arith.mulf %218, %222 : vector<8x8xf32>
    %cst_90 = arith.constant dense<0.000000e+00> : vector<8x16xf32>
    %224 = tpu.matmul %223, %210, %cst_90 {dimension_numbers = #tpu.dot_dimension_numbers<[1], [0], [0], [1], [0, 0, 1, 1], [], []>} : vector<8x8xf32>, vector<8x16xf32>, vector<8x16xf32> -> vector<8x16xf32>
    %225 = vector.extract_strided_slice %204 {offsets = [0, 16], sizes = [8, 16], strides = [1, 1]} : vector<16x32xf32> to vector<8x16xf32>
    %226 = vector.extract_strided_slice %205 {offsets = [0, 16], sizes = [8, 16], strides = [1, 1]} : vector<16x32xf32> to vector<8x16xf32>
    %227 = vector.extract_strided_slice %206 {offsets = [0, 16], sizes = [8, 16], strides = [1, 1]} : vector<16x32xf32> to vector<8x16xf32>
    %cst_91 = arith.constant dense<0.000000e+00> : vector<8x8xf32>
    %228 = tpu.matmul %225, %226, %cst_91 {dimension_numbers = #tpu.dot_dimension_numbers<[1], [1], [0], [0], [0, 0, 1, 0], [], []>} : vector<8x16xf32>, vector<8x16xf32>, vector<8x8xf32> -> vector<8x8xf32>
    %229 = vector.broadcast %207 : vector<1x8xf32> to vector<8x8xf32>
    %230 = arith.addf %228, %229 : vector<8x8xf32>
    %cst_92 = arith.constant dense<0xFF800000> : vector<8xf32>
    %231 = vector.multi_reduction <maximumf>, %230, %cst_92 [1] : vector<8x8xf32> to vector<8xf32>
    %232 = vector.shape_cast %231 : vector<8xf32> to vector<8x1xf32>
    %233 = vector.broadcast %232 : vector<8x1xf32> to vector<8x8xf32>
    %234 = arith.subf %230, %233 : vector<8x8xf32>
    %235 = math.exp %234 : vector<8x8xf32>
    %cst_93 = arith.constant dense<0.000000e+00> : vector<8xf32>
    %236 = vector.multi_reduction <add>, %235, %cst_93 [1] : vector<8x8xf32> to vector<8xf32>
    %237 = vector.shape_cast %236 : vector<8xf32> to vector<8x1xf32>
    %238 = tpu.reciprocal %237 {approx = true} : vector<8x1xf32> -> vector<8x1xf32>
    %239 = vector.broadcast %238 : vector<8x1xf32> to vector<8x8xf32>
    %240 = arith.mulf %235, %239 : vector<8x8xf32>
    %cst_94 = arith.constant dense<0.000000e+00> : vector<8x16xf32>
    %241 = tpu.matmul %240, %227, %cst_94 {dimension_numbers = #tpu.dot_dimension_numbers<[1], [0], [0], [1], [0, 0, 1, 1], [], []>} : vector<8x8xf32>, vector<8x16xf32>, vector<8x16xf32> -> vector<8x16xf32>
    %242 = tpu.concatenate %224, %241 in 1 : vector<8x16xf32>, vector<8x16xf32> -> vector<8x32xf32>
    %243 = vector.extract_strided_slice %25 {offsets = [1, 0], sizes = [1, 8], strides = [1, 1]} : vector<2x8xf32> to vector<1x8xf32>
    %244 = vector.extract_strided_slice %204 {offsets = [8, 0], sizes = [8, 16], strides = [1, 1]} : vector<16x32xf32> to vector<8x16xf32>
    %245 = vector.extract_strided_slice %205 {offsets = [8, 0], sizes = [8, 16], strides = [1, 1]} : vector<16x32xf32> to vector<8x16xf32>
    %246 = vector.extract_strided_slice %206 {offsets = [8, 0], sizes = [8, 16], strides = [1, 1]} : vector<16x32xf32> to vector<8x16xf32>
    %cst_95 = arith.constant dense<0.000000e+00> : vector<8x8xf32>
    %247 = tpu.matmul %244, %245, %cst_95 {dimension_numbers = #tpu.dot_dimension_numbers<[1], [1], [0], [0], [0, 0, 1, 0], [], []>} : vector<8x16xf32>, vector<8x16xf32>, vector<8x8xf32> -> vector<8x8xf32>
    %248 = vector.broadcast %243 : vector<1x8xf32> to vector<8x8xf32>
    %249 = arith.addf %247, %248 : vector<8x8xf32>
    %cst_96 = arith.constant dense<0xFF800000> : vector<8xf32>
    %250 = vector.multi_reduction <maximumf>, %249, %cst_96 [1] : vector<8x8xf32> to vector<8xf32>
    %251 = vector.shape_cast %250 : vector<8xf32> to vector<8x1xf32>
    %252 = vector.broadcast %251 : vector<8x1xf32> to vector<8x8xf32>
    %253 = arith.subf %249, %252 : vector<8x8xf32>
    %254 = math.exp %253 : vector<8x8xf32>
    %cst_97 = arith.constant dense<0.000000e+00> : vector<8xf32>
    %255 = vector.multi_reduction <add>, %254, %cst_97 [1] : vector<8x8xf32> to vector<8xf32>
    %256 = vector.shape_cast %255 : vector<8xf32> to vector<8x1xf32>
    %257 = tpu.reciprocal %256 {approx = true} : vector<8x1xf32> -> vector<8x1xf32>
    %258 = vector.broadcast %257 : vector<8x1xf32> to vector<8x8xf32>
    %259 = arith.mulf %254, %258 : vector<8x8xf32>
    %cst_98 = arith.constant dense<0.000000e+00> : vector<8x16xf32>
    %260 = tpu.matmul %259, %246, %cst_98 {dimension_numbers = #tpu.dot_dimension_numbers<[1], [0], [0], [1], [0, 0, 1, 1], [], []>} : vector<8x8xf32>, vector<8x16xf32>, vector<8x16xf32> -> vector<8x16xf32>
    %261 = vector.extract_strided_slice %204 {offsets = [8, 16], sizes = [8, 16], strides = [1, 1]} : vector<16x32xf32> to vector<8x16xf32>
    %262 = vector.extract_strided_slice %205 {offsets = [8, 16], sizes = [8, 16], strides = [1, 1]} : vector<16x32xf32> to vector<8x16xf32>
    %263 = vector.extract_strided_slice %206 {offsets = [8, 16], sizes = [8, 16], strides = [1, 1]} : vector<16x32xf32> to vector<8x16xf32>
    %cst_99 = arith.constant dense<0.000000e+00> : vector<8x8xf32>
    %264 = tpu.matmul %261, %262, %cst_99 {dimension_numbers = #tpu.dot_dimension_numbers<[1], [1], [0], [0], [0, 0, 1, 0], [], []>} : vector<8x16xf32>, vector<8x16xf32>, vector<8x8xf32> -> vector<8x8xf32>
    %265 = vector.broadcast %243 : vector<1x8xf32> to vector<8x8xf32>
    %266 = arith.addf %264, %265 : vector<8x8xf32>
    %cst_100 = arith.constant dense<0xFF800000> : vector<8xf32>
    %267 = vector.multi_reduction <maximumf>, %266, %cst_100 [1] : vector<8x8xf32> to vector<8xf32>
    %268 = vector.shape_cast %267 : vector<8xf32> to vector<8x1xf32>
    %269 = vector.broadcast %268 : vector<8x1xf32> to vector<8x8xf32>
    %270 = arith.subf %266, %269 : vector<8x8xf32>
    %271 = math.exp %270 : vector<8x8xf32>
    %cst_101 = arith.constant dense<0.000000e+00> : vector<8xf32>
    %272 = vector.multi_reduction <add>, %271, %cst_101 [1] : vector<8x8xf32> to vector<8xf32>
    %273 = vector.shape_cast %272 : vector<8xf32> to vector<8x1xf32>
    %274 = tpu.reciprocal %273 {approx = true} : vector<8x1xf32> -> vector<8x1xf32>
    %275 = vector.broadcast %274 : vector<8x1xf32> to vector<8x8xf32>
    %276 = arith.mulf %271, %275 : vector<8x8xf32>
    %cst_102 = arith.constant dense<0.000000e+00> : vector<8x16xf32>
    %277 = tpu.matmul %276, %263, %cst_102 {dimension_numbers = #tpu.dot_dimension_numbers<[1], [0], [0], [1], [0, 0, 1, 1], [], []>} : vector<8x8xf32>, vector<8x16xf32>, vector<8x16xf32> -> vector<8x16xf32>
    %278 = tpu.concatenate %260, %277 in 1 : vector<8x16xf32>, vector<8x16xf32> -> vector<8x32xf32>
    %279 = tpu.concatenate %242, %278 in 0 : vector<8x32xf32>, vector<8x32xf32> -> vector<16x32xf32>
    %c1_103 = arith.constant 1 : index
    %c0_104 = arith.constant 0 : index
    %c0_105 = arith.constant 0 : index
    %280 = vector.load %arg7[%c1_103, %c0_104, %c0_105] : memref<2x32x32xf32, #tpu.memory_space<vmem>>, vector<1x32x32xf32>
    %281 = vector.shape_cast %280 : vector<1x32x32xf32> to vector<32x32xf32>
    %cst_106 = arith.constant dense<0.000000e+00> : vector<16x32xf32>
    %282 = tpu.matmul %279, %281, %cst_106 {dimension_numbers = #tpu.dot_dimension_numbers<[1], [0], [0], [1], [0, 0, 1, 1], [], []>} : vector<16x32xf32>, vector<32x32xf32>, vector<16x32xf32> -> vector<16x32xf32>
    %c1_107 = arith.constant 1 : index
    %c0_108 = arith.constant 0 : index
    %c0_109 = arith.constant 0 : index
    %283 = vector.load %arg8[%c1_107, %c0_108, %c0_109] : memref<2x1x32xf32, #tpu.memory_space<vmem>>, vector<1x1x32xf32>
    %284 = vector.shape_cast %283 : vector<1x1x32xf32> to vector<1x32xf32>
    %285 = vector.broadcast %284 : vector<1x32xf32> to vector<16x32xf32>
    %286 = arith.addf %282, %285 : vector<16x32xf32>
    %287 = arith.addf %286, %196 : vector<16x32xf32>
    %c1_110 = arith.constant 1 : index
    %c0_111 = arith.constant 0 : index
    %c0_112 = arith.constant 0 : index
    %288 = vector.load %arg9[%c1_110, %c0_111, %c0_112] : memref<2x1x32xf32, #tpu.memory_space<vmem>>, vector<1x1x32xf32>
    %289 = vector.shape_cast %288 : vector<1x1x32xf32> to vector<1x32xf32>
    %c1_113 = arith.constant 1 : index
    %c0_114 = arith.constant 0 : index
    %c0_115 = arith.constant 0 : index
    %290 = vector.load %arg10[%c1_113, %c0_114, %c0_115] : memref<2x1x32xf32, #tpu.memory_space<vmem>>, vector<1x1x32xf32>
    %291 = vector.shape_cast %290 : vector<1x1x32xf32> to vector<1x32xf32>
    %cst_116 = arith.constant dense<0.000000e+00> : vector<16xf32>
    %292 = vector.multi_reduction <add>, %287, %cst_116 [1] : vector<16x32xf32> to vector<16xf32>
    %293 = vector.shape_cast %292 : vector<16xf32> to vector<16x1xf32>
    %cst_117 = arith.constant 3.200000e+01 : f32
    %294 = vector.broadcast %cst_117 : f32 to vector<16x1xf32>
    %295 = arith.divf %293, %294 : vector<16x1xf32>
    %296 = vector.broadcast %295 : vector<16x1xf32> to vector<16x32xf32>
    %297 = arith.subf %287, %296 : vector<16x32xf32>
    %298 = arith.mulf %297, %297 : vector<16x32xf32>
    %cst_118 = arith.constant dense<0.000000e+00> : vector<16xf32>
    %299 = vector.multi_reduction <add>, %298, %cst_118 [1] : vector<16x32xf32> to vector<16xf32>
    %300 = vector.shape_cast %299 : vector<16xf32> to vector<16x1xf32>
    %cst_119 = arith.constant 3.200000e+01 : f32
    %301 = vector.broadcast %cst_119 : f32 to vector<16x1xf32>
    %302 = arith.divf %300, %301 : vector<16x1xf32>
    %303 = vector.broadcast %295 : vector<16x1xf32> to vector<16x32xf32>
    %304 = arith.subf %287, %303 : vector<16x32xf32>
    %cst_120 = arith.constant 9.99999996E-13 : f32
    %305 = vector.broadcast %cst_120 : f32 to vector<16x1xf32>
    %306 = arith.addf %302, %305 : vector<16x1xf32>
    %307 = math.rsqrt %306 : vector<16x1xf32>
    %308 = vector.broadcast %307 : vector<16x1xf32> to vector<16x32xf32>
    %309 = arith.mulf %304, %308 : vector<16x32xf32>
    %310 = vector.broadcast %289 : vector<1x32xf32> to vector<16x32xf32>
    %311 = arith.mulf %309, %310 : vector<16x32xf32>
    %312 = vector.broadcast %291 : vector<1x32xf32> to vector<16x32xf32>
    %313 = arith.addf %311, %312 : vector<16x32xf32>
    %c1_121 = arith.constant 1 : index
    %c0_122 = arith.constant 0 : index
    %c0_123 = arith.constant 0 : index
    %314 = vector.load %arg11[%c1_121, %c0_122, %c0_123] : memref<2x32x64xf32, #tpu.memory_space<vmem>>, vector<1x32x64xf32>
    %315 = vector.shape_cast %314 : vector<1x32x64xf32> to vector<32x64xf32>
    %cst_124 = arith.constant dense<0.000000e+00> : vector<16x64xf32>
    %316 = tpu.matmul %313, %315, %cst_124 {dimension_numbers = #tpu.dot_dimension_numbers<[1], [0], [0], [1], [0, 0, 1, 1], [], []>} : vector<16x32xf32>, vector<32x64xf32>, vector<16x64xf32> -> vector<16x64xf32>
    %c1_125 = arith.constant 1 : index
    %c0_126 = arith.constant 0 : index
    %c0_127 = arith.constant 0 : index
    %317 = vector.load %arg12[%c1_125, %c0_126, %c0_127] : memref<2x1x64xf32, #tpu.memory_space<vmem>>, vector<1x1x64xf32>
    %318 = vector.shape_cast %317 : vector<1x1x64xf32> to vector<1x64xf32>
    %319 = vector.broadcast %318 : vector<1x64xf32> to vector<16x64xf32>
    %320 = arith.addf %316, %319 : vector<16x64xf32>
    %cst_128 = arith.constant 5.000000e-01 : f32
    %321 = vector.broadcast %cst_128 : f32 to vector<16x64xf32>
    %322 = arith.mulf %321, %320 : vector<16x64xf32>
    %cst_129 = arith.constant 4.471500e-02 : f32
    %323 = vector.broadcast %cst_129 : f32 to vector<16x64xf32>
    %324 = arith.mulf %323, %320 : vector<16x64xf32>
    %325 = arith.mulf %324, %320 : vector<16x64xf32>
    %326 = arith.mulf %325, %320 : vector<16x64xf32>
    %327 = arith.addf %320, %326 : vector<16x64xf32>
    %cst_130 = arith.constant 0.797884583 : f32
    %328 = vector.broadcast %cst_130 : f32 to vector<16x64xf32>
    %329 = arith.mulf %328, %327 : vector<16x64xf32>
    %330 = math.tanh %329 : vector<16x64xf32>
    %cst_131 = arith.constant 1.000000e+00 : f32
    %331 = vector.broadcast %cst_131 : f32 to vector<16x64xf32>
    %332 = arith.addf %331, %330 : vector<16x64xf32>
    %333 = arith.mulf %322, %332 : vector<16x64xf32>
    %c1_132 = arith.constant 1 : index
    %c0_133 = arith.constant 0 : index
    %c0_134 = arith.constant 0 : index
    %334 = vector.load %arg13[%c1_132, %c0_133, %c0_134] : memref<2x64x32xf32, #tpu.memory_space<vmem>>, vector<1x64x32xf32>
    %335 = vector.shape_cast %334 : vector<1x64x32xf32> to vector<64x32xf32>
    %cst_135 = arith.constant dense<0.000000e+00> : vector<16x32xf32>
    %336 = tpu.matmul %333, %335, %cst_135 {dimension_numbers = #tpu.dot_dimension_numbers<[1], [0], [0], [1], [0, 0, 1, 1], [], []>} : vector<16x64xf32>, vector<64x32xf32>, vector<16x32xf32> -> vector<16x32xf32>
    %c1_136 = arith.constant 1 : index
    %c0_137 = arith.constant 0 : index
    %c0_138 = arith.constant 0 : index
    %337 = vector.load %arg14[%c1_136, %c0_137, %c0_138] : memref<2x1x32xf32, #tpu.memory_space<vmem>>, vector<1x1x32xf32>
    %338 = vector.shape_cast %337 : vector<1x1x32xf32> to vector<1x32xf32>
    %339 = vector.broadcast %338 : vector<1x32xf32> to vector<16x32xf32>
    %340 = arith.addf %336, %339 : vector<16x32xf32>
    %341 = arith.addf %340, %313 : vector<16x32xf32>
    %c1_139 = arith.constant 1 : index
    %c0_140 = arith.constant 0 : index
    %c0_141 = arith.constant 0 : index
    %342 = vector.load %arg15[%c1_139, %c0_140, %c0_141] : memref<2x1x32xf32, #tpu.memory_space<vmem>>, vector<1x1x32xf32>
    %343 = vector.shape_cast %342 : vector<1x1x32xf32> to vector<1x32xf32>
    %c1_142 = arith.constant 1 : index
    %c0_143 = arith.constant 0 : index
    %c0_144 = arith.constant 0 : index
    %344 = vector.load %arg16[%c1_142, %c0_143, %c0_144] : memref<2x1x32xf32, #tpu.memory_space<vmem>>, vector<1x1x32xf32>
    %345 = vector.shape_cast %344 : vector<1x1x32xf32> to vector<1x32xf32>
    %cst_145 = arith.constant dense<0.000000e+00> : vector<16xf32>
    %346 = vector.multi_reduction <add>, %341, %cst_145 [1] : vector<16x32xf32> to vector<16xf32>
    %347 = vector.shape_cast %346 : vector<16xf32> to vector<16x1xf32>
    %cst_146 = arith.constant 3.200000e+01 : f32
    %348 = vector.broadcast %cst_146 : f32 to vector<16x1xf32>
    %349 = arith.divf %347, %348 : vector<16x1xf32>
    %350 = vector.broadcast %349 : vector<16x1xf32> to vector<16x32xf32>
    %351 = arith.subf %341, %350 : vector<16x32xf32>
    %352 = arith.mulf %351, %351 : vector<16x32xf32>
    %cst_147 = arith.constant dense<0.000000e+00> : vector<16xf32>
    %353 = vector.multi_reduction <add>, %352, %cst_147 [1] : vector<16x32xf32> to vector<16xf32>
    %354 = vector.shape_cast %353 : vector<16xf32> to vector<16x1xf32>
    %cst_148 = arith.constant 3.200000e+01 : f32
    %355 = vector.broadcast %cst_148 : f32 to vector<16x1xf32>
    %356 = arith.divf %354, %355 : vector<16x1xf32>
    %357 = vector.broadcast %349 : vector<16x1xf32> to vector<16x32xf32>
    %358 = arith.subf %341, %357 : vector<16x32xf32>
    %cst_149 = arith.constant 9.99999996E-13 : f32
    %359 = vector.broadcast %cst_149 : f32 to vector<16x1xf32>
    %360 = arith.addf %356, %359 : vector<16x1xf32>
    %361 = math.rsqrt %360 : vector<16x1xf32>
    %362 = vector.broadcast %361 : vector<16x1xf32> to vector<16x32xf32>
    %363 = arith.mulf %358, %362 : vector<16x32xf32>
    %364 = vector.broadcast %343 : vector<1x32xf32> to vector<16x32xf32>
    %365 = arith.mulf %363, %364 : vector<16x32xf32>
    %366 = vector.broadcast %345 : vector<1x32xf32> to vector<16x32xf32>
    %367 = arith.addf %365, %366 : vector<16x32xf32>
    %368 = vector.extract_strided_slice %367 {offsets = [0, 0], sizes = [1, 32], strides = [1, 1]} : vector<16x32xf32> to vector<1x32xf32>
    %369 = vector.extract_strided_slice %367 {offsets = [8, 0], sizes = [1, 32], strides = [1, 1]} : vector<16x32xf32> to vector<1x32xf32>
    %370 = tpu.concatenate %368, %369 in 0 : vector<1x32xf32>, vector<1x32xf32> -> vector<2x32xf32>
    %c0_150 = arith.constant 0 : index
    %c0_151 = arith.constant 0 : index
    %371 = vector.load %arg17[%c0_150, %c0_151] : memref<32x32xf32, #tpu.memory_space<vmem>>, vector<32x32xf32>
    %cst_152 = arith.constant dense<0.000000e+00> : vector<2x32xf32>
    %372 = tpu.matmul %370, %371, %cst_152 {dimension_numbers = #tpu.dot_dimension_numbers<[1], [0], [0], [1], [0, 0, 1, 1], [], []>} : vector<2x32xf32>, vector<32x32xf32>, vector<2x32xf32> -> vector<2x32xf32>
    %c0_153 = arith.constant 0 : index
    %c0_154 = arith.constant 0 : index
    %373 = vector.load %arg18[%c0_153, %c0_154] : memref<1x32xf32, #tpu.memory_space<vmem>>, vector<1x32xf32>
    %374 = vector.broadcast %373 : vector<1x32xf32> to vector<2x32xf32>
    %375 = arith.addf %372, %374 : vector<2x32xf32>
    %376 = math.tanh %375 : vector<2x32xf32>
    %c0_155 = arith.constant 0 : index
    %c0_156 = arith.constant 0 : index
    %377 = vector.load %arg19[%c0_155, %c0_156] : memref<32x2xf32, #tpu.memory_space<vmem>>, vector<32x2xf32>
    %cst_157 = arith.constant dense<0.000000e+00> : vector<2x2xf32>
    %378 = tpu.matmul %376, %377, %cst_157 {dimension_numbers = #tpu.dot_dimension_numbers<[1], [0], [0], [1], [0, 0, 1, 1], [], []>} : vector<2x32xf32>, vector<32x2xf32>, vector<2x2xf32> -> vector<2x2xf32>
    %c0_158 = arith.constant 0 : index
    %c0_159 = arith.constant 0 : index
    %379 = vector.load %arg20[%c0_158, %c0_159] : memref<1x2xf32, #tpu.memory_space<vmem>>, vector<1x2xf32>
    %380 = vector.broadcast %379 : vector<1x2xf32> to vector<2x2xf32>
    %381 = arith.addf %378, %380 : vector<2x2xf32>
    %c0_160 = arith.constant 0 : index
    %c0_161 = arith.constant 0 : index
    %382 = vector.load %arg21[%c0_160, %c0_161] : memref<2x2xf32, #tpu.memory_space<vmem>>, vector<2x2xf32>
    tpu.vector_store %arg21[%c0_160, %c0_161], %381 {strides = array<i32>} : memref<2x2xf32, #tpu.memory_space<vmem>>, vector<2x2xf32>,
    return
  }
  func.func @transform_0(%arg0: i32) -> (i32, i32) {
    %c0_i32 = arith.constant 0 : i32
    %c0_i32_0 = arith.constant 0 : i32
    %c0_i32_1 = arith.constant 0 : i32
    return %c0_i32, %c0_i32_0 : i32, i32
  }
  func.func @transform_1(%arg0: i32) -> (i32, i32) {
    %c0_i32 = arith.constant 0 : i32
    %c0_i32_0 = arith.constant 0 : i32
    %c0_i32_1 = arith.constant 0 : i32
    return %c0_i32, %c0_i32_0 : i32, i32
  }
  func.func @transform_2(%arg0: i32) -> (i32, i32) {
    %c0_i32 = arith.constant 0 : i32
    %c0_i32_0 = arith.constant 0 : i32
    %c0_i32_1 = arith.constant 0 : i32
    return %c0_i32, %c0_i32_0 : i32, i32
  }
  func.func @transform_3(%arg0: i32) -> (i32, i32) {
    %c0_i32 = arith.constant 0 : i32
    %c0_i32_0 = arith.constant 0 : i32
    %c0_i32_1 = arith.constant 0 : i32
    return %c0_i32, %c0_i32_0 : i32, i32
  }
  func.func @transform_4(%arg0: i32) -> (i32, i32, i32) {
    %c0_i32 = arith.constant 0 : i32
    %c0_i32_0 = arith.constant 0 : i32
    %c0_i32_1 = arith.constant 0 : i32
    %c0_i32_2 = arith.constant 0 : i32
    return %c0_i32, %c0_i32_0, %c0_i32_1 : i32, i32, i32
  }
  func.func @transform_5(%arg0: i32) -> (i32, i32, i32) {
    %c0_i32 = arith.constant 0 : i32
    %c0_i32_0 = arith.constant 0 : i32
    %c0_i32_1 = arith.constant 0 : i32
    %c0_i32_2 = arith.constant 0 : i32
    return %c0_i32, %c0_i32_0, %c0_i32_1 : i32, i32, i32
  }
  func.func @transform_6(%arg0: i32) -> (i32, i32, i32) {
    %c0_i32 = arith.constant 0 : i32
    %c0_i32_0 = arith.constant 0 : i32
    %c0_i32_1 = arith.constant 0 : i32
    %c0_i32_2 = arith.constant 0 : i32
    return %c0_i32, %c0_i32_0, %c0_i32_1 : i32, i32, i32
  }
  func.func @transform_7(%arg0: i32) -> (i32, i32, i32) {
    %c0_i32 = arith.constant 0 : i32
    %c0_i32_0 = arith.constant 0 : i32
    %c0_i32_1 = arith.constant 0 : i32
    %c0_i32_2 = arith.constant 0 : i32
    return %c0_i32, %c0_i32_0, %c0_i32_1 : i32, i32, i32
  }
  func.func @transform_8(%arg0: i32) -> (i32, i32, i32) {
    %c0_i32 = arith.constant 0 : i32
    %c0_i32_0 = arith.constant 0 : i32
    %c0_i32_1 = arith.constant 0 : i32
    %c0_i32_2 = arith.constant 0 : i32
    return %c0_i32, %c0_i32_0, %c0_i32_1 : i32, i32, i32
  }
  func.func @transform_9(%arg0: i32) -> (i32, i32, i32) {
    %c0_i32 = arith.constant 0 : i32
    %c0_i32_0 = arith.constant 0 : i32
    %c0_i32_1 = arith.constant 0 : i32
    %c0_i32_2 = arith.constant 0 : i32
    return %c0_i32, %c0_i32_0, %c0_i32_1 : i32, i32, i32
  }
  func.func @transform_10(%arg0: i32) -> (i32, i32, i32) {
    %c0_i32 = arith.constant 0 : i32
    %c0_i32_0 = arith.constant 0 : i32
    %c0_i32_1 = arith.constant 0 : i32
    %c0_i32_2 = arith.constant 0 : i32
    return %c0_i32, %c0_i32_0, %c0_i32_1 : i32, i32, i32
  }
  func.func @transform_11(%arg0: i32) -> (i32, i32, i32) {
    %c0_i32 = arith.constant 0 : i32
    %c0_i32_0 = arith.constant 0 : i32
    %c0_i32_1 = arith.constant 0 : i32
    %c0_i32_2 = arith.constant 0 : i32
    return %c0_i32, %c0_i32_0, %c0_i32_1 : i32, i32, i32
  }
  func.func @transform_12(%arg0: i32) -> (i32, i32, i32) {
    %c0_i32 = arith.constant 0 : i32
    %c0_i32_0 = arith.constant 0 : i32
    %c0_i32_1 = arith.constant 0 : i32
    %c0_i32_2 = arith.constant 0 : i32
    return %c0_i32, %c0_i32_0, %c0_i32_1 : i32, i32, i32
  }
  func.func @transform_13(%arg0: i32) -> (i32, i32, i32) {
    %c0_i32 = arith.constant 0 : i32
    %c0_i32_0 = arith.constant 0 : i32
    %c0_i32_1 = arith.constant 0 : i32
    %c0_i32_2 = arith.constant 0 : i32
    return %c0_i32, %c0_i32_0, %c0_i32_1 : i32, i32, i32
  }
  func.func @transform_14(%arg0: i32) -> (i32, i32, i32) {
    %c0_i32 = arith.constant 0 : i32
    %c0_i32_0 = arith.constant 0 : i32
    %c0_i32_1 = arith.constant 0 : i32
    %c0_i32_2 = arith.constant 0 : i32
    return %c0_i32, %c0_i32_0, %c0_i32_1 : i32, i32, i32
  }
  func.func @transform_15(%arg0: i32) -> (i32, i32, i32) {
    %c0_i32 = arith.constant 0 : i32
    %c0_i32_0 = arith.constant 0 : i32
    %c0_i32_1 = arith.constant 0 : i32
    %c0_i32_2 = arith.constant 0 : i32
    return %c0_i32, %c0_i32_0, %c0_i32_1 : i32, i32, i32
  }
  func.func @transform_16(%arg0: i32) -> (i32, i32) {
    %c0_i32 = arith.constant 0 : i32
    %c0_i32_0 = arith.constant 0 : i32
    %c0_i32_1 = arith.constant 0 : i32
    return %c0_i32, %c0_i32_0 : i32, i32
  }
  func.func @transform_17(%arg0: i32) -> (i32, i32) {
    %c0_i32 = arith.constant 0 : i32
    %c0_i32_0 = arith.constant 0 : i32
    %c0_i32_1 = arith.constant 0 : i32
    return %c0_i32, %c0_i32_0 : i32, i32
  }
  func.func @transform_18(%arg0: i32) -> (i32, i32) {
    %c0_i32 = arith.constant 0 : i32
    %c0_i32_0 = arith.constant 0 : i32
    %c0_i32_1 = arith.constant 0 : i32
    return %c0_i32, %c0_i32_0 : i32, i32
  }
  func.func @transform_19(%arg0: i32) -> (i32, i32) {
    %c0_i32 = arith.constant 0 : i32
    %c0_i32_0 = arith.constant 0 : i32
    %c0_i32_1 = arith.constant 0 : i32
    return %c0_i32, %c0_i32_0 : i32, i32
  }
  func.func @transform_20(%arg0: i32) -> (i32, i32) {
    %c0_i32 = arith.constant 0 : i32
    %c0_i32_0 = arith.constant 0 : i32
    %c0_i32_1 = arith.constant 0 : i32
    return %c0_i32, %c0_i32_0 : i32, i32
  }
}

</mosaic_0001>

<llo_original>
// kernel: joint_bert_forward.1
$region0: #{joint_bert_forward.1}
  #allocation0 [shape = 'u32[]', space=smem, size = 0x4, offset = 0x4, fixed_abs, tag = 'smem constant byte address 0x4 - core index']
  #allocation1 [shape = 'u32[144,128]{1,0:T(1,128)}', space=vmem, size = 0x12000, scoped, tag = 'internal scratch']
  %s0 = inlined_call_operand.vmem [shape: f32[16,32], index: 0, kind: input, shape index: {}]
  %s1 = inlined_call_operand.vmem [shape: f32[2,8], index: 1, kind: input, shape index: {}]
  %s2 = inlined_call_operand.vmem [shape: f32[1,32], index: 2, kind: input, shape index: {}]
  %s3 = inlined_call_operand.vmem [shape: f32[1,32], index: 3, kind: input, shape index: {}]
  %s4 = inlined_call_operand.vmem [shape: f32[2,32,96], index: 4, kind: input, shape index: {}]
  %s5 = inlined_call_operand.vmem [shape: f32[2,1,96], index: 5, kind: input, shape index: {}]
  %s6 = inlined_call_operand.vmem [shape: f32[2,32,32], index: 6, kind: input, shape index: {}]
  %s7 = inlined_call_operand.vmem [shape: f32[2,1,32], index: 7, kind: input, shape index: {}]
  %s8 = inlined_call_operand.vmem [shape: f32[2,1,32], index: 8, kind: input, shape index: {}]
  %s9 = inlined_call_operand.vmem [shape: f32[2,1,32], index: 9, kind: input, shape index: {}]
  %s10 = inlined_call_operand.vmem [shape: f32[2,32,64], index: 10, kind: input, shape index: {}]
  %s11 = inlined_call_operand.vmem [shape: f32[2,1,64], index: 11, kind: input, shape index: {}]
  %s12 = inlined_call_operand.vmem [shape: f32[2,64,32], index: 12, kind: input, shape index: {}]
  %s13 = inlined_call_operand.vmem [shape: f32[2,1,32], index: 13, kind: input, shape index: {}]
  %s14 = inlined_call_operand.vmem [shape: f32[2,1,32], index: 14, kind: input, shape index: {}]
  %s15 = inlined_call_operand.vmem [shape: f32[2,1,32], index: 15, kind: input, shape index: {}]
  %s16 = inlined_call_operand.vmem [shape: f32[32,32], index: 16, kind: input, shape index: {}]
  %s17 = inlined_call_operand.vmem [shape: f32[1,32], index: 17, kind: input, shape index: {}]
  %s18 = inlined_call_operand.vmem [shape: f32[32,2], index: 18, kind: input, shape index: {}]
  %s19 = inlined_call_operand.vmem [shape: f32[1,2], index: 19, kind: input, shape index: {}]
  %s20 = inlined_call_operand.hbm [shape: f32[2,2], index: 20, kind: output, shape index: {}]
  %s21 = sld [smem:[#allocation0]]
  $region90: #{joint_bert_forward.1} parent=0
    _
  %s23 = ssub.s32 1, %s21
  %s24 = scalar_select 0, %s23, %s21
  $region1: #{joint_bert_forward.1} parent=0
    #allocation2 [shape = 'u8[1024]{0}', space=vmem, size = 0x400, scoped, tag = 'output window, operand 0, single buffered']
    #allocation3 [shape = 's32[1]{0}', space=sflag, size = 0x4, scoped, tag = 'scoped memory for joint_bert_forward.1']
    %25 = vsyncpa [#allocation3], 0
    // Predicated region
    $region2: #{joint_bert_forward.1} parent=1 // pred_check
      _
    $region3: #{joint_bert_forward.1} parent=1 // pred_check_branch
      %27 = sbr.rel (0) target = $region5
    $region4: #{joint_bert_forward.1} parent=1 // pred_region
      _
    $region5: #{joint_bert_forward.1} parent=1 // pred_fallthru
      _
    // Predicated region
    $region6: #{joint_bert_forward.1} parent=1 // pred_check
      _
    $region7: #{joint_bert_forward.1} parent=1 // pred_check_branch
      %29 = sbr.rel (0) target = $region9
    $region8: #{joint_bert_forward.1} parent=1 // pred_region
      _
    $region9: #{joint_bert_forward.1} parent=1 // pred_fallthru
      _
    // Predicated region
    $region10: #{joint_bert_forward.1} parent=1 // pred_check
      _
    $region11: #{joint_bert_forward.1} parent=1 // pred_check_branch
      %31 = sbr.rel (0) target = $region13
    $region12: #{joint_bert_forward.1} parent=1 // pred_region
      _
    $region13: #{joint_bert_forward.1} parent=1 // pred_fallthru
      _
    // Predicated region
    $region14: #{joint_bert_forward.1} parent=1 // pred_check
      _
    $region15: #{joint_bert_forward.1} parent=1 // pred_check_branch
      %33 = sbr.rel (0) target = $region17
    $region16: #{joint_bert_forward.1} parent=1 // pred_region
      _
    $region17: #{joint_bert_forward.1} parent=1 // pred_fallthru
      _
    // Predicated region
    $region18: #{joint_bert_forward.1} parent=1 // pred_check
      _
    $region19: #{joint_bert_forward.1} parent=1 // pred_check_branch
      %35 = sbr.rel (0) target = $region21
    $region20: #{joint_bert_forward.1} parent=1 // pred_region
      _
    $region21: #{joint_bert_forward.1} parent=1 // pred_fallthru
      _
    // Predicated region
    $region22: #{joint_bert_forward.1} parent=1 // pred_check
      _
    $region23: #{joint_bert_forward.1} parent=1 // pred_check_branch
      %37 = sbr.rel (0) target = $region25
    $region24: #{joint_bert_forward.1} parent=1 // pred_region
      _
    $region25: #{joint_bert_forward.1} parent=1 // pred_fallthru
      _
    // Predicated region
    $region26: #{joint_bert_forward.1} parent=1 // pred_check
      _
    $region27: #{joint_bert_forward.1} parent=1 // pred_check_branch
      %39 = sbr.rel (0) target = $region29
    $region28: #{joint_bert_forward.1} parent=1 // pred_region
      _
    $region29: #{joint_bert_forward.1} parent=1 // pred_fallthru
      _
    // Predicated region
    $region30: #{joint_bert_forward.1} parent=1 // pred_check
      _
    $region31: #{joint_bert_forward.1} parent=1 // pred_check_branch
      %41 = sbr.rel (0) target = $region33
    $region32: #{joint_bert_forward.1} parent=1 // pred_region
      _
    $region33: #{joint_bert_forward.1} parent=1 // pred_fallthru
      _
    // Predicated region
    $region34: #{joint_bert_forward.1} parent=1 // pred_check
      _
    $region35: #{joint_bert_forward.1} parent=1 // pred_check_branch
      %43 = sbr.rel (0) target = $region37
    $region36: #{joint_bert_forward.1} parent=1 // pred_region
      _
    $region37: #{joint_bert_forward.1} parent=1 // pred_fallthru
      _
    // Predicated region
    $region38: #{joint_bert_forward.1} parent=1 // pred_check
      _
    $region39: #{joint_bert_forward.1} parent=1 // pred_check_branch
      %45 = sbr.rel (0) target = $region41
    $region40: #{joint_bert_forward.1} parent=1 // pred_region
      _
    $region41: #{joint_bert_forward.1} parent=1 // pred_fallthru
      _
    // Predicated region
    $region42: #{joint_bert_forward.1} parent=1 // pred_check
      _
    $region43: #{joint_bert_forward.1} parent=1 // pred_check_branch
      %47 = sbr.rel (0) target = $region45
    $region44: #{joint_bert_forward.1} parent=1 // pred_region
      _
    $region45: #{joint_bert_forward.1} parent=1 // pred_fallthru
      _
    // Predicated region
    $region46: #{joint_bert_forward.1} parent=1 // pred_check
      _
    $region47: #{joint_bert_forward.1} parent=1 // pred_check_branch
      %49 = sbr.rel (0) target = $region49
    $region48: #{joint_bert_forward.1} parent=1 // pred_region
      _
    $region49: #{joint_bert_forward.1} parent=1 // pred_fallthru
      _
    // Predicated region
    $region50: #{joint_bert_forward.1} parent=1 // pred_check
      _
    $region51: #{joint_bert_forward.1} parent=1 // pred_check_branch
      %51 = sbr.rel (0) target = $region53
    $region52: #{joint_bert_forward.1} parent=1 // pred_region
      _
    $region53: #{joint_bert_forward.1} parent=1 // pred_fallthru
      _
    // Predicated region
    $region54: #{joint_bert_forward.1} parent=1 // pred_check
      _
    $region55: #{joint_bert_forward.1} parent=1 // pred_check_branch
      %53 = sbr.rel (0) target = $region57
    $region56: #{joint_bert_forward.1} parent=1 // pred_region
      _
    $region57: #{joint_bert_forward.1} parent=1 // pred_fallthru
      _
    // Predicated region
    $region58: #{joint_bert_forward.1} parent=1 // pred_check
      _
    $region59: #{joint_bert_forward.1} parent=1 // pred_check_branch
      %55 = sbr.rel (0) target = $region61
    $region60: #{joint_bert_forward.1} parent=1 // pred_region
      _
    $region61: #{joint_bert_forward.1} parent=1 // pred_fallthru
      _
    // Predicated region
    $region62: #{joint_bert_forward.1} parent=1 // pred_check
      _
    $region63: #{joint_bert_forward.1} parent=1 // pred_check_branch
      %57 = sbr.rel (0) target = $region65
    $region64: #{joint_bert_forward.1} parent=1 // pred_region
      _
    $region65: #{joint_bert_forward.1} parent=1 // pred_fallthru
      _
    // Predicated region
    $region66: #{joint_bert_forward.1} parent=1 // pred_check
      _
    $region67: #{joint_bert_forward.1} parent=1 // pred_check_branch
      %59 = sbr.rel (0) target = $region69
    $region68: #{joint_bert_forward.1} parent=1 // pred_region
      _
    $region69: #{joint_bert_forward.1} parent=1 // pred_fallthru
      _
    // Predicated region
    $region70: #{joint_bert_forward.1} parent=1 // pred_check
      _
    $region71: #{joint_bert_forward.1} parent=1 // pred_check_branch
      %61 = sbr.rel (0) target = $region73
    $region72: #{joint_bert_forward.1} parent=1 // pred_region
      _
    $region73: #{joint_bert_forward.1} parent=1 // pred_fallthru
      _
    // Predicated region
    $region74: #{joint_bert_forward.1} parent=1 // pred_check
      _
    $region75: #{joint_bert_forward.1} parent=1 // pred_check_branch
      %63 = sbr.rel (0) target = $region77
    $region76: #{joint_bert_forward.1} parent=1 // pred_region
      _
    $region77: #{joint_bert_forward.1} parent=1 // pred_fallthru
      _
    // Predicated region
    $region78: #{joint_bert_forward.1} parent=1 // pred_check
      _
    $region79: #{joint_bert_forward.1} parent=1 // pred_check_branch
      %65 = sbr.rel (0) target = $region81
    $region80: #{joint_bert_forward.1} parent=1 // pred_region
      _
    $region81: #{joint_bert_forward.1} parent=1 // pred_fallthru
      _
    %v66 = vld [vmem:[%s0] sm:$0xff]
    %v67 = vld [vmem:[%s0 + $0x8] sm:$0xff]
    %v68 = vld [vmem:[%s2] sm:$0x1]
    %v69 = vld [vmem:[%s3] sm:$0x1]
    %vm70 = vcmask 261120
    %v71 = vsel %vm70, %v66, 0.0
    %72 = vadd.xlane.f32.xlu0 %v71
    %v73 = vpop.xlane.xlu0 %72
    %v74 = vsel %vm70, %v67, 0.0
    %75 = vadd.xlane.f32.xlu0 %v74
    %v76 = vpop.xlane.xlu0 %75
    %v77 = vrcp.pop 32.0
    %v78 = vmul.f32 %v73, %v77
    %v79 = vmul.f32 %v76, %v77
    %v80 = vsub.f32 %v66, %v78
    %v81 = vsub.f32 %v67, %v79
    %v82 = vmul.f32 %v80, %v80
    %v83 = vmul.f32 %v81, %v81
    %v84 = vsel %vm70, %v82, 0.0
    %85 = vadd.xlane.f32.xlu0 %v84
    %v86 = vpop.xlane.xlu0 %85
    %v87 = vsel %vm70, %v83, 0.0
    %88 = vadd.xlane.f32.xlu0 %v87
    %v89 = vpop.xlane.xlu0 %88
    %v90 = vmul.f32 %v86, %v77
    %v91 = vmul.f32 %v89, %v77
    %v92 = vadd.f32 %v90, 1e-12
    %v93 = vadd.f32 %v91, 1e-12
    %v94 = vrsqrt.pop %v92
    %v95 = vrsqrt.pop %v93
    %v96 = vmul.f32 %v80, %v94
    %v97 = vmul.f32 %v81, %v95
    %v99 = vlaneseq
    %v100 = vshrl.u32 %v99, 7
    %v101 = vsub.s32 0, %v100
    %v102 = vrot.slane %v68, %v101
    %v104 = vmul.f32 %v96, %v102
    %v105 = vmul.f32 %v97, %v102
    %v107 = vlaneseq
    %v108 = vshrl.u32 %v107, 7
    %v109 = vsub.s32 0, %v108
    %v110 = vrot.slane %v69, %v109
    %v112 = vadd.f32 %v104, %v110
    %v113 = vadd.f32 %v105, %v110
    %v114 = vld [vmem:[%s1] sm:$0x3]
    %v115 = vld [vmem:[%s4] sm:$0xff]
    %v116 = vld [vmem:[%s4 + $0x8] sm:$0xff]
    %v117 = vld [vmem:[%s4 + $0x10] sm:$0xff]
    %v118 = vld [vmem:[%s4 + $0x18] sm:$0xff]
    %v119 = vld [vmem:[%s5] sm:$0x1]
    %v121 = vlaneseq
    %v122 = vshrl.u32 %v121, 7
    %v123 = vsub.s32 0, %v122
    %v124 = vrot.slane %v119, %v123
    %v127 = vsel %vm70, %v112, 0
    %v130 = vsel %vm70, %v113, 0
    %132 = vmatprep.subr.mxu0 0.0
    %133 = vmatpush1.msra.mxu0 %v115
    %134 = vmatprep.subr.mxu0 0.0
    %135 = vmatpush1.msra.mxu0 %v116
    %136 = vmatprep.subr.mxu0 0.0
    %137 = vmatpush1.msra.mxu0 %v117
    %138 = vmatprep.subr.mxu0 0.0
    %139 = vmatpush1.msra.mxu0 %v118
    %140 = vmatprep.subr.mxu0 0.0
    %141 = vmatpush1.msra.mxu0 0.0
    %142 = vmatprep.subr.mxu0 0.0
    %143 = vmatpush1.msra.mxu0 0.0
    %144 = vmatprep.subr.mxu0 0.0
    %145 = vmatpush1.msra.mxu0 0.0
    %146 = vmatprep.subr.mxu0 0.0
    %147 = vmatpush1.msra.mxu0 0.0
    %148 = vmatprep.subr.mxu0 0.0
    %149 = vmatpush1.msra.mxu0 0.0
    %150 = vmatprep.subr.mxu0 0.0
    %151 = vmatpush1.msra.mxu0 0.0
    %152 = vmatprep.subr.mxu0 0.0
    %153 = vmatpush1.msra.mxu0 0.0
    %154 = vmatprep.subr.mxu0 0.0
    %155 = vmatpush1.msra.mxu0 0.0
    %156 = vmatprep.subr.mxu0 0.0
    %157 = vmatpush1.msra.mxu0 0.0
    %158 = vmatprep.subr.mxu0 0.0
    %159 = vmatpush1.msra.mxu0 0.0
    %160 = vmatprep.subr.mxu0 0.0
    %161 = vmatpush1.msra.mxu0 0.0
    %162 = vmatprep.subr.mxu0 0.0
    %163 = vmatpush1.msra.mxu0 0.0
    %164 = vmatprep.subr.mxu0 0.0
    %165 = vmatpush1.msra.mxu0 0.0
    %166 = vmatprep.subr.mxu0 0.0
    %167 = vmatpush1.msra.mxu0 0.0
    %168 = vmatprep.subr.mxu0 0.0
    %169 = vmatpush1.msra.mxu0 0.0
    %170 = vmatprep.subr.mxu0 0.0
    %171 = vmatpush1.msra.mxu0 0.0
    %172 = vmatprep.subr.mxu0 0.0
    %173 = vmatpush1.msra.mxu0 0.0
    %174 = vmatprep.subr.mxu0 0.0
    %175 = vmatpush1.msra.mxu0 0.0
    %176 = vmatprep.subr.mxu0 0.0
    %177 = vmatpush1.msra.mxu0 0.0
    %178 = vmatprep.subr.mxu0 0.0
    %179 = vmatpush1.msra.mxu0 0.0
    %180 = vmatprep.subr.mxu0 0.0
    %181 = vmatpush1.msra.mxu0 0.0
    %182 = vmatprep.subr.mxu0 0.0
    %183 = vmatpush1.msra.mxu0 0.0
    %184 = vmatprep.subr.mxu0 0.0
    %185 = vmatpush1.msra.mxu0 0.0
    %186 = vmatprep.subr.mxu0 0.0
    %187 = vmatpush1.msra.mxu0 0.0
    %188 = vmatprep.subr.mxu0 0.0
    %189 = vmatpush1.msra.mxu0 0.0
    %190 = vmatprep.subr.mxu0 0.0
    %191 = vmatpush1.msra.mxu0 0.0
    %192 = vmatprep.subr.mxu0 0.0
    %193 = vmatpush1.msra.mxu0 0.0
    %194 = vmatprep.subr.mxu0 0.0
    %195 = vmatpush1.msra.mxu0 0.0
    %196 = vmatprep.mubr.f32.mxu0 0.0
    %197 = vmatmul.mubr.f32.gmra.mrb[0].mxu0 %v127
    %v198 = vpop.f32.mrb[0].mxu0
    %v199 = vadd.f32 %v124, %v198
    %v200 = vpop.f32.mrb[0].mxu0
    %201 = vmatprep.mubr.f32.mxu0 0.0
    %202 = vmatmul.mubr.f32.gmra.mrb[0].mxu0 %v130
    %v203 = vpop.f32.mrb[0].mxu0
    %v204 = vadd.f32 %v124, %v203
    %v205 = vpop.f32.mrb[0].mxu0
    %206 = vdwg.mxu0
    %v207 = vlaneseq
    %v208 = vshrl.u32 %v207, 7
    %v209 = vsub.s32 0, %v208
    %v210 = vrot.slane %v114, %v209
    %212 = vrot.lane.b32.xlu0 %v199, 96
    %v213 = vpop.permute.xlu0 %212
    %vm214 = vcmask 130048
    %v215 = vsel %vm214, %v199, 0
    %v217 = vsel %vm214, %v213, 0
    %219 = vmatprep.subr.mxu0 0.0
    %220 = vmatpush1.xpose.msra.mxu0 %v217
    %221 = vmatprep.subr.mxu0 0.0
    %222 = vmatpush1.xpose.msra.mxu0 0.0
    %223 = vmatprep.subr.mxu0 0.0
    %224 = vmatpush1.xpose.msra.mxu0 0.0
    %225 = vmatprep.subr.mxu0 0.0
    %226 = vmatpush1.xpose.msra.mxu0 0.0
    %227 = vmatprep.subr.mxu0 0.0
    %228 = vmatpush1.xpose.msra.mxu0 0.0
    %229 = vmatprep.subr.mxu0 0.0
    %230 = vmatpush1.xpose.msra.mxu0 0.0
    %231 = vmatprep.subr.mxu0 0.0
    %232 = vmatpush1.xpose.msra.mxu0 0.0
    %233 = vmatprep.subr.mxu0 0.0
    %234 = vmatpush1.xpose.msra.mxu0 0.0
    %235 = vmatprep.subr.mxu0 0.0
    %236 = vmatpush1.xpose.msra.mxu0 0.0
    %237 = vmatprep.subr.mxu0 0.0
    %238 = vmatpush1.xpose.msra.mxu0 0.0
    %239 = vmatprep.subr.mxu0 0.0
    %240 = vmatpush1.xpose.msra.mxu0 0.0
    %241 = vmatprep.subr.mxu0 0.0
    %242 = vmatpush1.xpose.msra.mxu0 0.0
    %243 = vmatprep.subr.mxu0 0.0
    %244 = vmatpush1.xpose.msra.mxu0 0.0
    %245 = vmatprep.subr.mxu0 0.0
    %246 = vmatpush1.xpose.msra.mxu0 0.0
    %247 = vmatprep.subr.mxu0 0.0
    %248 = vmatpush1.xpose.msra.mxu0 0.0
    %249 = vmatprep.subr.mxu0 0.0
    %250 = vmatpush1.xpose.msra.mxu0 0.0
    %251 = vmatprep.subr.mxu0 0.0
    %252 = vmatpush1.xpose.msra.mxu0 0.0
    %253 = vmatprep.subr.mxu0 0.0
    %254 = vmatpush1.xpose.msra.mxu0 0.0
    %255 = vmatprep.subr.mxu0 0.0
    %256 = vmatpush1.xpose.msra.mxu0 0.0
    %257 = vmatprep.subr.mxu0 0.0
    %258 = vmatpush1.xpose.msra.mxu0 0.0
    %259 = vmatprep.subr.mxu0 0.0
    %260 = vmatpush1.xpose.msra.mxu0 0.0
    %261 = vmatprep.subr.mxu0 0.0
    %262 = vmatpush1.xpose.msra.mxu0 0.0
    %263 = vmatprep.subr.mxu0 0.0
    %264 = vmatpush1.xpose.msra.mxu0 0.0
    %265 = vmatprep.subr.mxu0 0.0
    %266 = vmatpush1.xpose.msra.mxu0 0.0
    %267 = vmatprep.subr.mxu0 0.0
    %268 = vmatpush1.xpose.msra.mxu0 0.0
    %269 = vmatprep.subr.mxu0 0.0
    %270 = vmatpush1.xpose.msra.mxu0 0.0
    %271 = vmatprep.subr.mxu0 0.0
    %272 = vmatpush1.xpose.msra.mxu0 0.0
    %273 = vmatprep.subr.mxu0 0.0
    %274 = vmatpush1.xpose.msra.mxu0 0.0
    %275 = vmatprep.subr.mxu0 0.0
    %276 = vmatpush1.xpose.msra.mxu0 0.0
    %277 = vmatprep.subr.mxu0 0.0
    %278 = vmatpush1.xpose.msra.mxu0 0.0
    %279 = vmatprep.subr.mxu0 0.0
    %280 = vmatpush1.xpose.msra.mxu0 0.0
    %281 = vmatprep.subr.mxu0 0.0
    %282 = vmatpush1.xpose.msra.mxu0 0.0
    %283 = vmatprep.mubr.f32.mxu0 0.0
    %284 = vmatmul.mubr.f32.gmra.mrb[0].mxu0 %v215
    %v285 = vpop.f32.mrb[0].mxu0
    %v286 = vadd.f32 %v210, %v285
    %v287 = vpop.f32.mrb[0].mxu0
    %288 = vdwg.mxu0
    %vm289 = vcmask 64512
    %v290 = vsel %vm289, %v286, -inf
    %291 = vmax.xlane.f32.xlu0 %v290
    %v292 = vpop.xlane.xlu0 %291
    %v293 = vsub.f32 %v286, %v292
    %v294 = vmul.f32 %v293, 1.442695
    %v295 = vpow.pop %v294
    %v296 = vsel %vm289, %v295, 0.0
    %297 = vadd.xlane.f32.xlu0 %v296
    %v298 = vpop.xlane.xlu0 %297
    %v299 = vrcp.pop %v298
    %v300 = vmul.f32 %v295, %v299
    %301 = vrot.lane.b32.xlu0 %v199, 64
    %v302 = vpop.permute.xlu0 %301
    %v305 = vsel %vm289, %v300, 0
    %307 = vmatprep.subr.mxu0 0.0
    %308 = vmatpush1.msra.mxu0 %v302
    %309 = vmatprep.subr.mxu0 0.0
    %310 = vmatpush1.msra.mxu0 0.0
    %311 = vmatprep.subr.mxu0 0.0
    %312 = vmatpush1.msra.mxu0 0.0
    %313 = vmatprep.subr.mxu0 0.0
    %314 = vmatpush1.msra.mxu0 0.0
    %315 = vmatprep.subr.mxu0 0.0
    %316 = vmatpush1.msra.mxu0 0.0
    %317 = vmatprep.subr.mxu0 0.0
    %318 = vmatpush1.msra.mxu0 0.0
    %319 = vmatprep.subr.mxu0 0.0
    %320 = vmatpush1.msra.mxu0 0.0
    %321 = vmatprep.subr.mxu0 0.0
    %322 = vmatpush1.msra.mxu0 0.0
    %323 = vmatprep.subr.mxu0 0.0
    %324 = vmatpush1.msra.mxu0 0.0
    %325 = vmatprep.subr.mxu0 0.0
    %326 = vmatpush1.msra.mxu0 0.0
    %327 = vmatprep.subr.mxu0 0.0
    %328 = vmatpush1.msra.mxu0 0.0
    %329 = vmatprep.subr.mxu0 0.0
    %330 = vmatpush1.msra.mxu0 0.0
    %331 = vmatprep.subr.mxu0 0.0
    %332 = vmatpush1.msra.mxu0 0.0
    %333 = vmatprep.subr.mxu0 0.0
    %334 = vmatpush1.msra.mxu0 0.0
    %335 = vmatprep.subr.mxu0 0.0
    %336 = vmatpush1.msra.mxu0 0.0
    %337 = vmatprep.subr.mxu0 0.0
    %338 = vmatpush1.msra.mxu0 0.0
    %339 = vmatprep.subr.mxu0 0.0
    %340 = vmatpush1.msra.mxu0 0.0
    %341 = vmatprep.subr.mxu0 0.0
    %342 = vmatpush1.msra.mxu0 0.0
    %343 = vmatprep.subr.mxu0 0.0
    %344 = vmatpush1.msra.mxu0 0.0
    %345 = vmatprep.subr.mxu0 0.0
    %346 = vmatpush1.msra.mxu0 0.0
    %347 = vmatprep.subr.mxu0 0.0
    %348 = vmatpush1.msra.mxu0 0.0
    %349 = vmatprep.subr.mxu0 0.0
    %350 = vmatpush1.msra.mxu0 0.0
    %351 = vmatprep.subr.mxu0 0.0
    %352 = vmatpush1.msra.mxu0 0.0
    %353 = vmatprep.subr.mxu0 0.0
    %354 = vmatpush1.msra.mxu0 0.0
    %355 = vmatprep.subr.mxu0 0.0
    %356 = vmatpush1.msra.mxu0 0.0
    %357 = vmatprep.subr.mxu0 0.0
    %358 = vmatpush1.msra.mxu0 0.0
    %359 = vmatprep.subr.mxu0 0.0
    %360 = vmatpush1.msra.mxu0 0.0
    %361 = vmatprep.subr.mxu0 0.0
    %362 = vmatpush1.msra.mxu0 0.0
    %363 = vmatprep.subr.mxu0 0.0
    %364 = vmatpush1.msra.mxu0 0.0
    %365 = vmatprep.subr.mxu0 0.0
    %366 = vmatpush1.msra.mxu0 0.0
    %367 = vmatprep.subr.mxu0 0.0
    %368 = vmatpush1.msra.mxu0 0.0
    %369 = vmatprep.subr.mxu0 0.0
    %370 = vmatpush1.msra.mxu0 0.0
    %371 = vmatprep.mubr.f32.mxu0 0.0
    %372 = vmatmul.mubr.f32.gmra.mrb[0].mxu0 %v305
    %v373 = vpop.f32.mrb[0].mxu0
    %v374 = vadd.f32 0.0, %v373
    %v375 = vpop.f32.mrb[0].mxu0
    %376 = vdwg.mxu0
    %377 = vrot.lane.b32.xlu0 %v199, 112
    %v378 = vpop.permute.xlu0 %377
    %379 = vrot.lane.b32.xlu0 %v199, 80
    %v380 = vpop.permute.xlu0 %379
    %v381 = vsel %vm214, %v378, 0
    %v383 = vsel %vm214, %v380, 0
    %385 = vmatprep.subr.mxu0 0.0
    %386 = vmatpush1.xpose.msra.mxu0 %v383
    %387 = vmatprep.subr.mxu0 0.0
    %388 = vmatpush1.xpose.msra.mxu0 0.0
    %389 = vmatprep.subr.mxu0 0.0
    %390 = vmatpush1.xpose.msra.mxu0 0.0
    %391 = vmatprep.subr.mxu0 0.0
    %392 = vmatpush1.xpose.msra.mxu0 0.0
    %393 = vmatprep.subr.mxu0 0.0
    %394 = vmatpush1.xpose.msra.mxu0 0.0
    %395 = vmatprep.subr.mxu0 0.0
    %396 = vmatpush1.xpose.msra.mxu0 0.0
    %397 = vmatprep.subr.mxu0 0.0
    %398 = vmatpush1.xpose.msra.mxu0 0.0
    %399 = vmatprep.subr.mxu0 0.0
    %400 = vmatpush1.xpose.msra.mxu0 0.0
    %401 = vmatprep.subr.mxu0 0.0
    %402 = vmatpush1.xpose.msra.mxu0 0.0
    %403 = vmatprep.subr.mxu0 0.0
    %404 = vmatpush1.xpose.msra.mxu0 0.0
    %405 = vmatprep.subr.mxu0 0.0
    %406 = vmatpush1.xpose.msra.mxu0 0.0
    %407 = vmatprep.subr.mxu0 0.0
    %408 = vmatpush1.xpose.msra.mxu0 0.0
    %409 = vmatprep.subr.mxu0 0.0
    %410 = vmatpush1.xpose.msra.mxu0 0.0
    %411 = vmatprep.subr.mxu0 0.0
    %412 = vmatpush1.xpose.msra.mxu0 0.0
    %413 = vmatprep.subr.mxu0 0.0
    %414 = vmatpush1.xpose.msra.mxu0 0.0
    %415 = vmatprep.subr.mxu0 0.0
    %416 = vmatpush1.xpose.msra.mxu0 0.0
    %417 = vmatprep.subr.mxu0 0.0
    %418 = vmatpush1.xpose.msra.mxu0 0.0
    %419 = vmatprep.subr.mxu0 0.0
    %420 = vmatpush1.xpose.msra.mxu0 0.0
    %421 = vmatprep.subr.mxu0 0.0
    %422 = vmatpush1.xpose.msra.mxu0 0.0
    %423 = vmatprep.subr.mxu0 0.0
    %424 = vmatpush1.xpose.msra.mxu0 0.0
    %425 = vmatprep.subr.mxu0 0.0
    %426 = vmatpush1.xpose.msra.mxu0 0.0
    %427 = vmatprep.subr.mxu0 0.0
    %428 = vmatpush1.xpose.msra.mxu0 0.0
    %429 = vmatprep.subr.mxu0 0.0
    %430 = vmatpush1.xpose.msra.mxu0 0.0
    %431 = vmatprep.subr.mxu0 0.0
    %432 = vmatpush1.xpose.msra.mxu0 0.0
    %433 = vmatprep.subr.mxu0 0.0
    %434 = vmatpush1.xpose.msra.mxu0 0.0
    %435 = vmatprep.subr.mxu0 0.0
    %436 = vmatpush1.xpose.msra.mxu0 0.0
    %437 = vmatprep.subr.mxu0 0.0
    %438 = vmatpush1.xpose.msra.mxu0 0.0
    %439 = vmatprep.subr.mxu0 0.0
    %440 = vmatpush1.xpose.msra.mxu0 0.0
    %441 = vmatprep.subr.mxu0 0.0
    %442 = vmatpush1.xpose.msra.mxu0 0.0
    %443 = vmatprep.subr.mxu0 0.0
    %444 = vmatpush1.xpose.msra.mxu0 0.0
    %445 = vmatprep.subr.mxu0 0.0
    %446 = vmatpush1.xpose.msra.mxu0 0.0
    %447 = vmatprep.subr.mxu0 0.0
    %448 = vmatpush1.xpose.msra.mxu0 0.0
    %449 = vmatprep.mubr.f32.mxu0 0.0
    %450 = vmatmul.mubr.f32.gmra.mrb[0].mxu0 %v381
    %v451 = vpop.f32.mrb[0].mxu0
    %v452 = vadd.f32 %v210, %v451
    %v453 = vpop.f32.mrb[0].mxu0
    %454 = vdwg.mxu0
    %v455 = vsel %vm289, %v452, -inf
    %456 = vmax.xlane.f32.xlu0 %v455
    %v457 = vpop.xlane.xlu0 %456
    %v458 = vsub.f32 %v452, %v457
    %v459 = vmul.f32 %v458, 1.442695
    %v460 = vpow.pop %v459
    %v461 = vsel %vm289, %v460, 0.0
    %462 = vadd.xlane.f32.xlu0 %v461
    %v463 = vpop.xlane.xlu0 %462
    %v464 = vrcp.pop %v463
    %v465 = vmul.f32 %v460, %v464
    %466 = vrot.lane.b32.xlu0 %v199, 48
    %v467 = vpop.permute.xlu0 %466
    %v470 = vsel %vm289, %v465, 0
    %472 = vmatprep.subr.mxu0 0.0
    %473 = vmatpush1.msra.mxu0 %v467
    %474 = vmatprep.subr.mxu0 0.0
    %475 = vmatpush1.msra.mxu0 0.0
    %476 = vmatprep.subr.mxu0 0.0
    %477 = vmatpush1.msra.mxu0 0.0
    %478 = vmatprep.subr.mxu0 0.0
    %479 = vmatpush1.msra.mxu0 0.0
    %480 = vmatprep.subr.mxu0 0.0
    %481 = vmatpush1.msra.mxu0 0.0
    %482 = vmatprep.subr.mxu0 0.0
    %483 = vmatpush1.msra.mxu0 0.0
    %484 = vmatprep.subr.mxu0 0.0
    %485 = vmatpush1.msra.mxu0 0.0
    %486 = vmatprep.subr.mxu0 0.0
    %487 = vmatpush1.msra.mxu0 0.0
    %488 = vmatprep.subr.mxu0 0.0
    %489 = vmatpush1.msra.mxu0 0.0
    %490 = vmatprep.subr.mxu0 0.0
    %491 = vmatpush1.msra.mxu0 0.0
    %492 = vmatprep.subr.mxu0 0.0
    %493 = vmatpush1.msra.mxu0 0.0
    %494 = vmatprep.subr.mxu0 0.0
    %495 = vmatpush1.msra.mxu0 0.0
    %496 = vmatprep.subr.mxu0 0.0
    %497 = vmatpush1.msra.mxu0 0.0
    %498 = vmatprep.subr.mxu0 0.0
    %499 = vmatpush1.msra.mxu0 0.0
    %500 = vmatprep.subr.mxu0 0.0
    %501 = vmatpush1.msra.mxu0 0.0
    %502 = vmatprep.subr.mxu0 0.0
    %503 = vmatpush1.msra.mxu0 0.0
    %504 = vmatprep.subr.mxu0 0.0
    %505 = vmatpush1.msra.mxu0 0.0
    %506 = vmatprep.subr.mxu0 0.0
    %507 = vmatpush1.msra.mxu0 0.0
    %508 = vmatprep.subr.mxu0 0.0
    %509 = vmatpush1.msra.mxu0 0.0
    %510 = vmatprep.subr.mxu0 0.0
    %511 = vmatpush1.msra.mxu0 0.0
    %512 = vmatprep.subr.mxu0 0.0
    %513 = vmatpush1.msra.mxu0 0.0
    %514 = vmatprep.subr.mxu0 0.0
    %515 = vmatpush1.msra.mxu0 0.0
    %516 = vmatprep.subr.mxu0 0.0
    %517 = vmatpush1.msra.mxu0 0.0
    %518 = vmatprep.subr.mxu0 0.0
    %519 = vmatpush1.msra.mxu0 0.0
    %520 = vmatprep.subr.mxu0 0.0
    %521 = vmatpush1.msra.mxu0 0.0
    %522 = vmatprep.subr.mxu0 0.0
    %523 = vmatpush1.msra.mxu0 0.0
    %524 = vmatprep.subr.mxu0 0.0
    %525 = vmatpush1.msra.mxu0 0.0
    %526 = vmatprep.subr.mxu0 0.0
    %527 = vmatpush1.msra.mxu0 0.0
    %528 = vmatprep.subr.mxu0 0.0
    %529 = vmatpush1.msra.mxu0 0.0
    %530 = vmatprep.subr.mxu0 0.0
    %531 = vmatpush1.msra.mxu0 0.0
    %532 = vmatprep.subr.mxu0 0.0
    %533 = vmatpush1.msra.mxu0 0.0
    %534 = vmatprep.subr.mxu0 0.0
    %535 = vmatpush1.msra.mxu0 0.0
    %536 = vmatprep.mubr.f32.mxu0 0.0
    %537 = vmatmul.mubr.f32.gmra.mrb[0].mxu0 %v470
    %v538 = vpop.f32.mrb[0].mxu0
    %v539 = vadd.f32 0.0, %v538
    %v540 = vpop.f32.mrb[0].mxu0
    %541 = vdwg.mxu0
    %543 = vrot.lane.b32.xlu0 %v539, 16
    %v544 = vpop.permute.xlu0 %543
    %v546 = vsel %vm214, %v374, %v544
    %v547 = vlaneseq
    %v548 = vshrl.u32 %v547, 7
    %v549 = vsub.s32 1, %v548
    %v550 = vrot.slane %v114, %v549
    %552 = vrot.lane.b32.xlu0 %v204, 96
    %v553 = vpop.permute.xlu0 %552
    %v554 = vsel %vm214, %v204, 0
    %v556 = vsel %vm214, %v553, 0
    %558 = vmatprep.subr.mxu0 0.0
    %559 = vmatpush1.xpose.msra.mxu0 %v556
    %560 = vmatprep.subr.mxu0 0.0
    %561 = vmatpush1.xpose.msra.mxu0 0.0
    %562 = vmatprep.subr.mxu0 0.0
    %563 = vmatpush1.xpose.msra.mxu0 0.0
    %564 = vmatprep.subr.mxu0 0.0
    %565 = vmatpush1.xpose.msra.mxu0 0.0
    %566 = vmatprep.subr.mxu0 0.0
    %567 = vmatpush1.xpose.msra.mxu0 0.0
    %568 = vmatprep.subr.mxu0 0.0
    %569 = vmatpush1.xpose.msra.mxu0 0.0
    %570 = vmatprep.subr.mxu0 0.0
    %571 = vmatpush1.xpose.msra.mxu0 0.0
    %572 = vmatprep.subr.mxu0 0.0
    %573 = vmatpush1.xpose.msra.mxu0 0.0
    %574 = vmatprep.subr.mxu0 0.0
    %575 = vmatpush1.xpose.msra.mxu0 0.0
    %576 = vmatprep.subr.mxu0 0.0
    %577 = vmatpush1.xpose.msra.mxu0 0.0
    %578 = vmatprep.subr.mxu0 0.0
    %579 = vmatpush1.xpose.msra.mxu0 0.0
    %580 = vmatprep.subr.mxu0 0.0
    %581 = vmatpush1.xpose.msra.mxu0 0.0
    %582 = vmatprep.subr.mxu0 0.0
    %583 = vmatpush1.xpose.msra.mxu0 0.0
    %584 = vmatprep.subr.mxu0 0.0
    %585 = vmatpush1.xpose.msra.mxu0 0.0
    %586 = vmatprep.subr.mxu0 0.0
    %587 = vmatpush1.xpose.msra.mxu0 0.0
    %588 = vmatprep.subr.mxu0 0.0
    %589 = vmatpush1.xpose.msra.mxu0 0.0
    %590 = vmatprep.subr.mxu0 0.0
    %591 = vmatpush1.xpose.msra.mxu0 0.0
    %592 = vmatprep.subr.mxu0 0.0
    %593 = vmatpush1.xpose.msra.mxu0 0.0
    %594 = vmatprep.subr.mxu0 0.0
    %595 = vmatpush1.xpose.msra.mxu0 0.0
    %596 = vmatprep.subr.mxu0 0.0
    %597 = vmatpush1.xpose.msra.mxu0 0.0
    %598 = vmatprep.subr.mxu0 0.0
    %599 = vmatpush1.xpose.msra.mxu0 0.0
    %600 = vmatprep.subr.mxu0 0.0
    %601 = vmatpush1.xpose.msra.mxu0 0.0
    %602 = vmatprep.subr.mxu0 0.0
    %603 = vmatpush1.xpose.msra.mxu0 0.0
    %604 = vmatprep.subr.mxu0 0.0
    %605 = vmatpush1.xpose.msra.mxu0 0.0
    %606 = vmatprep.subr.mxu0 0.0
    %607 = vmatpush1.xpose.msra.mxu0 0.0
    %608 = vmatprep.subr.mxu0 0.0
    %609 = vmatpush1.xpose.msra.mxu0 0.0
    %610 = vmatprep.subr.mxu0 0.0
    %611 = vmatpush1.xpose.msra.mxu0 0.0
    %612 = vmatprep.subr.mxu0 0.0
    %613 = vmatpush1.xpose.msra.mxu0 0.0
    %614 = vmatprep.subr.mxu0 0.0
    %615 = vmatpush1.xpose.msra.mxu0 0.0
    %616 = vmatprep.subr.mxu0 0.0
    %617 = vmatpush1.xpose.msra.mxu0 0.0
    %618 = vmatprep.subr.mxu0 0.0
    %619 = vmatpush1.xpose.msra.mxu0 0.0
    %620 = vmatprep.subr.mxu0 0.0
    %621 = vmatpush1.xpose.msra.mxu0 0.0
    %622 = vmatprep.mubr.f32.mxu0 0.0
    %623 = vmatmul.mubr.f32.gmra.mrb[0].mxu0 %v554
    %v624 = vpop.f32.mrb[0].mxu0
    %v625 = vadd.f32 %v550, %v624
    %v626 = vpop.f32.mrb[0].mxu0
    %627 = vdwg.mxu0
    %v628 = vsel %vm289, %v625, -inf
    %629 = vmax.xlane.f32.xlu0 %v628
    %v630 = vpop.xlane.xlu0 %629
    %v631 = vsub.f32 %v625, %v630
    %v632 = vmul.f32 %v631, 1.442695
    %v633 = vpow.pop %v632
    %v634 = vsel %vm289, %v633, 0.0
    %635 = vadd.xlane.f32.xlu0 %v634
    %v636 = vpop.xlane.xlu0 %635
    %v637 = vrcp.pop %v636
    %v638 = vmul.f32 %v633, %v637
    %639 = vrot.lane.b32.xlu0 %v204, 64
    %v640 = vpop.permute.xlu0 %639
    %v643 = vsel %vm289, %v638, 0
    %645 = vmatprep.subr.mxu0 0.0
    %646 = vmatpush1.msra.mxu0 %v640
    %647 = vmatprep.subr.mxu0 0.0
    %648 = vmatpush1.msra.mxu0 0.0
    %649 = vmatprep.subr.mxu0 0.0
    %650 = vmatpush1.msra.mxu0 0.0
    %651 = vmatprep.subr.mxu0 0.0
    %652 = vmatpush1.msra.mxu0 0.0
    %653 = vmatprep.subr.mxu0 0.0
    %654 = vmatpush1.msra.mxu0 0.0
    %655 = vmatprep.subr.mxu0 0.0
    %656 = vmatpush1.msra.mxu0 0.0
    %657 = vmatprep.subr.mxu0 0.0
    %658 = vmatpush1.msra.mxu0 0.0
    %659 = vmatprep.subr.mxu0 0.0
    %660 = vmatpush1.msra.mxu0 0.0
    %661 = vmatprep.subr.mxu0 0.0
    %662 = vmatpush1.msra.mxu0 0.0
    %663 = vmatprep.subr.mxu0 0.0
    %664 = vmatpush1.msra.mxu0 0.0
    %665 = vmatprep.subr.mxu0 0.0
    %666 = vmatpush1.msra.mxu0 0.0
    %667 = vmatprep.subr.mxu0 0.0
    %668 = vmatpush1.msra.mxu0 0.0
    %669 = vmatprep.subr.mxu0 0.0
    %670 = vmatpush1.msra.mxu0 0.0
    %671 = vmatprep.subr.mxu0 0.0
    %672 = vmatpush1.msra.mxu0 0.0
    %673 = vmatprep.subr.mxu0 0.0
    %674 = vmatpush1.msra.mxu0 0.0
    %675 = vmatprep.subr.mxu0 0.0
    %676 = vmatpush1.msra.mxu0 0.0
    %677 = vmatprep.subr.mxu0 0.0
    %678 = vmatpush1.msra.mxu0 0.0
    %679 = vmatprep.subr.mxu0 0.0
    %680 = vmatpush1.msra.mxu0 0.0
    %681 = vmatprep.subr.mxu0 0.0
    %682 = vmatpush1.msra.mxu0 0.0
    %683 = vmatprep.subr.mxu0 0.0
    %684 = vmatpush1.msra.mxu0 0.0
    %685 = vmatprep.subr.mxu0 0.0
    %686 = vmatpush1.msra.mxu0 0.0
    %687 = vmatprep.subr.mxu0 0.0
    %688 = vmatpush1.msra.mxu0 0.0
    %689 = vmatprep.subr.mxu0 0.0
    %690 = vmatpush1.msra.mxu0 0.0
    %691 = vmatprep.subr.mxu0 0.0
    %692 = vmatpush1.msra.mxu0 0.0
    %693 = vmatprep.subr.mxu0 0.0
    %694 = vmatpush1.msra.mxu0 0.0
    %695 = vmatprep.subr.mxu0 0.0
    %696 = vmatpush1.msra.mxu0 0.0
    %697 = vmatprep.subr.mxu0 0.0
    %698 = vmatpush1.msra.mxu0 0.0
    %699 = vmatprep.subr.mxu0 0.0
    %700 = vmatpush1.msra.mxu0 0.0
    %701 = vmatprep.subr.mxu0 0.0
    %702 = vmatpush1.msra.mxu0 0.0
    %703 = vmatprep.subr.mxu0 0.0
    %704 = vmatpush1.msra.mxu0 0.0
    %705 = vmatprep.subr.mxu0 0.0
    %706 = vmatpush1.msra.mxu0 0.0
    %707 = vmatprep.subr.mxu0 0.0
    %708 = vmatpush1.msra.mxu0 0.0
    %709 = vmatprep.mubr.f32.mxu0 0.0
    %710 = vmatmul.mubr.f32.gmra.mrb[0].mxu0 %v643
    %v711 = vpop.f32.mrb[0].mxu0
    %v712 = vadd.f32 0.0, %v711
    %v713 = vpop.f32.mrb[0].mxu0
    %714 = vdwg.mxu0
    %715 = vrot.lane.b32.xlu0 %v204, 112
    %v716 = vpop.permute.xlu0 %715
    %717 = vrot.lane.b32.xlu0 %v204, 80
    %v718 = vpop.permute.xlu0 %717
    %v719 = vsel %vm214, %v716, 0
    %v721 = vsel %vm214, %v718, 0
    %723 = vmatprep.subr.mxu0 0.0
    %724 = vmatpush1.xpose.msra.mxu0 %v721
    %725 = vmatprep.subr.mxu0 0.0
    %726 = vmatpush1.xpose.msra.mxu0 0.0
    %727 = vmatprep.subr.mxu0 0.0
    %728 = vmatpush1.xpose.msra.mxu0 0.0
    %729 = vmatprep.subr.mxu0 0.0
    %730 = vmatpush1.xpose.msra.mxu0 0.0
    %731 = vmatprep.subr.mxu0 0.0
    %732 = vmatpush1.xpose.msra.mxu0 0.0
    %733 = vmatprep.subr.mxu0 0.0
    %734 = vmatpush1.xpose.msra.mxu0 0.0
    %735 = vmatprep.subr.mxu0 0.0
    %736 = vmatpush1.xpose.msra.mxu0 0.0
    %737 = vmatprep.subr.mxu0 0.0
    %738 = vmatpush1.xpose.msra.mxu0 0.0
    %739 = vmatprep.subr.mxu0 0.0
    %740 = vmatpush1.xpose.msra.mxu0 0.0
    %741 = vmatprep.subr.mxu0 0.0
    %742 = vmatpush1.xpose.msra.mxu0 0.0
    %743 = vmatprep.subr.mxu0 0.0
    %744 = vmatpush1.xpose.msra.mxu0 0.0
    %745 = vmatprep.subr.mxu0 0.0
    %746 = vmatpush1.xpose.msra.mxu0 0.0
    %747 = vmatprep.subr.mxu0 0.0
    %748 = vmatpush1.xpose.msra.mxu0 0.0
    %749 = vmatprep.subr.mxu0 0.0
    %750 = vmatpush1.xpose.msra.mxu0 0.0
    %751 = vmatprep.subr.mxu0 0.0
    %752 = vmatpush1.xpose.msra.mxu0 0.0
    %753 = vmatprep.subr.mxu0 0.0
    %754 = vmatpush1.xpose.msra.mxu0 0.0
    %755 = vmatprep.subr.mxu0 0.0
    %756 = vmatpush1.xpose.msra.mxu0 0.0
    %757 = vmatprep.subr.mxu0 0.0
    %758 = vmatpush1.xpose.msra.mxu0 0.0
    %759 = vmatprep.subr.mxu0 0.0
    %760 = vmatpush1.xpose.msra.mxu0 0.0
    %761 = vmatprep.subr.mxu0 0.0
    %762 = vmatpush1.xpose.msra.mxu0 0.0
    %763 = vmatprep.subr.mxu0 0.0
    %764 = vmatpush1.xpose.msra.mxu0 0.0
    %765 = vmatprep.subr.mxu0 0.0
    %766 = vmatpush1.xpose.msra.mxu0 0.0
    %767 = vmatprep.subr.mxu0 0.0
    %768 = vmatpush1.xpose.msra.mxu0 0.0
    %769 = vmatprep.subr.mxu0 0.0
    %770 = vmatpush1.xpose.msra.mxu0 0.0
    %771 = vmatprep.subr.mxu0 0.0
    %772 = vmatpush1.xpose.msra.mxu0 0.0
    %773 = vmatprep.subr.mxu0 0.0
    %774 = vmatpush1.xpose.msra.mxu0 0.0
    %775 = vmatprep.subr.mxu0 0.0
    %776 = vmatpush1.xpose.msra.mxu0 0.0
    %777 = vmatprep.subr.mxu0 0.0
    %778 = vmatpush1.xpose.msra.mxu0 0.0
    %779 = vmatprep.subr.mxu0 0.0
    %780 = vmatpush1.xpose.msra.mxu0 0.0
    %781 = vmatprep.subr.mxu0 0.0
    %782 = vmatpush1.xpose.msra.mxu0 0.0
    %783 = vmatprep.subr.mxu0 0.0
    %784 = vmatpush1.xpose.msra.mxu0 0.0
    %785 = vmatprep.subr.mxu0 0.0
    %786 = vmatpush1.xpose.msra.mxu0 0.0
    %787 = vmatprep.mubr.f32.mxu0 0.0
    %788 = vmatmul.mubr.f32.gmra.mrb[0].mxu0 %v719
    %v789 = vpop.f32.mrb[0].mxu0
    %v790 = vadd.f32 %v550, %v789
    %v791 = vpop.f32.mrb[0].mxu0
    %792 = vdwg.mxu0
    %v793 = vsel %vm289, %v790, -inf
    %794 = vmax.xlane.f32.xlu0 %v793
    %v795 = vpop.xlane.xlu0 %794
    %v796 = vsub.f32 %v790, %v795
    %v797 = vmul.f32 %v796, 1.442695
    %v798 = vpow.pop %v797
    %v799 = vsel %vm289, %v798, 0.0
    %800 = vadd.xlane.f32.xlu0 %v799
    %v801 = vpop.xlane.xlu0 %800
    %v802 = vrcp.pop %v801
    %v803 = vmul.f32 %v798, %v802
    %804 = vrot.lane.b32.xlu0 %v204, 48
    %v805 = vpop.permute.xlu0 %804
    %v808 = vsel %vm289, %v803, 0
    %810 = vmatprep.subr.mxu0 0.0
    %811 = vmatpush1.msra.mxu0 %v805
    %812 = vmatprep.subr.mxu0 0.0
    %813 = vmatpush1.msra.mxu0 0.0
    %814 = vmatprep.subr.mxu0 0.0
    %815 = vmatpush1.msra.mxu0 0.0
    %816 = vmatprep.subr.mxu0 0.0
    %817 = vmatpush1.msra.mxu0 0.0
    %818 = vmatprep.subr.mxu0 0.0
    %819 = vmatpush1.msra.mxu0 0.0
    %820 = vmatprep.subr.mxu0 0.0
    %821 = vmatpush1.msra.mxu0 0.0
    %822 = vmatprep.subr.mxu0 0.0
    %823 = vmatpush1.msra.mxu0 0.0
    %824 = vmatprep.subr.mxu0 0.0
    %825 = vmatpush1.msra.mxu0 0.0
    %826 = vmatprep.subr.mxu0 0.0
    %827 = vmatpush1.msra.mxu0 0.0
    %828 = vmatprep.subr.mxu0 0.0
    %829 = vmatpush1.msra.mxu0 0.0
    %830 = vmatprep.subr.mxu0 0.0
    %831 = vmatpush1.msra.mxu0 0.0
    %832 = vmatprep.subr.mxu0 0.0
    %833 = vmatpush1.msra.mxu0 0.0
    %834 = vmatprep.subr.mxu0 0.0
    %835 = vmatpush1.msra.mxu0 0.0
    %836 = vmatprep.subr.mxu0 0.0
    %837 = vmatpush1.msra.mxu0 0.0
    %838 = vmatprep.subr.mxu0 0.0
    %839 = vmatpush1.msra.mxu0 0.0
    %840 = vmatprep.subr.mxu0 0.0
    %841 = vmatpush1.msra.mxu0 0.0
    %842 = vmatprep.subr.mxu0 0.0
    %843 = vmatpush1.msra.mxu0 0.0
    %844 = vmatprep.subr.mxu0 0.0
    %845 = vmatpush1.msra.mxu0 0.0
    %846 = vmatprep.subr.mxu0 0.0
    %847 = vmatpush1.msra.mxu0 0.0
    %848 = vmatprep.subr.mxu0 0.0
    %849 = vmatpush1.msra.mxu0 0.0
    %850 = vmatprep.subr.mxu0 0.0
    %851 = vmatpush1.msra.mxu0 0.0
    %852 = vmatprep.subr.mxu0 0.0
    %853 = vmatpush1.msra.mxu0 0.0
    %854 = vmatprep.subr.mxu0 0.0
    %855 = vmatpush1.msra.mxu0 0.0
    %856 = vmatprep.subr.mxu0 0.0
    %857 = vmatpush1.msra.mxu0 0.0
    %858 = vmatprep.subr.mxu0 0.0
    %859 = vmatpush1.msra.mxu0 0.0
    %860 = vmatprep.subr.mxu0 0.0
    %861 = vmatpush1.msra.mxu0 0.0
    %862 = vmatprep.subr.mxu0 0.0
    %863 = vmatpush1.msra.mxu0 0.0
    %864 = vmatprep.subr.mxu0 0.0
    %865 = vmatpush1.msra.mxu0 0.0
    %866 = vmatprep.subr.mxu0 0.0
    %867 = vmatpush1.msra.mxu0 0.0
    %868 = vmatprep.subr.mxu0 0.0
    %869 = vmatpush1.msra.mxu0 0.0
    %870 = vmatprep.subr.mxu0 0.0
    %871 = vmatpush1.msra.mxu0 0.0
    %872 = vmatprep.subr.mxu0 0.0
    %873 = vmatpush1.msra.mxu0 0.0
    %874 = vmatprep.mubr.f32.mxu0 0.0
    %875 = vmatmul.mubr.f32.gmra.mrb[0].mxu0 %v808
    %v876 = vpop.f32.mrb[0].mxu0
    %v877 = vadd.f32 0.0, %v876
    %v878 = vpop.f32.mrb[0].mxu0
    %879 = vdwg.mxu0
    %881 = vrot.lane.b32.xlu0 %v877, 16
    %v882 = vpop.permute.xlu0 %881
    %v884 = vsel %vm214, %v712, %v882
    %v885 = vld [vmem:[%s6] sm:$0xff]
    %v886 = vld [vmem:[%s6 + $0x8] sm:$0xff]
    %v887 = vld [vmem:[%s6 + $0x10] sm:$0xff]
    %v888 = vld [vmem:[%s6 + $0x18] sm:$0xff]
    %v889 = vld [vmem:[%s7] sm:$0x1]
    %v891 = vlaneseq
    %v892 = vshrl.u32 %v891, 7
    %v893 = vsub.s32 0, %v892
    %v894 = vrot.slane %v889, %v893
    %v897 = vsel %vm70, %v546, 0
    %v900 = vsel %vm70, %v884, 0
    %902 = vmatprep.subr.mxu0 0.0
    %903 = vmatpush1.msra.mxu0 %v885
    %904 = vmatprep.subr.mxu0 0.0
    %905 = vmatpush1.msra.mxu0 %v886
    %906 = vmatprep.subr.mxu0 0.0
    %907 = vmatpush1.msra.mxu0 %v887
    %908 = vmatprep.subr.mxu0 0.0
    %909 = vmatpush1.msra.mxu0 %v888
    %910 = vmatprep.subr.mxu0 0.0
    %911 = vmatpush1.msra.mxu0 0.0
    %912 = vmatprep.subr.mxu0 0.0
    %913 = vmatpush1.msra.mxu0 0.0
    %914 = vmatprep.subr.mxu0 0.0
    %915 = vmatpush1.msra.mxu0 0.0
    %916 = vmatprep.subr.mxu0 0.0
    %917 = vmatpush1.msra.mxu0 0.0
    %918 = vmatprep.subr.mxu0 0.0
    %919 = vmatpush1.msra.mxu0 0.0
    %920 = vmatprep.subr.mxu0 0.0
    %921 = vmatpush1.msra.mxu0 0.0
    %922 = vmatprep.subr.mxu0 0.0
    %923 = vmatpush1.msra.mxu0 0.0
    %924 = vmatprep.subr.mxu0 0.0
    %925 = vmatpush1.msra.mxu0 0.0
    %926 = vmatprep.subr.mxu0 0.0
    %927 = vmatpush1.msra.mxu0 0.0
    %928 = vmatprep.subr.mxu0 0.0
    %929 = vmatpush1.msra.mxu0 0.0
    %930 = vmatprep.subr.mxu0 0.0
    %931 = vmatpush1.msra.mxu0 0.0
    %932 = vmatprep.subr.mxu0 0.0
    %933 = vmatpush1.msra.mxu0 0.0
    %934 = vmatprep.subr.mxu0 0.0
    %935 = vmatpush1.msra.mxu0 0.0
    %936 = vmatprep.subr.mxu0 0.0
    %937 = vmatpush1.msra.mxu0 0.0
    %938 = vmatprep.subr.mxu0 0.0
    %939 = vmatpush1.msra.mxu0 0.0
    %940 = vmatprep.subr.mxu0 0.0
    %941 = vmatpush1.msra.mxu0 0.0
    %942 = vmatprep.subr.mxu0 0.0
    %943 = vmatpush1.msra.mxu0 0.0
    %944 = vmatprep.subr.mxu0 0.0
    %945 = vmatpush1.msra.mxu0 0.0
    %946 = vmatprep.subr.mxu0 0.0
    %947 = vmatpush1.msra.mxu0 0.0
    %948 = vmatprep.subr.mxu0 0.0
    %949 = vmatpush1.msra.mxu0 0.0
    %950 = vmatprep.subr.mxu0 0.0
    %951 = vmatpush1.msra.mxu0 0.0
    %952 = vmatprep.subr.mxu0 0.0
    %953 = vmatpush1.msra.mxu0 0.0
    %954 = vmatprep.subr.mxu0 0.0
    %955 = vmatpush1.msra.mxu0 0.0
    %956 = vmatprep.subr.mxu0 0.0
    %957 = vmatpush1.msra.mxu0 0.0
    %958 = vmatprep.subr.mxu0 0.0
    %959 = vmatpush1.msra.mxu0 0.0
    %960 = vmatprep.subr.mxu0 0.0
    %961 = vmatpush1.msra.mxu0 0.0
    %962 = vmatprep.subr.mxu0 0.0
    %963 = vmatpush1.msra.mxu0 0.0
    %964 = vmatprep.subr.mxu0 0.0
    %965 = vmatpush1.msra.mxu0 0.0
    %966 = vmatprep.mubr.f32.mxu0 0.0
    %967 = vmatmul.mubr.f32.gmra.mrb[0].mxu0 %v897
    %v968 = vpop.f32.mrb[0].mxu0
    %v969 = vadd.f32 %v894, %v968
    %v970 = vpop.f32.mrb[0].mxu0
    %971 = vmatprep.mubr.f32.mxu0 0.0
    %972 = vmatmul.mubr.f32.gmra.mrb[0].mxu0 %v900
    %v973 = vpop.f32.mrb[0].mxu0
    %v974 = vadd.f32 %v894, %v973
    %v975 = vpop.f32.mrb[0].mxu0
    %976 = vdwg.mxu0
    %v977 = vadd.f32 %v969, %v112
    %v978 = vadd.f32 %v974, %v113
    %v979 = vld [vmem:[%s8] sm:$0x1]
    %v980 = vld [vmem:[%s9] sm:$0x1]
    %v981 = vsel %vm70, %v977, 0.0
    %982 = vadd.xlane.f32.xlu0 %v981
    %v983 = vpop.xlane.xlu0 %982
    %v984 = vsel %vm70, %v978, 0.0
    %985 = vadd.xlane.f32.xlu0 %v984
    %v986 = vpop.xlane.xlu0 %985
    %v987 = vmul.f32 %v983, %v77
    %v988 = vmul.f32 %v986, %v77
    %v989 = vsub.f32 %v977, %v987
    %v990 = vsub.f32 %v978, %v988
    %v991 = vmul.f32 %v989, %v989
    %v992 = vmul.f32 %v990, %v990
    %v993 = vsel %vm70, %v991, 0.0
    %994 = vadd.xlane.f32.xlu0 %v993
    %v995 = vpop.xlane.xlu0 %994
    %v996 = vsel %vm70, %v992, 0.0
    %997 = vadd.xlane.f32.xlu0 %v996
    %v998 = vpop.xlane.xlu0 %997
    %v999 = vmul.f32 %v995, %v77
    %v1000 = vmul.f32 %v998, %v77
    %v1001 = vadd.f32 %v999, 1e-12
    %v1002 = vadd.f32 %v1000, 1e-12
    %v1003 = vrsqrt.pop %v1001
    %v1004 = vrsqrt.pop %v1002
    %v1005 = vmul.f32 %v989, %v1003
    %v1006 = vmul.f32 %v990, %v1004
    %v1008 = vlaneseq
    %v1009 = vshrl.u32 %v1008, 7
    %v1010 = vsub.s32 0, %v1009
    %v1011 = vrot.slane %v979, %v1010
    %v1013 = vmul.f32 %v1005, %v1011
    %v1014 = vmul.f32 %v1006, %v1011
    %v1016 = vlaneseq
    %v1017 = vshrl.u32 %v1016, 7
    %v1018 = vsub.s32 0, %v1017
    %v1019 = vrot.slane %v980, %v1018
    %v1021 = vadd.f32 %v1013, %v1019
    %v1022 = vadd.f32 %v1014, %v1019
    %v1023 = vld [vmem:[%s10] sm:$0xff]
    %v1024 = vld [vmem:[%s10 + $0x8] sm:$0xff]
    %v1025 = vld [vmem:[%s10 + $0x10] sm:$0xff]
    %v1026 = vld [vmem:[%s10 + $0x18] sm:$0xff]
    %v1027 = vld [vmem:[%s11] sm:$0x1]
    %v1029 = vlaneseq
    %v1030 = vshrl.u32 %v1029, 7
    %v1031 = vsub.s32 0, %v1030
    %v1032 = vrot.slane %v1027, %v1031
    %v1035 = vsel %vm70, %v1021, 0
    %v1038 = vsel %vm70, %v1022, 0
    %1040 = vmatprep.subr.mxu0 0.0
    %1041 = vmatpush1.msra.mxu0 %v1023
    %1042 = vmatprep.subr.mxu0 0.0
    %1043 = vmatpush1.msra.mxu0 %v1024
    %1044 = vmatprep.subr.mxu0 0.0
    %1045 = vmatpush1.msra.mxu0 %v1025
    %1046 = vmatprep.subr.mxu0 0.0
    %1047 = vmatpush1.msra.mxu0 %v1026
    %1048 = vmatprep.subr.mxu0 0.0
    %1049 = vmatpush1.msra.mxu0 0.0
    %1050 = vmatprep.subr.mxu0 0.0
    %1051 = vmatpush1.msra.mxu0 0.0
    %1052 = vmatprep.subr.mxu0 0.0
    %1053 = vmatpush1.msra.mxu0 0.0
    %1054 = vmatprep.subr.mxu0 0.0
    %1055 = vmatpush1.msra.mxu0 0.0
    %1056 = vmatprep.subr.mxu0 0.0
    %1057 = vmatpush1.msra.mxu0 0.0
    %1058 = vmatprep.subr.mxu0 0.0
    %1059 = vmatpush1.msra.mxu0 0.0
    %1060 = vmatprep.subr.mxu0 0.0
    %1061 = vmatpush1.msra.mxu0 0.0
    %1062 = vmatprep.subr.mxu0 0.0
    %1063 = vmatpush1.msra.mxu0 0.0
    %1064 = vmatprep.subr.mxu0 0.0
    %1065 = vmatpush1.msra.mxu0 0.0
    %1066 = vmatprep.subr.mxu0 0.0
    %1067 = vmatpush1.msra.mxu0 0.0
    %1068 = vmatprep.subr.mxu0 0.0
    %1069 = vmatpush1.msra.mxu0 0.0
    %1070 = vmatprep.subr.mxu0 0.0
    %1071 = vmatpush1.msra.mxu0 0.0
    %1072 = vmatprep.subr.mxu0 0.0
    %1073 = vmatpush1.msra.mxu0 0.0
    %1074 = vmatprep.subr.mxu0 0.0
    %1075 = vmatpush1.msra.mxu0 0.0
    %1076 = vmatprep.subr.mxu0 0.0
    %1077 = vmatpush1.msra.mxu0 0.0
    %1078 = vmatprep.subr.mxu0 0.0
    %1079 = vmatpush1.msra.mxu0 0.0
    %1080 = vmatprep.subr.mxu0 0.0
    %1081 = vmatpush1.msra.mxu0 0.0
    %1082 = vmatprep.subr.mxu0 0.0
    %1083 = vmatpush1.msra.mxu0 0.0
    %1084 = vmatprep.subr.mxu0 0.0
    %1085 = vmatpush1.msra.mxu0 0.0
    %1086 = vmatprep.subr.mxu0 0.0
    %1087 = vmatpush1.msra.mxu0 0.0
    %1088 = vmatprep.subr.mxu0 0.0
    %1089 = vmatpush1.msra.mxu0 0.0
    %1090 = vmatprep.subr.mxu0 0.0
    %1091 = vmatpush1.msra.mxu0 0.0
    %1092 = vmatprep.subr.mxu0 0.0
    %1093 = vmatpush1.msra.mxu0 0.0
    %1094 = vmatprep.subr.mxu0 0.0
    %1095 = vmatpush1.msra.mxu0 0.0
    %1096 = vmatprep.subr.mxu0 0.0
    %1097 = vmatpush1.msra.mxu0 0.0
    %1098 = vmatprep.subr.mxu0 0.0
    %1099 = vmatpush1.msra.mxu0 0.0
    %1100 = vmatprep.subr.mxu0 0.0
    %1101 = vmatpush1.msra.mxu0 0.0
    %1102 = vmatprep.subr.mxu0 0.0
    %1103 = vmatpush1.msra.mxu0 0.0
    %1104 = vmatprep.mubr.f32.mxu0 0.0
    %1105 = vmatmul.mubr.f32.gmra.mrb[0].mxu0 %v1035
    %v1106 = vpop.f32.mrb[0].mxu0
    %v1107 = vadd.f32 %v1032, %v1106
    %v1108 = vpop.f32.mrb[0].mxu0
    %1109 = vmatprep.mubr.f32.mxu0 0.0
    %1110 = vmatmul.mubr.f32.gmra.mrb[0].mxu0 %v1038
    %v1111 = vpop.f32.mrb[0].mxu0
    %v1112 = vadd.f32 %v1032, %v1111
    %v1113 = vpop.f32.mrb[0].mxu0
    %1114 = vdwg.mxu0
    %v1115 = vmul.f32 %v1107, 0.5
    %v1116 = vmul.f32 %v1112, 0.5
    %v1117 = vmul.f32 %v1107, 0.044715
    %v1118 = vmul.f32 %v1112, 0.044715
    %v1119 = vmul.f32 %v1117, %v1107
    %v1120 = vmul.f32 %v1118, %v1112
    %v1121 = vmul.f32 %v1119, %v1107
    %v1122 = vmul.f32 %v1120, %v1112
    %v1123 = vadd.f32 %v1107, %v1121
    %v1124 = vadd.f32 %v1112, %v1122
    %v1125 = vmul.f32 %v1123, 0.7978846
    %v1126 = vmul.f32 %v1124, 0.7978846
    %v1127 = vtanh.pop %v1125
    %v1128 = vtanh.pop %v1126
    %v1129 = vadd.f32 %v1127, 1.0
    %v1130 = vadd.f32 %v1128, 1.0
    %v1131 = vmul.f32 %v1115, %v1129
    %v1132 = vmul.f32 %v1116, %v1130
    %v1133 = vld [vmem:[%s12] sm:$0xff]
    %v1134 = vld [vmem:[%s12 + $0x8] sm:$0xff]
    %v1135 = vld [vmem:[%s12 + $0x10] sm:$0xff]
    %v1136 = vld [vmem:[%s12 + $0x18] sm:$0xff]
    %v1137 = vld [vmem:[%s12 + $0x20] sm:$0xff]
    %v1138 = vld [vmem:[%s12 + $0x28] sm:$0xff]
    %v1139 = vld [vmem:[%s12 + $0x30] sm:$0xff]
    %v1140 = vld [vmem:[%s12 + $0x38] sm:$0xff]
    %v1141 = vld [vmem:[%s13] sm:$0x1]
    %v1143 = vlaneseq
    %v1144 = vshrl.u32 %v1143, 7
    %v1145 = vsub.s32 0, %v1144
    %v1146 = vrot.slane %v1141, %v1145
    %vm1148 = vcmask 523264
    %v1150 = vsel %vm1148, %v1131, 0
    %v1153 = vsel %vm1148, %v1132, 0
    %1155 = vmatprep.subr.mxu0 0.0
    %1156 = vmatpush1.msra.mxu0 %v1133
    %1157 = vmatprep.subr.mxu0 0.0
    %1158 = vmatpush1.msra.mxu0 %v1134
    %1159 = vmatprep.subr.mxu0 0.0
    %1160 = vmatpush1.msra.mxu0 %v1135
    %1161 = vmatprep.subr.mxu0 0.0
    %1162 = vmatpush1.msra.mxu0 %v1136
    %1163 = vmatprep.subr.mxu0 0.0
    %1164 = vmatpush1.msra.mxu0 %v1137
    %1165 = vmatprep.subr.mxu0 0.0
    %1166 = vmatpush1.msra.mxu0 %v1138
    %1167 = vmatprep.subr.mxu0 0.0
    %1168 = vmatpush1.msra.mxu0 %v1139
    %1169 = vmatprep.subr.mxu0 0.0
    %1170 = vmatpush1.msra.mxu0 %v1140
    %1171 = vmatprep.subr.mxu0 0.0
    %1172 = vmatpush1.msra.mxu0 0.0
    %1173 = vmatprep.subr.mxu0 0.0
    %1174 = vmatpush1.msra.mxu0 0.0
    %1175 = vmatprep.subr.mxu0 0.0
    %1176 = vmatpush1.msra.mxu0 0.0
    %1177 = vmatprep.subr.mxu0 0.0
    %1178 = vmatpush1.msra.mxu0 0.0
    %1179 = vmatprep.subr.mxu0 0.0
    %1180 = vmatpush1.msra.mxu0 0.0
    %1181 = vmatprep.subr.mxu0 0.0
    %1182 = vmatpush1.msra.mxu0 0.0
    %1183 = vmatprep.subr.mxu0 0.0
    %1184 = vmatpush1.msra.mxu0 0.0
    %1185 = vmatprep.subr.mxu0 0.0
    %1186 = vmatpush1.msra.mxu0 0.0
    %1187 = vmatprep.subr.mxu0 0.0
    %1188 = vmatpush1.msra.mxu0 0.0
    %1189 = vmatprep.subr.mxu0 0.0
    %1190 = vmatpush1.msra.mxu0 0.0
    %1191 = vmatprep.subr.mxu0 0.0
    %1192 = vmatpush1.msra.mxu0 0.0
    %1193 = vmatprep.subr.mxu0 0.0
    %1194 = vmatpush1.msra.mxu0 0.0
    %1195 = vmatprep.subr.mxu0 0.0
    %1196 = vmatpush1.msra.mxu0 0.0
    %1197 = vmatprep.subr.mxu0 0.0
    %1198 = vmatpush1.msra.mxu0 0.0
    %1199 = vmatprep.subr.mxu0 0.0
    %1200 = vmatpush1.msra.mxu0 0.0
    %1201 = vmatprep.subr.mxu0 0.0
    %1202 = vmatpush1.msra.mxu0 0.0
    %1203 = vmatprep.subr.mxu0 0.0
    %1204 = vmatpush1.msra.mxu0 0.0
    %1205 = vmatprep.subr.mxu0 0.0
    %1206 = vmatpush1.msra.mxu0 0.0
    %1207 = vmatprep.subr.mxu0 0.0
    %1208 = vmatpush1.msra.mxu0 0.0
    %1209 = vmatprep.subr.mxu0 0.0
    %1210 = vmatpush1.msra.mxu0 0.0
    %1211 = vmatprep.subr.mxu0 0.0
    %1212 = vmatpush1.msra.mxu0 0.0
    %1213 = vmatprep.subr.mxu0 0.0
    %1214 = vmatpush1.msra.mxu0 0.0
    %1215 = vmatprep.subr.mxu0 0.0
    %1216 = vmatpush1.msra.mxu0 0.0
    %1217 = vmatprep.subr.mxu0 0.0
    %1218 = vmatpush1.msra.mxu0 0.0
    %1219 = vmatprep.mubr.f32.mxu0 0.0
    %1220 = vmatmul.mubr.f32.gmra.mrb[0].mxu0 %v1150
    %v1221 = vpop.f32.mrb[0].mxu0
    %v1222 = vadd.f32 %v1146, %v1221
    %v1223 = vpop.f32.mrb[0].mxu0
    %1224 = vmatprep.mubr.f32.mxu0 0.0
    %1225 = vmatmul.mubr.f32.gmra.mrb[0].mxu0 %v1153
    %v1226 = vpop.f32.mrb[0].mxu0
    %v1227 = vadd.f32 %v1146, %v1226
    %v1228 = vpop.f32.mrb[0].mxu0
    %1229 = vdwg.mxu0
    %v1230 = vadd.f32 %v1222, %v1021
    %v1231 = vadd.f32 %v1227, %v1022
    %v1232 = vld [vmem:[%s14] sm:$0x1]
    %v1233 = vld [vmem:[%s15] sm:$0x1]
    %v1234 = vsel %vm70, %v1230, 0.0
    %1235 = vadd.xlane.f32.xlu0 %v1234
    %v1236 = vpop.xlane.xlu0 %1235
    %v1237 = vsel %vm70, %v1231, 0.0
    %1238 = vadd.xlane.f32.xlu0 %v1237
    %v1239 = vpop.xlane.xlu0 %1238
    %v1240 = vmul.f32 %v1236, %v77
    %v1241 = vmul.f32 %v1239, %v77
    %v1242 = vsub.f32 %v1230, %v1240
    %v1243 = vsub.f32 %v1231, %v1241
    %v1244 = vmul.f32 %v1242, %v1242
    %v1245 = vmul.f32 %v1243, %v1243
    %v1246 = vsel %vm70, %v1244, 0.0
    %1247 = vadd.xlane.f32.xlu0 %v1246
    %v1248 = vpop.xlane.xlu0 %1247
    %v1249 = vsel %vm70, %v1245, 0.0
    %1250 = vadd.xlane.f32.xlu0 %v1249
    %v1251 = vpop.xlane.xlu0 %1250
    %v1252 = vmul.f32 %v1248, %v77
    %v1253 = vmul.f32 %v1251, %v77
    %v1254 = vadd.f32 %v1252, 1e-12
    %v1255 = vadd.f32 %v1253, 1e-12
    %v1256 = vrsqrt.pop %v1254
    %v1257 = vrsqrt.pop %v1255
    %v1258 = vmul.f32 %v1242, %v1256
    %v1259 = vmul.f32 %v1243, %v1257
    %v1261 = vlaneseq
    %v1262 = vshrl.u32 %v1261, 7
    %v1263 = vsub.s32 0, %v1262
    %v1264 = vrot.slane %v1232, %v1263
    %v1266 = vmul.f32 %v1258, %v1264
    %v1267 = vmul.f32 %v1259, %v1264
    %v1269 = vlaneseq
    %v1270 = vshrl.u32 %v1269, 7
    %v1271 = vsub.s32 0, %v1270
    %v1272 = vrot.slane %v1233, %v1271
    %v1274 = vadd.f32 %v1266, %v1272
    %v1275 = vadd.f32 %v1267, %v1272
    %s1276 = scalar_lea.vmem %s4, 32
    %v1277 = vld [vmem:[%s1276] sm:$0xff]
    %v1278 = vld [vmem:[%s1276 + $0x8] sm:$0xff]
    %v1279 = vld [vmem:[%s1276 + $0x10] sm:$0xff]
    %v1280 = vld [vmem:[%s1276 + $0x18] sm:$0xff]
    %s1281 = scalar_lea.vmem %s5, 1
    %v1282 = vld [vmem:[%s1281] sm:$0x1]
    %v1284 = vlaneseq
    %v1285 = vshrl.u32 %v1284, 7
    %v1286 = vsub.s32 0, %v1285
    %v1287 = vrot.slane %v1282, %v1286
    %v1290 = vsel %vm70, %v1274, 0
    %v1293 = vsel %vm70, %v1275, 0
    %1295 = vmatprep.subr.mxu0 0.0
    %1296 = vmatpush1.msra.mxu0 %v1277
    %1297 = vmatprep.subr.mxu0 0.0
    %1298 = vmatpush1.msra.mxu0 %v1278
    %1299 = vmatprep.subr.mxu0 0.0
    %1300 = vmatpush1.msra.mxu0 %v1279
    %1301 = vmatprep.subr.mxu0 0.0
    %1302 = vmatpush1.msra.mxu0 %v1280
    %1303 = vmatprep.subr.mxu0 0.0
    %1304 = vmatpush1.msra.mxu0 0.0
    %1305 = vmatprep.subr.mxu0 0.0
    %1306 = vmatpush1.msra.mxu0 0.0
    %1307 = vmatprep.subr.mxu0 0.0
    %1308 = vmatpush1.msra.mxu0 0.0
    %1309 = vmatprep.subr.mxu0 0.0
    %1310 = vmatpush1.msra.mxu0 0.0
    %1311 = vmatprep.subr.mxu0 0.0
    %1312 = vmatpush1.msra.mxu0 0.0
    %1313 = vmatprep.subr.mxu0 0.0
    %1314 = vmatpush1.msra.mxu0 0.0
    %1315 = vmatprep.subr.mxu0 0.0
    %1316 = vmatpush1.msra.mxu0 0.0
    %1317 = vmatprep.subr.mxu0 0.0
    %1318 = vmatpush1.msra.mxu0 0.0
    %1319 = vmatprep.subr.mxu0 0.0
    %1320 = vmatpush1.msra.mxu0 0.0
    %1321 = vmatprep.subr.mxu0 0.0
    %1322 = vmatpush1.msra.mxu0 0.0
    %1323 = vmatprep.subr.mxu0 0.0
    %1324 = vmatpush1.msra.mxu0 0.0
    %1325 = vmatprep.subr.mxu0 0.0
    %1326 = vmatpush1.msra.mxu0 0.0
    %1327 = vmatprep.subr.mxu0 0.0
    %1328 = vmatpush1.msra.mxu0 0.0
    %1329 = vmatprep.subr.mxu0 0.0
    %1330 = vmatpush1.msra.mxu0 0.0
    %1331 = vmatprep.subr.mxu0 0.0
    %1332 = vmatpush1.msra.mxu0 0.0
    %1333 = vmatprep.subr.mxu0 0.0
    %1334 = vmatpush1.msra.mxu0 0.0
    %1335 = vmatprep.subr.mxu0 0.0
    %1336 = vmatpush1.msra.mxu0 0.0
    %1337 = vmatprep.subr.mxu0 0.0
    %1338 = vmatpush1.msra.mxu0 0.0
    %1339 = vmatprep.subr.mxu0 0.0
    %1340 = vmatpush1.msra.mxu0 0.0
    %1341 = vmatprep.subr.mxu0 0.0
    %1342 = vmatpush1.msra.mxu0 0.0
    %1343 = vmatprep.subr.mxu0 0.0
    %1344 = vmatpush1.msra.mxu0 0.0
    %1345 = vmatprep.subr.mxu0 0.0
    %1346 = vmatpush1.msra.mxu0 0.0
    %1347 = vmatprep.subr.mxu0 0.0
    %1348 = vmatpush1.msra.mxu0 0.0
    %1349 = vmatprep.subr.mxu0 0.0
    %1350 = vmatpush1.msra.mxu0 0.0
    %1351 = vmatprep.subr.mxu0 0.0
    %1352 = vmatpush1.msra.mxu0 0.0
    %1353 = vmatprep.subr.mxu0 0.0
    %1354 = vmatpush1.msra.mxu0 0.0
    %1355 = vmatprep.subr.mxu0 0.0
    %1356 = vmatpush1.msra.mxu0 0.0
    %1357 = vmatprep.subr.mxu0 0.0
    %1358 = vmatpush1.msra.mxu0 0.0
    %1359 = vmatprep.mubr.f32.mxu0 0.0
    %1360 = vmatmul.mubr.f32.gmra.mrb[0].mxu0 %v1290
    %v1361 = vpop.f32.mrb[0].mxu0
    %v1362 = vadd.f32 %v1287, %v1361
    %v1363 = vpop.f32.mrb[0].mxu0
    %1364 = vmatprep.mubr.f32.mxu0 0.0
    %1365 = vmatmul.mubr.f32.gmra.mrb[0].mxu0 %v1293
    %v1366 = vpop.f32.mrb[0].mxu0
    %v1367 = vadd.f32 %v1287, %v1366
    %v1368 = vpop.f32.mrb[0].mxu0
    %1369 = vdwg.mxu0
    %1371 = vrot.lane.b32.xlu0 %v1362, 96
    %v1372 = vpop.permute.xlu0 %1371
    %v1373 = vsel %vm214, %v1362, 0
    %v1375 = vsel %vm214, %v1372, 0
    %1377 = vmatprep.subr.mxu0 0.0
    %1378 = vmatpush1.xpose.msra.mxu0 %v1375
    %1379 = vmatprep.subr.mxu0 0.0
    %1380 = vmatpush1.xpose.msra.mxu0 0.0
    %1381 = vmatprep.subr.mxu0 0.0
    %1382 = vmatpush1.xpose.msra.mxu0 0.0
    %1383 = vmatprep.subr.mxu0 0.0
    %1384 = vmatpush1.xpose.msra.mxu0 0.0
    %1385 = vmatprep.subr.mxu0 0.0
    %1386 = vmatpush1.xpose.msra.mxu0 0.0
    %1387 = vmatprep.subr.mxu0 0.0
    %1388 = vmatpush1.xpose.msra.mxu0 0.0
    %1389 = vmatprep.subr.mxu0 0.0
    %1390 = vmatpush1.xpose.msra.mxu0 0.0
    %1391 = vmatprep.subr.mxu0 0.0
    %1392 = vmatpush1.xpose.msra.mxu0 0.0
    %1393 = vmatprep.subr.mxu0 0.0
    %1394 = vmatpush1.xpose.msra.mxu0 0.0
    %1395 = vmatprep.subr.mxu0 0.0
    %1396 = vmatpush1.xpose.msra.mxu0 0.0
    %1397 = vmatprep.subr.mxu0 0.0
    %1398 = vmatpush1.xpose.msra.mxu0 0.0
    %1399 = vmatprep.subr.mxu0 0.0
    %1400 = vmatpush1.xpose.msra.mxu0 0.0
    %1401 = vmatprep.subr.mxu0 0.0
    %1402 = vmatpush1.xpose.msra.mxu0 0.0
    %1403 = vmatprep.subr.mxu0 0.0
    %1404 = vmatpush1.xpose.msra.mxu0 0.0
    %1405 = vmatprep.subr.mxu0 0.0
    %1406 = vmatpush1.xpose.msra.mxu0 0.0
    %1407 = vmatprep.subr.mxu0 0.0
    %1408 = vmatpush1.xpose.msra.mxu0 0.0
    %1409 = vmatprep.subr.mxu0 0.0
    %1410 = vmatpush1.xpose.msra.mxu0 0.0
    %1411 = vmatprep.subr.mxu0 0.0
    %1412 = vmatpush1.xpose.msra.mxu0 0.0
    %1413 = vmatprep.subr.mxu0 0.0
    %1414 = vmatpush1.xpose.msra.mxu0 0.0
    %1415 = vmatprep.subr.mxu0 0.0
    %1416 = vmatpush1.xpose.msra.mxu0 0.0
    %1417 = vmatprep.subr.mxu0 0.0
    %1418 = vmatpush1.xpose.msra.mxu0 0.0
    %1419 = vmatprep.subr.mxu0 0.0
    %1420 = vmatpush1.xpose.msra.mxu0 0.0
    %1421 = vmatprep.subr.mxu0 0.0
    %1422 = vmatpush1.xpose.msra.mxu0 0.0
    %1423 = vmatprep.subr.mxu0 0.0
    %1424 = vmatpush1.xpose.msra.mxu0 0.0
    %1425 = vmatprep.subr.mxu0 0.0
    %1426 = vmatpush1.xpose.msra.mxu0 0.0
    %1427 = vmatprep.subr.mxu0 0.0
    %1428 = vmatpush1.xpose.msra.mxu0 0.0
    %1429 = vmatprep.subr.mxu0 0.0
    %1430 = vmatpush1.xpose.msra.mxu0 0.0
    %1431 = vmatprep.subr.mxu0 0.0
    %1432 = vmatpush1.xpose.msra.mxu0 0.0
    %1433 = vmatprep.subr.mxu0 0.0
    %1434 = vmatpush1.xpose.msra.mxu0 0.0
    %1435 = vmatprep.subr.mxu0 0.0
    %1436 = vmatpush1.xpose.msra.mxu0 0.0
    %1437 = vmatprep.subr.mxu0 0.0
    %1438 = vmatpush1.xpose.msra.mxu0 0.0
    %1439 = vmatprep.subr.mxu0 0.0
    %1440 = vmatpush1.xpose.msra.mxu0 0.0
    %1441 = vmatprep.mubr.f32.mxu0 0.0
    %1442 = vmatmul.mubr.f32.gmra.mrb[0].mxu0 %v1373
    %v1443 = vpop.f32.mrb[0].mxu0
    %v1444 = vadd.f32 %v210, %v1443
    %v1445 = vpop.f32.mrb[0].mxu0
    %1446 = vdwg.mxu0
    %v1447 = vsel %vm289, %v1444, -inf
    %1448 = vmax.xlane.f32.xlu0 %v1447
    %v1449 = vpop.xlane.xlu0 %1448
    %v1450 = vsub.f32 %v1444, %v1449
    %v1451 = vmul.f32 %v1450, 1.442695
    %v1452 = vpow.pop %v1451
    %v1453 = vsel %vm289, %v1452, 0.0
    %1454 = vadd.xlane.f32.xlu0 %v1453
    %v1455 = vpop.xlane.xlu0 %1454
    %v1456 = vrcp.pop %v1455
    %v1457 = vmul.f32 %v1452, %v1456
    %1458 = vrot.lane.b32.xlu0 %v1362, 64
    %v1459 = vpop.permute.xlu0 %1458
    %v1462 = vsel %vm289, %v1457, 0
    %1464 = vmatprep.subr.mxu0 0.0
    %1465 = vmatpush1.msra.mxu0 %v1459
    %1466 = vmatprep.subr.mxu0 0.0
    %1467 = vmatpush1.msra.mxu0 0.0
    %1468 = vmatprep.subr.mxu0 0.0
    %1469 = vmatpush1.msra.mxu0 0.0
    %1470 = vmatprep.subr.mxu0 0.0
    %1471 = vmatpush1.msra.mxu0 0.0
    %1472 = vmatprep.subr.mxu0 0.0
    %1473 = vmatpush1.msra.mxu0 0.0
    %1474 = vmatprep.subr.mxu0 0.0
    %1475 = vmatpush1.msra.mxu0 0.0
    %1476 = vmatprep.subr.mxu0 0.0
    %1477 = vmatpush1.msra.mxu0 0.0
    %1478 = vmatprep.subr.mxu0 0.0
    %1479 = vmatpush1.msra.mxu0 0.0
    %1480 = vmatprep.subr.mxu0 0.0
    %1481 = vmatpush1.msra.mxu0 0.0
    %1482 = vmatprep.subr.mxu0 0.0
    %1483 = vmatpush1.msra.mxu0 0.0
    %1484 = vmatprep.subr.mxu0 0.0
    %1485 = vmatpush1.msra.mxu0 0.0
    %1486 = vmatprep.subr.mxu0 0.0
    %1487 = vmatpush1.msra.mxu0 0.0
    %1488 = vmatprep.subr.mxu0 0.0
    %1489 = vmatpush1.msra.mxu0 0.0
    %1490 = vmatprep.subr.mxu0 0.0
    %1491 = vmatpush1.msra.mxu0 0.0
    %1492 = vmatprep.subr.mxu0 0.0
    %1493 = vmatpush1.msra.mxu0 0.0
    %1494 = vmatprep.subr.mxu0 0.0
    %1495 = vmatpush1.msra.mxu0 0.0
    %1496 = vmatprep.subr.mxu0 0.0
    %1497 = vmatpush1.msra.mxu0 0.0
    %1498 = vmatprep.subr.mxu0 0.0
    %1499 = vmatpush1.msra.mxu0 0.0
    %1500 = vmatprep.subr.mxu0 0.0
    %1501 = vmatpush1.msra.mxu0 0.0
    %1502 = vmatprep.subr.mxu0 0.0
    %1503 = vmatpush1.msra.mxu0 0.0
    %1504 = vmatprep.subr.mxu0 0.0
    %1505 = vmatpush1.msra.mxu0 0.0
    %1506 = vmatprep.subr.mxu0 0.0
    %1507 = vmatpush1.msra.mxu0 0.0
    %1508 = vmatprep.subr.mxu0 0.0
    %1509 = vmatpush1.msra.mxu0 0.0
    %1510 = vmatprep.subr.mxu0 0.0
    %1511 = vmatpush1.msra.mxu0 0.0
    %1512 = vmatprep.subr.mxu0 0.0
    %1513 = vmatpush1.msra.mxu0 0.0
    %1514 = vmatprep.subr.mxu0 0.0
    %1515 = vmatpush1.msra.mxu0 0.0
    %1516 = vmatprep.subr.mxu0 0.0
    %1517 = vmatpush1.msra.mxu0 0.0
    %1518 = vmatprep.subr.mxu0 0.0
    %1519 = vmatpush1.msra.mxu0 0.0
    %1520 = vmatprep.subr.mxu0 0.0
    %1521 = vmatpush1.msra.mxu0 0.0
    %1522 = vmatprep.subr.mxu0 0.0
    %1523 = vmatpush1.msra.mxu0 0.0
    %1524 = vmatprep.subr.mxu0 0.0
    %1525 = vmatpush1.msra.mxu0 0.0
    %1526 = vmatprep.subr.mxu0 0.0
    %1527 = vmatpush1.msra.mxu0 0.0
    %1528 = vmatprep.mubr.f32.mxu0 0.0
    %1529 = vmatmul.mubr.f32.gmra.mrb[0].mxu0 %v1462
    %v1530 = vpop.f32.mrb[0].mxu0
    %v1531 = vadd.f32 0.0, %v1530
    %v1532 = vpop.f32.mrb[0].mxu0
    %1533 = vdwg.mxu0
    %1534 = vrot.lane.b32.xlu0 %v1362, 112
    %v1535 = vpop.permute.xlu0 %1534
    %1536 = vrot.lane.b32.xlu0 %v1362, 80
    %v1537 = vpop.permute.xlu0 %1536
    %v1538 = vsel %vm214, %v1535, 0
    %v1540 = vsel %vm214, %v1537, 0
    %1542 = vmatprep.subr.mxu0 0.0
    %1543 = vmatpush1.xpose.msra.mxu0 %v1540
    %1544 = vmatprep.subr.mxu0 0.0
    %1545 = vmatpush1.xpose.msra.mxu0 0.0
    %1546 = vmatprep.subr.mxu0 0.0
    %1547 = vmatpush1.xpose.msra.mxu0 0.0
    %1548 = vmatprep.subr.mxu0 0.0
    %1549 = vmatpush1.xpose.msra.mxu0 0.0
    %1550 = vmatprep.subr.mxu0 0.0
    %1551 = vmatpush1.xpose.msra.mxu0 0.0
    %1552 = vmatprep.subr.mxu0 0.0
    %1553 = vmatpush1.xpose.msra.mxu0 0.0
    %1554 = vmatprep.subr.mxu0 0.0
    %1555 = vmatpush1.xpose.msra.mxu0 0.0
    %1556 = vmatprep.subr.mxu0 0.0
    %1557 = vmatpush1.xpose.msra.mxu0 0.0
    %1558 = vmatprep.subr.mxu0 0.0
    %1559 = vmatpush1.xpose.msra.mxu0 0.0
    %1560 = vmatprep.subr.mxu0 0.0
    %1561 = vmatpush1.xpose.msra.mxu0 0.0
    %1562 = vmatprep.subr.mxu0 0.0
    %1563 = vmatpush1.xpose.msra.mxu0 0.0
    %1564 = vmatprep.subr.mxu0 0.0
    %1565 = vmatpush1.xpose.msra.mxu0 0.0
    %1566 = vmatprep.subr.mxu0 0.0
    %1567 = vmatpush1.xpose.msra.mxu0 0.0
    %1568 = vmatprep.subr.mxu0 0.0
    %1569 = vmatpush1.xpose.msra.mxu0 0.0
    %1570 = vmatprep.subr.mxu0 0.0
    %1571 = vmatpush1.xpose.msra.mxu0 0.0
    %1572 = vmatprep.subr.mxu0 0.0
    %1573 = vmatpush1.xpose.msra.mxu0 0.0
    %1574 = vmatprep.subr.mxu0 0.0
    %1575 = vmatpush1.xpose.msra.mxu0 0.0
    %1576 = vmatprep.subr.mxu0 0.0
    %1577 = vmatpush1.xpose.msra.mxu0 0.0
    %1578 = vmatprep.subr.mxu0 0.0
    %1579 = vmatpush1.xpose.msra.mxu0 0.0
    %1580 = vmatprep.subr.mxu0 0.0
    %1581 = vmatpush1.xpose.msra.mxu0 0.0
    %1582 = vmatprep.subr.mxu0 0.0
    %1583 = vmatpush1.xpose.msra.mxu0 0.0
    %1584 = vmatprep.subr.mxu0 0.0
    %1585 = vmatpush1.xpose.msra.mxu0 0.0
    %1586 = vmatprep.subr.mxu0 0.0
    %1587 = vmatpush1.xpose.msra.mxu0 0.0
    %1588 = vmatprep.subr.mxu0 0.0
    %1589 = vmatpush1.xpose.msra.mxu0 0.0
    %1590 = vmatprep.subr.mxu0 0.0
    %1591 = vmatpush1.xpose.msra.mxu0 0.0
    %1592 = vmatprep.subr.mxu0 0.0
    %1593 = vmatpush1.xpose.msra.mxu0 0.0
    %1594 = vmatprep.subr.mxu0 0.0
    %1595 = vmatpush1.xpose.msra.mxu0 0.0
    %1596 = vmatprep.subr.mxu0 0.0
    %1597 = vmatpush1.xpose.msra.mxu0 0.0
    %1598 = vmatprep.subr.mxu0 0.0
    %1599 = vmatpush1.xpose.msra.mxu0 0.0
    %1600 = vmatprep.subr.mxu0 0.0
    %1601 = vmatpush1.xpose.msra.mxu0 0.0
    %1602 = vmatprep.subr.mxu0 0.0
    %1603 = vmatpush1.xpose.msra.mxu0 0.0
    %1604 = vmatprep.subr.mxu0 0.0
    %1605 = vmatpush1.xpose.msra.mxu0 0.0
    %1606 = vmatprep.mubr.f32.mxu0 0.0
    %1607 = vmatmul.mubr.f32.gmra.mrb[0].mxu0 %v1538
    %v1608 = vpop.f32.mrb[0].mxu0
    %v1609 = vadd.f32 %v210, %v1608
    %v1610 = vpop.f32.mrb[0].mxu0
    %1611 = vdwg.mxu0
    %v1612 = vsel %vm289, %v1609, -inf
    %1613 = vmax.xlane.f32.xlu0 %v1612
    %v1614 = vpop.xlane.xlu0 %1613
    %v1615 = vsub.f32 %v1609, %v1614
    %v1616 = vmul.f32 %v1615, 1.442695
    %v1617 = vpow.pop %v1616
    %v1618 = vsel %vm289, %v1617, 0.0
    %1619 = vadd.xlane.f32.xlu0 %v1618
    %v1620 = vpop.xlane.xlu0 %1619
    %v1621 = vrcp.pop %v1620
    %v1622 = vmul.f32 %v1617, %v1621
    %1623 = vrot.lane.b32.xlu0 %v1362, 48
    %v1624 = vpop.permute.xlu0 %1623
    %v1627 = vsel %vm289, %v1622, 0
    %1629 = vmatprep.subr.mxu0 0.0
    %1630 = vmatpush1.msra.mxu0 %v1624
    %1631 = vmatprep.subr.mxu0 0.0
    %1632 = vmatpush1.msra.mxu0 0.0
    %1633 = vmatprep.subr.mxu0 0.0
    %1634 = vmatpush1.msra.mxu0 0.0
    %1635 = vmatprep.subr.mxu0 0.0
    %1636 = vmatpush1.msra.mxu0 0.0
    %1637 = vmatprep.subr.mxu0 0.0
    %1638 = vmatpush1.msra.mxu0 0.0
    %1639 = vmatprep.subr.mxu0 0.0
    %1640 = vmatpush1.msra.mxu0 0.0
    %1641 = vmatprep.subr.mxu0 0.0
    %1642 = vmatpush1.msra.mxu0 0.0
    %1643 = vmatprep.subr.mxu0 0.0
    %1644 = vmatpush1.msra.mxu0 0.0
    %1645 = vmatprep.subr.mxu0 0.0
    %1646 = vmatpush1.msra.mxu0 0.0
    %1647 = vmatprep.subr.mxu0 0.0
    %1648 = vmatpush1.msra.mxu0 0.0
    %1649 = vmatprep.subr.mxu0 0.0
    %1650 = vmatpush1.msra.mxu0 0.0
    %1651 = vmatprep.subr.mxu0 0.0
    %1652 = vmatpush1.msra.mxu0 0.0
    %1653 = vmatprep.subr.mxu0 0.0
    %1654 = vmatpush1.msra.mxu0 0.0
    %1655 = vmatprep.subr.mxu0 0.0
    %1656 = vmatpush1.msra.mxu0 0.0
    %1657 = vmatprep.subr.mxu0 0.0
    %1658 = vmatpush1.msra.mxu0 0.0
    %1659 = vmatprep.subr.mxu0 0.0
    %1660 = vmatpush1.msra.mxu0 0.0
    %1661 = vmatprep.subr.mxu0 0.0
    %1662 = vmatpush1.msra.mxu0 0.0
    %1663 = vmatprep.subr.mxu0 0.0
    %1664 = vmatpush1.msra.mxu0 0.0
    %1665 = vmatprep.subr.mxu0 0.0
    %1666 = vmatpush1.msra.mxu0 0.0
    %1667 = vmatprep.subr.mxu0 0.0
    %1668 = vmatpush1.msra.mxu0 0.0
    %1669 = vmatprep.subr.mxu0 0.0
    %1670 = vmatpush1.msra.mxu0 0.0
    %1671 = vmatprep.subr.mxu0 0.0
    %1672 = vmatpush1.msra.mxu0 0.0
    %1673 = vmatprep.subr.mxu0 0.0
    %1674 = vmatpush1.msra.mxu0 0.0
    %1675 = vmatprep.subr.mxu0 0.0
    %1676 = vmatpush1.msra.mxu0 0.0
    %1677 = vmatprep.subr.mxu0 0.0
    %1678 = vmatpush1.msra.mxu0 0.0
    %1679 = vmatprep.subr.mxu0 0.0
    %1680 = vmatpush1.msra.mxu0 0.0
    %1681 = vmatprep.subr.mxu0 0.0
    %1682 = vmatpush1.msra.mxu0 0.0
    %1683 = vmatprep.subr.mxu0 0.0
    %1684 = vmatpush1.msra.mxu0 0.0
    %1685 = vmatprep.subr.mxu0 0.0
    %1686 = vmatpush1.msra.mxu0 0.0
    %1687 = vmatprep.subr.mxu0 0.0
    %1688 = vmatpush1.msra.mxu0 0.0
    %1689 = vmatprep.subr.mxu0 0.0
    %1690 = vmatpush1.msra.mxu0 0.0
    %1691 = vmatprep.subr.mxu0 0.0
    %1692 = vmatpush1.msra.mxu0 0.0
    %1693 = vmatprep.mubr.f32.mxu0 0.0
    %1694 = vmatmul.mubr.f32.gmra.mrb[0].mxu0 %v1627
    %v1695 = vpop.f32.mrb[0].mxu0
    %v1696 = vadd.f32 0.0, %v1695
    %v1697 = vpop.f32.mrb[0].mxu0
    %1698 = vdwg.mxu0
    %1700 = vrot.lane.b32.xlu0 %v1696, 16
    %v1701 = vpop.permute.xlu0 %1700
    %v1703 = vsel %vm214, %v1531, %v1701
    %1705 = vrot.lane.b32.xlu0 %v1367, 96
    %v1706 = vpop.permute.xlu0 %1705
    %v1707 = vsel %vm214, %v1367, 0
    %v1709 = vsel %vm214, %v1706, 0
    %1711 = vmatprep.subr.mxu0 0.0
    %1712 = vmatpush1.xpose.msra.mxu0 %v1709
    %1713 = vmatprep.subr.mxu0 0.0
    %1714 = vmatpush1.xpose.msra.mxu0 0.0
    %1715 = vmatprep.subr.mxu0 0.0
    %1716 = vmatpush1.xpose.msra.mxu0 0.0
    %1717 = vmatprep.subr.mxu0 0.0
    %1718 = vmatpush1.xpose.msra.mxu0 0.0
    %1719 = vmatprep.subr.mxu0 0.0
    %1720 = vmatpush1.xpose.msra.mxu0 0.0
    %1721 = vmatprep.subr.mxu0 0.0
    %1722 = vmatpush1.xpose.msra.mxu0 0.0
    %1723 = vmatprep.subr.mxu0 0.0
    %1724 = vmatpush1.xpose.msra.mxu0 0.0
    %1725 = vmatprep.subr.mxu0 0.0
    %1726 = vmatpush1.xpose.msra.mxu0 0.0
    %1727 = vmatprep.subr.mxu0 0.0
    %1728 = vmatpush1.xpose.msra.mxu0 0.0
    %1729 = vmatprep.subr.mxu0 0.0
    %1730 = vmatpush1.xpose.msra.mxu0 0.0
    %1731 = vmatprep.subr.mxu0 0.0
    %1732 = vmatpush1.xpose.msra.mxu0 0.0
    %1733 = vmatprep.subr.mxu0 0.0
    %1734 = vmatpush1.xpose.msra.mxu0 0.0
    %1735 = vmatprep.subr.mxu0 0.0
    %1736 = vmatpush1.xpose.msra.mxu0 0.0
    %1737 = vmatprep.subr.mxu0 0.0
    %1738 = vmatpush1.xpose.msra.mxu0 0.0
    %1739 = vmatprep.subr.mxu0 0.0
    %1740 = vmatpush1.xpose.msra.mxu0 0.0
    %1741 = vmatprep.subr.mxu0 0.0
    %1742 = vmatpush1.xpose.msra.mxu0 0.0
    %1743 = vmatprep.subr.mxu0 0.0
    %1744 = vmatpush1.xpose.msra.mxu0 0.0
    %1745 = vmatprep.subr.mxu0 0.0
    %1746 = vmatpush1.xpose.msra.mxu0 0.0
    %1747 = vmatprep.subr.mxu0 0.0
    %1748 = vmatpush1.xpose.msra.mxu0 0.0
    %1749 = vmatprep.subr.mxu0 0.0
    %1750 = vmatpush1.xpose.msra.mxu0 0.0
    %1751 = vmatprep.subr.mxu0 0.0
    %1752 = vmatpush1.xpose.msra.mxu0 0.0
    %1753 = vmatprep.subr.mxu0 0.0
    %1754 = vmatpush1.xpose.msra.mxu0 0.0
    %1755 = vmatprep.subr.mxu0 0.0
    %1756 = vmatpush1.xpose.msra.mxu0 0.0
    %1757 = vmatprep.subr.mxu0 0.0
    %1758 = vmatpush1.xpose.msra.mxu0 0.0
    %1759 = vmatprep.subr.mxu0 0.0
    %1760 = vmatpush1.xpose.msra.mxu0 0.0
    %1761 = vmatprep.subr.mxu0 0.0
    %1762 = vmatpush1.xpose.msra.mxu0 0.0
    %1763 = vmatprep.subr.mxu0 0.0
    %1764 = vmatpush1.xpose.msra.mxu0 0.0
    %1765 = vmatprep.subr.mxu0 0.0
    %1766 = vmatpush1.xpose.msra.mxu0 0.0
    %1767 = vmatprep.subr.mxu0 0.0
    %1768 = vmatpush1.xpose.msra.mxu0 0.0
    %1769 = vmatprep.subr.mxu0 0.0
    %1770 = vmatpush1.xpose.msra.mxu0 0.0
    %1771 = vmatprep.subr.mxu0 0.0
    %1772 = vmatpush1.xpose.msra.mxu0 0.0
    %1773 = vmatprep.subr.mxu0 0.0
    %1774 = vmatpush1.xpose.msra.mxu0 0.0
    %1775 = vmatprep.mubr.f32.mxu0 0.0
    %1776 = vmatmul.mubr.f32.gmra.mrb[0].mxu0 %v1707
    %v1777 = vpop.f32.mrb[0].mxu0
    %v1778 = vadd.f32 %v550, %v1777
    %v1779 = vpop.f32.mrb[0].mxu0
    %1780 = vdwg.mxu0
    %v1781 = vsel %vm289, %v1778, -inf
    %1782 = vmax.xlane.f32.xlu0 %v1781
    %v1783 = vpop.xlane.xlu0 %1782
    %v1784 = vsub.f32 %v1778, %v1783
    %v1785 = vmul.f32 %v1784, 1.442695
    %v1786 = vpow.pop %v1785
    %v1787 = vsel %vm289, %v1786, 0.0
    %1788 = vadd.xlane.f32.xlu0 %v1787
    %v1789 = vpop.xlane.xlu0 %1788
    %v1790 = vrcp.pop %v1789
    %v1791 = vmul.f32 %v1786, %v1790
    %1792 = vrot.lane.b32.xlu0 %v1367, 64
    %v1793 = vpop.permute.xlu0 %1792
    %v1796 = vsel %vm289, %v1791, 0
    %1798 = vmatprep.subr.mxu0 0.0
    %1799 = vmatpush1.msra.mxu0 %v1793
    %1800 = vmatprep.subr.mxu0 0.0
    %1801 = vmatpush1.msra.mxu0 0.0
    %1802 = vmatprep.subr.mxu0 0.0
    %1803 = vmatpush1.msra.mxu0 0.0
    %1804 = vmatprep.subr.mxu0 0.0
    %1805 = vmatpush1.msra.mxu0 0.0
    %1806 = vmatprep.subr.mxu0 0.0
    %1807 = vmatpush1.msra.mxu0 0.0
    %1808 = vmatprep.subr.mxu0 0.0
    %1809 = vmatpush1.msra.mxu0 0.0
    %1810 = vmatprep.subr.mxu0 0.0
    %1811 = vmatpush1.msra.mxu0 0.0
    %1812 = vmatprep.subr.mxu0 0.0
    %1813 = vmatpush1.msra.mxu0 0.0
    %1814 = vmatprep.subr.mxu0 0.0
    %1815 = vmatpush1.msra.mxu0 0.0
    %1816 = vmatprep.subr.mxu0 0.0
    %1817 = vmatpush1.msra.mxu0 0.0
    %1818 = vmatprep.subr.mxu0 0.0
    %1819 = vmatpush1.msra.mxu0 0.0
    %1820 = vmatprep.subr.mxu0 0.0
    %1821 = vmatpush1.msra.mxu0 0.0
    %1822 = vmatprep.subr.mxu0 0.0
    %1823 = vmatpush1.msra.mxu0 0.0
    %1824 = vmatprep.subr.mxu0 0.0
    %1825 = vmatpush1.msra.mxu0 0.0
    %1826 = vmatprep.subr.mxu0 0.0
    %1827 = vmatpush1.msra.mxu0 0.0
    %1828 = vmatprep.subr.mxu0 0.0
    %1829 = vmatpush1.msra.mxu0 0.0
    %1830 = vmatprep.subr.mxu0 0.0
    %1831 = vmatpush1.msra.mxu0 0.0
    %1832 = vmatprep.subr.mxu0 0.0
    %1833 = vmatpush1.msra.mxu0 0.0
    %1834 = vmatprep.subr.mxu0 0.0
    %1835 = vmatpush1.msra.mxu0 0.0
    %1836 = vmatprep.subr.mxu0 0.0
    %1837 = vmatpush1.msra.mxu0 0.0
    %1838 = vmatprep.subr.mxu0 0.0
    %1839 = vmatpush1.msra.mxu0 0.0
    %1840 = vmatprep.subr.mxu0 0.0
    %1841 = vmatpush1.msra.mxu0 0.0
    %1842 = vmatprep.subr.mxu0 0.0
    %1843 = vmatpush1.msra.mxu0 0.0
    %1844 = vmatprep.subr.mxu0 0.0
    %1845 = vmatpush1.msra.mxu0 0.0
    %1846 = vmatprep.subr.mxu0 0.0
    %1847 = vmatpush1.msra.mxu0 0.0
    %1848 = vmatprep.subr.mxu0 0.0
    %1849 = vmatpush1.msra.mxu0 0.0
    %1850 = vmatprep.subr.mxu0 0.0
    %1851 = vmatpush1.msra.mxu0 0.0
    %1852 = vmatprep.subr.mxu0 0.0
    %1853 = vmatpush1.msra.mxu0 0.0
    %1854 = vmatprep.subr.mxu0 0.0
    %1855 = vmatpush1.msra.mxu0 0.0
    %1856 = vmatprep.subr.mxu0 0.0
    %1857 = vmatpush1.msra.mxu0 0.0
    %1858 = vmatprep.subr.mxu0 0.0
    %1859 = vmatpush1.msra.mxu0 0.0
    %1860 = vmatprep.subr.mxu0 0.0
    %1861 = vmatpush1.msra.mxu0 0.0
    %1862 = vmatprep.mubr.f32.mxu0 0.0
    %1863 = vmatmul.mubr.f32.gmra.mrb[0].mxu0 %v1796
    %v1864 = vpop.f32.mrb[0].mxu0
    %v1865 = vadd.f32 0.0, %v1864
    %v1866 = vpop.f32.mrb[0].mxu0
    %1867 = vdwg.mxu0
    %1868 = vrot.lane.b32.xlu0 %v1367, 112
    %v1869 = vpop.permute.xlu0 %1868
    %1870 = vrot.lane.b32.xlu0 %v1367, 80
    %v1871 = vpop.permute.xlu0 %1870
    %v1872 = vsel %vm214, %v1869, 0
    %v1874 = vsel %vm214, %v1871, 0
    %1876 = vmatprep.subr.mxu0 0.0
    %1877 = vmatpush1.xpose.msra.mxu0 %v1874
    %1878 = vmatprep.subr.mxu0 0.0
    %1879 = vmatpush1.xpose.msra.mxu0 0.0
    %1880 = vmatprep.subr.mxu0 0.0
    %1881 = vmatpush1.xpose.msra.mxu0 0.0
    %1882 = vmatprep.subr.mxu0 0.0
    %1883 = vmatpush1.xpose.msra.mxu0 0.0
    %1884 = vmatprep.subr.mxu0 0.0
    %1885 = vmatpush1.xpose.msra.mxu0 0.0
    %1886 = vmatprep.subr.mxu0 0.0
    %1887 = vmatpush1.xpose.msra.mxu0 0.0
    %1888 = vmatprep.subr.mxu0 0.0
    %1889 = vmatpush1.xpose.msra.mxu0 0.0
    %1890 = vmatprep.subr.mxu0 0.0
    %1891 = vmatpush1.xpose.msra.mxu0 0.0
    %1892 = vmatprep.subr.mxu0 0.0
    %1893 = vmatpush1.xpose.msra.mxu0 0.0
    %1894 = vmatprep.subr.mxu0 0.0
    %1895 = vmatpush1.xpose.msra.mxu0 0.0
    %1896 = vmatprep.subr.mxu0 0.0
    %1897 = vmatpush1.xpose.msra.mxu0 0.0
    %1898 = vmatprep.subr.mxu0 0.0
    %1899 = vmatpush1.xpose.msra.mxu0 0.0
    %1900 = vmatprep.subr.mxu0 0.0
    %1901 = vmatpush1.xpose.msra.mxu0 0.0
    %1902 = vmatprep.subr.mxu0 0.0
    %1903 = vmatpush1.xpose.msra.mxu0 0.0
    %1904 = vmatprep.subr.mxu0 0.0
    %1905 = vmatpush1.xpose.msra.mxu0 0.0
    %1906 = vmatprep.subr.mxu0 0.0
    %1907 = vmatpush1.xpose.msra.mxu0 0.0
    %1908 = vmatprep.subr.mxu0 0.0
    %1909 = vmatpush1.xpose.msra.mxu0 0.0
    %1910 = vmatprep.subr.mxu0 0.0
    %1911 = vmatpush1.xpose.msra.mxu0 0.0
    %1912 = vmatprep.subr.mxu0 0.0
    %1913 = vmatpush1.xpose.msra.mxu0 0.0
    %1914 = vmatprep.subr.mxu0 0.0
    %1915 = vmatpush1.xpose.msra.mxu0 0.0
    %1916 = vmatprep.subr.mxu0 0.0
    %1917 = vmatpush1.xpose.msra.mxu0 0.0
    %1918 = vmatprep.subr.mxu0 0.0
    %1919 = vmatpush1.xpose.msra.mxu0 0.0
    %1920 = vmatprep.subr.mxu0 0.0
    %1921 = vmatpush1.xpose.msra.mxu0 0.0
    %1922 = vmatprep.subr.mxu0 0.0
    %1923 = vmatpush1.xpose.msra.mxu0 0.0
    %1924 = vmatprep.subr.mxu0 0.0
    %1925 = vmatpush1.xpose.msra.mxu0 0.0
    %1926 = vmatprep.subr.mxu0 0.0
    %1927 = vmatpush1.xpose.msra.mxu0 0.0
    %1928 = vmatprep.subr.mxu0 0.0
    %1929 = vmatpush1.xpose.msra.mxu0 0.0
    %1930 = vmatprep.subr.mxu0 0.0
    %1931 = vmatpush1.xpose.msra.mxu0 0.0
    %1932 = vmatprep.subr.mxu0 0.0
    %1933 = vmatpush1.xpose.msra.mxu0 0.0
    %1934 = vmatprep.subr.mxu0 0.0
    %1935 = vmatpush1.xpose.msra.mxu0 0.0
    %1936 = vmatprep.subr.mxu0 0.0
    %1937 = vmatpush1.xpose.msra.mxu0 0.0
    %1938 = vmatprep.subr.mxu0 0.0
    %1939 = vmatpush1.xpose.msra.mxu0 0.0
    %1940 = vmatprep.mubr.f32.mxu0 0.0
    %1941 = vmatmul.mubr.f32.gmra.mrb[0].mxu0 %v1872
    %v1942 = vpop.f32.mrb[0].mxu0
    %v1943 = vadd.f32 %v550, %v1942
    %v1944 = vpop.f32.mrb[0].mxu0
    %1945 = vdwg.mxu0
    %v1946 = vsel %vm289, %v1943, -inf
    %1947 = vmax.xlane.f32.xlu0 %v1946
    %v1948 = vpop.xlane.xlu0 %1947
    %v1949 = vsub.f32 %v1943, %v1948
    %v1950 = vmul.f32 %v1949, 1.442695
    %v1951 = vpow.pop %v1950
    %v1952 = vsel %vm289, %v1951, 0.0
    %1953 = vadd.xlane.f32.xlu0 %v1952
    %v1954 = vpop.xlane.xlu0 %1953
    %v1955 = vrcp.pop %v1954
    %v1956 = vmul.f32 %v1951, %v1955
    %1957 = vrot.lane.b32.xlu0 %v1367, 48
    %v1958 = vpop.permute.xlu0 %1957
    %v1961 = vsel %vm289, %v1956, 0
    %1963 = vmatprep.subr.mxu0 0.0
    %1964 = vmatpush1.msra.mxu0 %v1958
    %1965 = vmatprep.subr.mxu0 0.0
    %1966 = vmatpush1.msra.mxu0 0.0
    %1967 = vmatprep.subr.mxu0 0.0
    %1968 = vmatpush1.msra.mxu0 0.0
    %1969 = vmatprep.subr.mxu0 0.0
    %1970 = vmatpush1.msra.mxu0 0.0
    %1971 = vmatprep.subr.mxu0 0.0
    %1972 = vmatpush1.msra.mxu0 0.0
    %1973 = vmatprep.subr.mxu0 0.0
    %1974 = vmatpush1.msra.mxu0 0.0
    %1975 = vmatprep.subr.mxu0 0.0
    %1976 = vmatpush1.msra.mxu0 0.0
    %1977 = vmatprep.subr.mxu0 0.0
    %1978 = vmatpush1.msra.mxu0 0.0
    %1979 = vmatprep.subr.mxu0 0.0
    %1980 = vmatpush1.msra.mxu0 0.0
    %1981 = vmatprep.subr.mxu0 0.0
    %1982 = vmatpush1.msra.mxu0 0.0
    %1983 = vmatprep.subr.mxu0 0.0
    %1984 = vmatpush1.msra.mxu0 0.0
    %1985 = vmatprep.subr.mxu0 0.0
    %1986 = vmatpush1.msra.mxu0 0.0
    %1987 = vmatprep.subr.mxu0 0.0
    %1988 = vmatpush1.msra.mxu0 0.0
    %1989 = vmatprep.subr.mxu0 0.0
    %1990 = vmatpush1.msra.mxu0 0.0
    %1991 = vmatprep.subr.mxu0 0.0
    %1992 = vmatpush1.msra.mxu0 0.0
    %1993 = vmatprep.subr.mxu0 0.0
    %1994 = vmatpush1.msra.mxu0 0.0
    %1995 = vmatprep.subr.mxu0 0.0
    %1996 = vmatpush1.msra.mxu0 0.0
    %1997 = vmatprep.subr.mxu0 0.0
    %1998 = vmatpush1.msra.mxu0 0.0
    %1999 = vmatprep.subr.mxu0 0.0
    %2000 = vmatpush1.msra.mxu0 0.0
    %2001 = vmatprep.subr.mxu0 0.0
    %2002 = vmatpush1.msra.mxu0 0.0
    %2003 = vmatprep.subr.mxu0 0.0
    %2004 = vmatpush1.msra.mxu0 0.0
    %2005 = vmatprep.subr.mxu0 0.0
    %2006 = vmatpush1.msra.mxu0 0.0
    %2007 = vmatprep.subr.mxu0 0.0
    %2008 = vmatpush1.msra.mxu0 0.0
    %2009 = vmatprep.subr.mxu0 0.0
    %2010 = vmatpush1.msra.mxu0 0.0
    %2011 = vmatprep.subr.mxu0 0.0
    %2012 = vmatpush1.msra.mxu0 0.0
    %2013 = vmatprep.subr.mxu0 0.0
    %2014 = vmatpush1.msra.mxu0 0.0
    %2015 = vmatprep.subr.mxu0 0.0
    %2016 = vmatpush1.msra.mxu0 0.0
    %2017 = vmatprep.subr.mxu0 0.0
    %2018 = vmatpush1.msra.mxu0 0.0
    %2019 = vmatprep.subr.mxu0 0.0
    %2020 = vmatpush1.msra.mxu0 0.0
    %2021 = vmatprep.subr.mxu0 0.0
    %2022 = vmatpush1.msra.mxu0 0.0
    %2023 = vmatprep.subr.mxu0 0.0
    %2024 = vmatpush1.msra.mxu0 0.0
    %2025 = vmatprep.subr.mxu0 0.0
    %2026 = vmatpush1.msra.mxu0 0.0
    %2027 = vmatprep.mubr.f32.mxu0 0.0
    %2028 = vmatmul.mubr.f32.gmra.mrb[0].mxu0 %v1961
    %v2029 = vpop.f32.mrb[0].mxu0
    %v2030 = vadd.f32 0.0, %v2029
    %v2031 = vpop.f32.mrb[0].mxu0
    %2032 = vdwg.mxu0
    %2034 = vrot.lane.b32.xlu0 %v2030, 16
    %v2035 = vpop.permute.xlu0 %2034
    %v2037 = vsel %vm214, %v1865, %v2035
    %s2038 = scalar_lea.vmem %s6, 32
    %v2039 = vld [vmem:[%s2038] sm:$0xff]
    %v2040 = vld [vmem:[%s2038 + $0x8] sm:$0xff]
    %v2041 = vld [vmem:[%s2038 + $0x10] sm:$0xff]
    %v2042 = vld [vmem:[%s2038 + $0x18] sm:$0xff]
    %s2043 = scalar_lea.vmem %s7, 1
    %v2044 = vld [vmem:[%s2043] sm:$0x1]
    %v2046 = vlaneseq
    %v2047 = vshrl.u32 %v2046, 7
    %v2048 = vsub.s32 0, %v2047
    %v2049 = vrot.slane %v2044, %v2048
    %v2052 = vsel %vm70, %v1703, 0
    %v2055 = vsel %vm70, %v2037, 0
    %2057 = vmatprep.subr.mxu0 0.0
    %2058 = vmatpush1.msra.mxu0 %v2039
    %2059 = vmatprep.subr.mxu0 0.0
    %2060 = vmatpush1.msra.mxu0 %v2040
    %2061 = vmatprep.subr.mxu0 0.0
    %2062 = vmatpush1.msra.mxu0 %v2041
    %2063 = vmatprep.subr.mxu0 0.0
    %2064 = vmatpush1.msra.mxu0 %v2042
    %2065 = vmatprep.subr.mxu0 0.0
    %2066 = vmatpush1.msra.mxu0 0.0
    %2067 = vmatprep.subr.mxu0 0.0
    %2068 = vmatpush1.msra.mxu0 0.0
    %2069 = vmatprep.subr.mxu0 0.0
    %2070 = vmatpush1.msra.mxu0 0.0
    %2071 = vmatprep.subr.mxu0 0.0
    %2072 = vmatpush1.msra.mxu0 0.0
    %2073 = vmatprep.subr.mxu0 0.0
    %2074 = vmatpush1.msra.mxu0 0.0
    %2075 = vmatprep.subr.mxu0 0.0
    %2076 = vmatpush1.msra.mxu0 0.0
    %2077 = vmatprep.subr.mxu0 0.0
    %2078 = vmatpush1.msra.mxu0 0.0
    %2079 = vmatprep.subr.mxu0 0.0
    %2080 = vmatpush1.msra.mxu0 0.0
    %2081 = vmatprep.subr.mxu0 0.0
    %2082 = vmatpush1.msra.mxu0 0.0
    %2083 = vmatprep.subr.mxu0 0.0
    %2084 = vmatpush1.msra.mxu0 0.0
    %2085 = vmatprep.subr.mxu0 0.0
    %2086 = vmatpush1.msra.mxu0 0.0
    %2087 = vmatprep.subr.mxu0 0.0
    %2088 = vmatpush1.msra.mxu0 0.0
    %2089 = vmatprep.subr.mxu0 0.0
    %2090 = vmatpush1.msra.mxu0 0.0
    %2091 = vmatprep.subr.mxu0 0.0
    %2092 = vmatpush1.msra.mxu0 0.0
    %2093 = vmatprep.subr.mxu0 0.0
    %2094 = vmatpush1.msra.mxu0 0.0
    %2095 = vmatprep.subr.mxu0 0.0
    %2096 = vmatpush1.msra.mxu0 0.0
    %2097 = vmatprep.subr.mxu0 0.0
    %2098 = vmatpush1.msra.mxu0 0.0
    %2099 = vmatprep.subr.mxu0 0.0
    %2100 = vmatpush1.msra.mxu0 0.0
    %2101 = vmatprep.subr.mxu0 0.0
    %2102 = vmatpush1.msra.mxu0 0.0
    %2103 = vmatprep.subr.mxu0 0.0
    %2104 = vmatpush1.msra.mxu0 0.0
    %2105 = vmatprep.subr.mxu0 0.0
    %2106 = vmatpush1.msra.mxu0 0.0
    %2107 = vmatprep.subr.mxu0 0.0
    %2108 = vmatpush1.msra.mxu0 0.0
    %2109 = vmatprep.subr.mxu0 0.0
    %2110 = vmatpush1.msra.mxu0 0.0
    %2111 = vmatprep.subr.mxu0 0.0
    %2112 = vmatpush1.msra.mxu0 0.0
    %2113 = vmatprep.subr.mxu0 0.0
    %2114 = vmatpush1.msra.mxu0 0.0
    %2115 = vmatprep.subr.mxu0 0.0
    %2116 = vmatpush1.msra.mxu0 0.0
    %2117 = vmatprep.subr.mxu0 0.0
    %2118 = vmatpush1.msra.mxu0 0.0
    %2119 = vmatprep.subr.mxu0 0.0
    %2120 = vmatpush1.msra.mxu0 0.0
    %2121 = vmatprep.mubr.f32.mxu0 0.0
    %2122 = vmatmul.mubr.f32.gmra.mrb[0].mxu0 %v2052
    %v2123 = vpop.f32.mrb[0].mxu0
    %v2124 = vadd.f32 %v2049, %v2123
    %v2125 = vpop.f32.mrb[0].mxu0
    %2126 = vmatprep.mubr.f32.mxu0 0.0
    %2127 = vmatmul.mubr.f32.gmra.mrb[0].mxu0 %v2055
    %v2128 = vpop.f32.mrb[0].mxu0
    %v2129 = vadd.f32 %v2049, %v2128
    %v2130 = vpop.f32.mrb[0].mxu0
    %2131 = vdwg.mxu0
    %v2132 = vadd.f32 %v2124, %v1274
    %v2133 = vadd.f32 %v2129, %v1275
    %s2134 = scalar_lea.vmem %s8, 1
    %v2135 = vld [vmem:[%s2134] sm:$0x1]
    %s2136 = scalar_lea.vmem %s9, 1
    %v2137 = vld [vmem:[%s2136] sm:$0x1]
    %v2138 = vsel %vm70, %v2132, 0.0
    %2139 = vadd.xlane.f32.xlu0 %v2138
    %v2140 = vpop.xlane.xlu0 %2139
    %v2141 = vsel %vm70, %v2133, 0.0
    %2142 = vadd.xlane.f32.xlu0 %v2141
    %v2143 = vpop.xlane.xlu0 %2142
    %v2144 = vmul.f32 %v2140, %v77
    %v2145 = vmul.f32 %v2143, %v77
    %v2146 = vsub.f32 %v2132, %v2144
    %v2147 = vsub.f32 %v2133, %v2145
    %v2148 = vmul.f32 %v2146, %v2146
    %v2149 = vmul.f32 %v2147, %v2147
    %v2150 = vsel %vm70, %v2148, 0.0
    %2151 = vadd.xlane.f32.xlu0 %v2150
    %v2152 = vpop.xlane.xlu0 %2151
    %v2153 = vsel %vm70, %v2149, 0.0
    %2154 = vadd.xlane.f32.xlu0 %v2153
    %v2155 = vpop.xlane.xlu0 %2154
    %v2156 = vmul.f32 %v2152, %v77
    %v2157 = vmul.f32 %v2155, %v77
    %v2158 = vadd.f32 %v2156, 1e-12
    %v2159 = vadd.f32 %v2157, 1e-12
    %v2160 = vrsqrt.pop %v2158
    %v2161 = vrsqrt.pop %v2159
    %v2162 = vmul.f32 %v2146, %v2160
    %v2163 = vmul.f32 %v2147, %v2161
    %v2165 = vlaneseq
    %v2166 = vshrl.u32 %v2165, 7
    %v2167 = vsub.s32 0, %v2166
    %v2168 = vrot.slane %v2135, %v2167
    %v2170 = vmul.f32 %v2162, %v2168
    %v2171 = vmul.f32 %v2163, %v2168
    %v2173 = vlaneseq
    %v2174 = vshrl.u32 %v2173, 7
    %v2175 = vsub.s32 0, %v2174
    %v2176 = vrot.slane %v2137, %v2175
    %v2178 = vadd.f32 %v2170, %v2176
    %v2179 = vadd.f32 %v2171, %v2176
    %s2180 = scalar_lea.vmem %s10, 32
    %v2181 = vld [vmem:[%s2180] sm:$0xff]
    %v2182 = vld [vmem:[%s2180 + $0x8] sm:$0xff]
    %v2183 = vld [vmem:[%s2180 + $0x10] sm:$0xff]
    %v2184 = vld [vmem:[%s2180 + $0x18] sm:$0xff]
    %s2185 = scalar_lea.vmem %s11, 1
    %v2186 = vld [vmem:[%s2185] sm:$0x1]
    %v2188 = vlaneseq
    %v2189 = vshrl.u32 %v2188, 7
    %v2190 = vsub.s32 0, %v2189
    %v2191 = vrot.slane %v2186, %v2190
    %v2194 = vsel %vm70, %v2178, 0
    %v2197 = vsel %vm70, %v2179, 0
    %2199 = vmatprep.subr.mxu0 0.0
    %2200 = vmatpush1.msra.mxu0 %v2181
    %2201 = vmatprep.subr.mxu0 0.0
    %2202 = vmatpush1.msra.mxu0 %v2182
    %2203 = vmatprep.subr.mxu0 0.0
    %2204 = vmatpush1.msra.mxu0 %v2183
    %2205 = vmatprep.subr.mxu0 0.0
    %2206 = vmatpush1.msra.mxu0 %v2184
    %2207 = vmatprep.subr.mxu0 0.0
    %2208 = vmatpush1.msra.mxu0 0.0
    %2209 = vmatprep.subr.mxu0 0.0
    %2210 = vmatpush1.msra.mxu0 0.0
    %2211 = vmatprep.subr.mxu0 0.0
    %2212 = vmatpush1.msra.mxu0 0.0
    %2213 = vmatprep.subr.mxu0 0.0
    %2214 = vmatpush1.msra.mxu0 0.0
    %2215 = vmatprep.subr.mxu0 0.0
    %2216 = vmatpush1.msra.mxu0 0.0
    %2217 = vmatprep.subr.mxu0 0.0
    %2218 = vmatpush1.msra.mxu0 0.0
    %2219 = vmatprep.subr.mxu0 0.0
    %2220 = vmatpush1.msra.mxu0 0.0
    %2221 = vmatprep.subr.mxu0 0.0
    %2222 = vmatpush1.msra.mxu0 0.0
    %2223 = vmatprep.subr.mxu0 0.0
    %2224 = vmatpush1.msra.mxu0 0.0
    %2225 = vmatprep.subr.mxu0 0.0
    %2226 = vmatpush1.msra.mxu0 0.0
    %2227 = vmatprep.subr.mxu0 0.0
    %2228 = vmatpush1.msra.mxu0 0.0
    %2229 = vmatprep.subr.mxu0 0.0
    %2230 = vmatpush1.msra.mxu0 0.0
    %2231 = vmatprep.subr.mxu0 0.0
    %2232 = vmatpush1.msra.mxu0 0.0
    %2233 = vmatprep.subr.mxu0 0.0
    %2234 = vmatpush1.msra.mxu0 0.0
    %2235 = vmatprep.subr.mxu0 0.0
    %2236 = vmatpush1.msra.mxu0 0.0
    %2237 = vmatprep.subr.mxu0 0.0
    %2238 = vmatpush1.msra.mxu0 0.0
    %2239 = vmatprep.subr.mxu0 0.0
    %2240 = vmatpush1.msra.mxu0 0.0
    %2241 = vmatprep.subr.mxu0 0.0
    %2242 = vmatpush1.msra.mxu0 0.0
    %2243 = vmatprep.subr.mxu0 0.0
    %2244 = vmatpush1.msra.mxu0 0.0
    %2245 = vmatprep.subr.mxu0 0.0
    %2246 = vmatpush1.msra.mxu0 0.0
    %2247 = vmatprep.subr.mxu0 0.0
    %2248 = vmatpush1.msra.mxu0 0.0
    %2249 = vmatprep.subr.mxu0 0.0
    %2250 = vmatpush1.msra.mxu0 0.0
    %2251 = vmatprep.subr.mxu0 0.0
    %2252 = vmatpush1.msra.mxu0 0.0
    %2253 = vmatprep.subr.mxu0 0.0
    %2254 = vmatpush1.msra.mxu0 0.0
    %2255 = vmatprep.subr.mxu0 0.0
    %2256 = vmatpush1.msra.mxu0 0.0
    %2257 = vmatprep.subr.mxu0 0.0
    %2258 = vmatpush1.msra.mxu0 0.0
    %2259 = vmatprep.subr.mxu0 0.0
    %2260 = vmatpush1.msra.mxu0 0.0
    %2261 = vmatprep.subr.mxu0 0.0
    %2262 = vmatpush1.msra.mxu0 0.0
    %2263 = vmatprep.mubr.f32.mxu0 0.0
    %2264 = vmatmul.mubr.f32.gmra.mrb[0].mxu0 %v2194
    %v2265 = vpop.f32.mrb[0].mxu0
    %v2266 = vadd.f32 %v2191, %v2265
    %v2267 = vpop.f32.mrb[0].mxu0
    %2268 = vmatprep.mubr.f32.mxu0 0.0
    %2269 = vmatmul.mubr.f32.gmra.mrb[0].mxu0 %v2197
    %v2270 = vpop.f32.mrb[0].mxu0
    %v2271 = vadd.f32 %v2191, %v2270
    %v2272 = vpop.f32.mrb[0].mxu0
    %2273 = vdwg.mxu0
    %v2274 = vmul.f32 %v2266, 0.5
    %v2275 = vmul.f32 %v2271, 0.5
    %v2276 = vmul.f32 %v2266, 0.044715
    %v2277 = vmul.f32 %v2271, 0.044715
    %v2278 = vmul.f32 %v2276, %v2266
    %v2279 = vmul.f32 %v2277, %v2271
    %v2280 = vmul.f32 %v2278, %v2266
    %v2281 = vmul.f32 %v2279, %v2271
    %v2282 = vadd.f32 %v2266, %v2280
    %v2283 = vadd.f32 %v2271, %v2281
    %v2284 = vmul.f32 %v2282, 0.7978846
    %v2285 = vmul.f32 %v2283, 0.7978846
    %v2286 = vtanh.pop %v2284
    %v2287 = vtanh.pop %v2285
    %v2288 = vadd.f32 %v2286, 1.0
    %v2289 = vadd.f32 %v2287, 1.0
    %v2290 = vmul.f32 %v2274, %v2288
    %v2291 = vmul.f32 %v2275, %v2289
    %s2292 = scalar_lea.vmem %s12, 64
    %v2293 = vld [vmem:[%s2292] sm:$0xff]
    %v2294 = vld [vmem:[%s2292 + $0x8] sm:$0xff]
    %v2295 = vld [vmem:[%s2292 + $0x10] sm:$0xff]
    %v2296 = vld [vmem:[%s2292 + $0x18] sm:$0xff]
    %v2297 = vld [vmem:[%s2292 + $0x20] sm:$0xff]
    %v2298 = vld [vmem:[%s2292 + $0x28] sm:$0xff]
    %v2299 = vld [vmem:[%s2292 + $0x30] sm:$0xff]
    %v2300 = vld [vmem:[%s2292 + $0x38] sm:$0xff]
    %s2301 = scalar_lea.vmem %s13, 1
    %v2302 = vld [vmem:[%s2301] sm:$0x1]
    %v2304 = vlaneseq
    %v2305 = vshrl.u32 %v2304, 7
    %v2306 = vsub.s32 0, %v2305
    %v2307 = vrot.slane %v2302, %v2306
    %v2310 = vsel %vm1148, %v2290, 0
    %v2313 = vsel %vm1148, %v2291, 0
    %2315 = vmatprep.subr.mxu0 0.0
    %2316 = vmatpush1.msra.mxu0 %v2293
    %2317 = vmatprep.subr.mxu0 0.0
    %2318 = vmatpush1.msra.mxu0 %v2294
    %2319 = vmatprep.subr.mxu0 0.0
    %2320 = vmatpush1.msra.mxu0 %v2295
    %2321 = vmatprep.subr.mxu0 0.0
    %2322 = vmatpush1.msra.mxu0 %v2296
    %2323 = vmatprep.subr.mxu0 0.0
    %2324 = vmatpush1.msra.mxu0 %v2297
    %2325 = vmatprep.subr.mxu0 0.0
    %2326 = vmatpush1.msra.mxu0 %v2298
    %2327 = vmatprep.subr.mxu0 0.0
    %2328 = vmatpush1.msra.mxu0 %v2299
    %2329 = vmatprep.subr.mxu0 0.0
    %2330 = vmatpush1.msra.mxu0 %v2300
    %2331 = vmatprep.subr.mxu0 0.0
    %2332 = vmatpush1.msra.mxu0 0.0
    %2333 = vmatprep.subr.mxu0 0.0
    %2334 = vmatpush1.msra.mxu0 0.0
    %2335 = vmatprep.subr.mxu0 0.0
    %2336 = vmatpush1.msra.mxu0 0.0
    %2337 = vmatprep.subr.mxu0 0.0
    %2338 = vmatpush1.msra.mxu0 0.0
    %2339 = vmatprep.subr.mxu0 0.0
    %2340 = vmatpush1.msra.mxu0 0.0
    %2341 = vmatprep.subr.mxu0 0.0
    %2342 = vmatpush1.msra.mxu0 0.0
    %2343 = vmatprep.subr.mxu0 0.0
    %2344 = vmatpush1.msra.mxu0 0.0
    %2345 = vmatprep.subr.mxu0 0.0
    %2346 = vmatpush1.msra.mxu0 0.0
    %2347 = vmatprep.subr.mxu0 0.0
    %2348 = vmatpush1.msra.mxu0 0.0
    %2349 = vmatprep.subr.mxu0 0.0
    %2350 = vmatpush1.msra.mxu0 0.0
    %2351 = vmatprep.subr.mxu0 0.0
    %2352 = vmatpush1.msra.mxu0 0.0
    %2353 = vmatprep.subr.mxu0 0.0
    %2354 = vmatpush1.msra.mxu0 0.0
    %2355 = vmatprep.subr.mxu0 0.0
    %2356 = vmatpush1.msra.mxu0 0.0
    %2357 = vmatprep.subr.mxu0 0.0
    %2358 = vmatpush1.msra.mxu0 0.0
    %2359 = vmatprep.subr.mxu0 0.0
    %2360 = vmatpush1.msra.mxu0 0.0
    %2361 = vmatprep.subr.mxu0 0.0
    %2362 = vmatpush1.msra.mxu0 0.0
    %2363 = vmatprep.subr.mxu0 0.0
    %2364 = vmatpush1.msra.mxu0 0.0
    %2365 = vmatprep.subr.mxu0 0.0
    %2366 = vmatpush1.msra.mxu0 0.0
    %2367 = vmatprep.subr.mxu0 0.0
    %2368 = vmatpush1.msra.mxu0 0.0
    %2369 = vmatprep.subr.mxu0 0.0
    %2370 = vmatpush1.msra.mxu0 0.0
    %2371 = vmatprep.subr.mxu0 0.0
    %2372 = vmatpush1.msra.mxu0 0.0
    %2373 = vmatprep.subr.mxu0 0.0
    %2374 = vmatpush1.msra.mxu0 0.0
    %2375 = vmatprep.subr.mxu0 0.0
    %2376 = vmatpush1.msra.mxu0 0.0
    %2377 = vmatprep.subr.mxu0 0.0
    %2378 = vmatpush1.msra.mxu0 0.0
    %2379 = vmatprep.mubr.f32.mxu0 0.0
    %2380 = vmatmul.mubr.f32.gmra.mrb[0].mxu0 %v2310
    %v2381 = vpop.f32.mrb[0].mxu0
    %v2382 = vadd.f32 %v2307, %v2381
    %v2383 = vpop.f32.mrb[0].mxu0
    %2384 = vmatprep.mubr.f32.mxu0 0.0
    %2385 = vmatmul.mubr.f32.gmra.mrb[0].mxu0 %v2313
    %v2386 = vpop.f32.mrb[0].mxu0
    %v2387 = vadd.f32 %v2307, %v2386
    %v2388 = vpop.f32.mrb[0].mxu0
    %2389 = vdwg.mxu0
    %v2390 = vadd.f32 %v2382, %v2178
    %v2391 = vadd.f32 %v2387, %v2179
    %s2392 = scalar_lea.vmem %s14, 1
    %v2393 = vld [vmem:[%s2392] sm:$0x1]
    %s2394 = scalar_lea.vmem %s15, 1
    %v2395 = vld [vmem:[%s2394] sm:$0x1]
    %v2396 = vsel %vm70, %v2390, 0.0
    %2397 = vadd.xlane.f32.xlu0 %v2396
    %v2398 = vpop.xlane.xlu0 %2397
    %v2399 = vsel %vm70, %v2391, 0.0
    %2400 = vadd.xlane.f32.xlu0 %v2399
    %v2401 = vpop.xlane.xlu0 %2400
    %v2402 = vmul.f32 %v2398, %v77
    %v2403 = vmul.f32 %v2401, %v77
    %v2404 = vsub.f32 %v2390, %v2402
    %v2405 = vsub.f32 %v2391, %v2403
    %v2406 = vmul.f32 %v2404, %v2404
    %v2407 = vmul.f32 %v2405, %v2405
    %v2408 = vsel %vm70, %v2406, 0.0
    %2409 = vadd.xlane.f32.xlu0 %v2408
    %v2410 = vpop.xlane.xlu0 %2409
    %v2411 = vsel %vm70, %v2407, 0.0
    %2412 = vadd.xlane.f32.xlu0 %v2411
    %v2413 = vpop.xlane.xlu0 %2412
    %v2414 = vmul.f32 %v2410, %v77
    %v2415 = vmul.f32 %v2413, %v77
    %v2416 = vadd.f32 %v2414, 1e-12
    %v2417 = vadd.f32 %v2415, 1e-12
    %v2418 = vrsqrt.pop %v2416
    %v2419 = vrsqrt.pop %v2417
    %v2420 = vmul.f32 %v2404, %v2418
    %v2421 = vmul.f32 %v2405, %v2419
    %v2423 = vlaneseq
    %v2424 = vshrl.u32 %v2423, 7
    %v2425 = vsub.s32 0, %v2424
    %v2426 = vrot.slane %v2393, %v2425
    %v2428 = vmul.f32 %v2420, %v2426
    %v2429 = vmul.f32 %v2421, %v2426
    %v2431 = vlaneseq
    %v2432 = vshrl.u32 %v2431, 7
    %v2433 = vsub.s32 0, %v2432
    %v2434 = vrot.slane %v2395, %v2433
    %v2436 = vadd.f32 %v2428, %v2434
    %v2437 = vadd.f32 %v2429, %v2434
    %v2439 = vrot.slane %v2437, 7
    %vm2441 = vcmask 1040384
    %v2442 = vsel %vm2441, %v2436, %v2439
    %v2443 = vld [vmem:[%s16] sm:$0xff]
    %v2444 = vld [vmem:[%s16 + $0x8] sm:$0xff]
    %v2445 = vld [vmem:[%s16 + $0x10] sm:$0xff]
    %v2446 = vld [vmem:[%s16 + $0x18] sm:$0xff]
    %v2447 = vld [vmem:[%s17] sm:$0x1]
    %v2449 = vlaneseq
    %v2450 = vshrl.u32 %v2449, 7
    %v2451 = vsub.s32 0, %v2450
    %v2452 = vrot.slane %v2447, %v2451
    %v2455 = vsel %vm70, %v2442, 0
    %2457 = vmatprep.subr.mxu0 0.0
    %2458 = vmatpush1.msra.mxu0 %v2443
    %2459 = vmatprep.subr.mxu0 0.0
    %2460 = vmatpush1.msra.mxu0 %v2444
    %2461 = vmatprep.subr.mxu0 0.0
    %2462 = vmatpush1.msra.mxu0 %v2445
    %2463 = vmatprep.subr.mxu0 0.0
    %2464 = vmatpush1.msra.mxu0 %v2446
    %2465 = vmatprep.subr.mxu0 0.0
    %2466 = vmatpush1.msra.mxu0 0.0
    %2467 = vmatprep.subr.mxu0 0.0
    %2468 = vmatpush1.msra.mxu0 0.0
    %2469 = vmatprep.subr.mxu0 0.0
    %2470 = vmatpush1.msra.mxu0 0.0
    %2471 = vmatprep.subr.mxu0 0.0
    %2472 = vmatpush1.msra.mxu0 0.0
    %2473 = vmatprep.subr.mxu0 0.0
    %2474 = vmatpush1.msra.mxu0 0.0
    %2475 = vmatprep.subr.mxu0 0.0
    %2476 = vmatpush1.msra.mxu0 0.0
    %2477 = vmatprep.subr.mxu0 0.0
    %2478 = vmatpush1.msra.mxu0 0.0
    %2479 = vmatprep.subr.mxu0 0.0
    %2480 = vmatpush1.msra.mxu0 0.0
    %2481 = vmatprep.subr.mxu0 0.0
    %2482 = vmatpush1.msra.mxu0 0.0
    %2483 = vmatprep.subr.mxu0 0.0
    %2484 = vmatpush1.msra.mxu0 0.0
    %2485 = vmatprep.subr.mxu0 0.0
    %2486 = vmatpush1.msra.mxu0 0.0
    %2487 = vmatprep.subr.mxu0 0.0
    %2488 = vmatpush1.msra.mxu0 0.0
    %2489 = vmatprep.subr.mxu0 0.0
    %2490 = vmatpush1.msra.mxu0 0.0
    %2491 = vmatprep.subr.mxu0 0.0
    %2492 = vmatpush1.msra.mxu0 0.0
    %2493 = vmatprep.subr.mxu0 0.0
    %2494 = vmatpush1.msra.mxu0 0.0
    %2495 = vmatprep.subr.mxu0 0.0
    %2496 = vmatpush1.msra.mxu0 0.0
    %2497 = vmatprep.subr.mxu0 0.0
    %2498 = vmatpush1.msra.mxu0 0.0
    %2499 = vmatprep.subr.mxu0 0.0
    %2500 = vmatpush1.msra.mxu0 0.0
    %2501 = vmatprep.subr.mxu0 0.0
    %2502 = vmatpush1.msra.mxu0 0.0
    %2503 = vmatprep.subr.mxu0 0.0
    %2504 = vmatpush1.msra.mxu0 0.0
    %2505 = vmatprep.subr.mxu0 0.0
    %2506 = vmatpush1.msra.mxu0 0.0
    %2507 = vmatprep.subr.mxu0 0.0
    %2508 = vmatpush1.msra.mxu0 0.0
    %2509 = vmatprep.subr.mxu0 0.0
    %2510 = vmatpush1.msra.mxu0 0.0
    %2511 = vmatprep.subr.mxu0 0.0
    %2512 = vmatpush1.msra.mxu0 0.0
    %2513 = vmatprep.subr.mxu0 0.0
    %2514 = vmatpush1.msra.mxu0 0.0
    %2515 = vmatprep.subr.mxu0 0.0
    %2516 = vmatpush1.msra.mxu0 0.0
    %2517 = vmatprep.subr.mxu0 0.0
    %2518 = vmatpush1.msra.mxu0 0.0
    %2519 = vmatprep.subr.mxu0 0.0
    %2520 = vmatpush1.msra.mxu0 0.0
    %2521 = vmatprep.mubr.f32.mxu0 0.0
    %2522 = vmatmul.mubr.f32.gmra.mrb[0].mxu0 %v2455
    %v2523 = vpop.f32.mrb[0].mxu0
    %v2524 = vadd.f32 %v2452, %v2523
    %v2525 = vpop.f32.mrb[0].mxu0
    %2526 = vdwg.mxu0
    %v2527 = vtanh.pop %v2524
    %v2528 = vld [vmem:[%s18] sm:$0xff]
    %v2529 = vld [vmem:[%s18 + $0x8] sm:$0xff]
    %v2530 = vld [vmem:[%s18 + $0x10] sm:$0xff]
    %v2531 = vld [vmem:[%s18 + $0x18] sm:$0xff]
    %v2532 = vld [vmem:[%s19] sm:$0x1]
    %v2534 = vlaneseq
    %v2535 = vshrl.u32 %v2534, 7
    %v2536 = vsub.s32 0, %v2535
    %v2537 = vrot.slane %v2532, %v2536
    %v2540 = vsel %vm70, %v2527, 0
    %2542 = vmatprep.subr.mxu0 0.0
    %2543 = vmatpush1.msra.mxu0 %v2528
    %2544 = vmatprep.subr.mxu0 0.0
    %2545 = vmatpush1.msra.mxu0 %v2529
    %2546 = vmatprep.subr.mxu0 0.0
    %2547 = vmatpush1.msra.mxu0 %v2530
    %2548 = vmatprep.subr.mxu0 0.0
    %2549 = vmatpush1.msra.mxu0 %v2531
    %2550 = vmatprep.subr.mxu0 0.0
    %2551 = vmatpush1.msra.mxu0 0.0
    %2552 = vmatprep.subr.mxu0 0.0
    %2553 = vmatpush1.msra.mxu0 0.0
    %2554 = vmatprep.subr.mxu0 0.0
    %2555 = vmatpush1.msra.mxu0 0.0
    %2556 = vmatprep.subr.mxu0 0.0
    %2557 = vmatpush1.msra.mxu0 0.0
    %2558 = vmatprep.subr.mxu0 0.0
    %2559 = vmatpush1.msra.mxu0 0.0
    %2560 = vmatprep.subr.mxu0 0.0
    %2561 = vmatpush1.msra.mxu0 0.0
    %2562 = vmatprep.subr.mxu0 0.0
    %2563 = vmatpush1.msra.mxu0 0.0
    %2564 = vmatprep.subr.mxu0 0.0
    %2565 = vmatpush1.msra.mxu0 0.0
    %2566 = vmatprep.subr.mxu0 0.0
    %2567 = vmatpush1.msra.mxu0 0.0
    %2568 = vmatprep.subr.mxu0 0.0
    %2569 = vmatpush1.msra.mxu0 0.0
    %2570 = vmatprep.subr.mxu0 0.0
    %2571 = vmatpush1.msra.mxu0 0.0
    %2572 = vmatprep.subr.mxu0 0.0
    %2573 = vmatpush1.msra.mxu0 0.0
    %2574 = vmatprep.subr.mxu0 0.0
    %2575 = vmatpush1.msra.mxu0 0.0
    %2576 = vmatprep.subr.mxu0 0.0
    %2577 = vmatpush1.msra.mxu0 0.0
    %2578 = vmatprep.subr.mxu0 0.0
    %2579 = vmatpush1.msra.mxu0 0.0
    %2580 = vmatprep.subr.mxu0 0.0
    %2581 = vmatpush1.msra.mxu0 0.0
    %2582 = vmatprep.subr.mxu0 0.0
    %2583 = vmatpush1.msra.mxu0 0.0
    %2584 = vmatprep.subr.mxu0 0.0
    %2585 = vmatpush1.msra.mxu0 0.0
    %2586 = vmatprep.subr.mxu0 0.0
    %2587 = vmatpush1.msra.mxu0 0.0
    %2588 = vmatprep.subr.mxu0 0.0
    %2589 = vmatpush1.msra.mxu0 0.0
    %2590 = vmatprep.subr.mxu0 0.0
    %2591 = vmatpush1.msra.mxu0 0.0
    %2592 = vmatprep.subr.mxu0 0.0
    %2593 = vmatpush1.msra.mxu0 0.0
    %2594 = vmatprep.subr.mxu0 0.0
    %2595 = vmatpush1.msra.mxu0 0.0
    %2596 = vmatprep.subr.mxu0 0.0
    %2597 = vmatpush1.msra.mxu0 0.0
    %2598 = vmatprep.subr.mxu0 0.0
    %2599 = vmatpush1.msra.mxu0 0.0
    %2600 = vmatprep.subr.mxu0 0.0
    %2601 = vmatpush1.msra.mxu0 0.0
    %2602 = vmatprep.subr.mxu0 0.0
    %2603 = vmatpush1.msra.mxu0 0.0
    %2604 = vmatprep.subr.mxu0 0.0
    %2605 = vmatpush1.msra.mxu0 0.0
    %2606 = vmatprep.mubr.f32.mxu0 0.0
    %2607 = vmatmul.mubr.f32.gmra.mrb[0].mxu0 %v2540
    %v2608 = vpop.f32.mrb[0].mxu0
    %v2609 = vadd.f32 %v2537, %v2608
    %v2610 = vpop.f32.mrb[0].mxu0
    %2611 = vdwg.mxu0
    %vm2612 = vcmask 9216
    %2613 = vst.msk [vmem:[#allocation2] sm:$0x3] %vm2612, %v2609
    // Predicated region
    $region82: #{joint_bert_forward.1} parent=1 // pred_check
      _
    $region83: #{joint_bert_forward.1} parent=1 // pred_check_branch
      %2615 = sbr.rel (0) target = $region85
    $region84: #{joint_bert_forward.1} parent=1 // pred_region
      %s2617 = ssub.s32 32, 32
      %2618 = vsyncadd [#allocation3], %s2617
      %s2620 = sshll.u32 [#allocation2], 4
      %s2621 = int_to_ptr.vmem [resolvable:$true] %s2620
      %2623 = dma.vmem_to_hbm [thread:$0]  %s2621, 32, %s20, [#allocation3]
    $region85: #{joint_bert_forward.1} parent=1 // pred_fallthru
      _
    // Predicated region
    $region86: #{joint_bert_forward.1} parent=1 // pred_check
      _
    $region87: #{joint_bert_forward.1} parent=1 // pred_check_branch
      %2625 = sbr.rel (0) target = $region89
    $region88: #{joint_bert_forward.1} parent=1 // pred_region
      %2626 = dma.done [#allocation3], 32
    $region89: #{joint_bert_forward.1} parent=1 // pred_fallthru
      _
    %2627 = vsyncpa [#allocation3], 1

</llo_original>
